<compile_context>
chip_gen: v7x
topology: tpu7x:2x2x1
jax: 0.10.0
libtpu: 0.0.40
codegen_flags: <defaults>
</compile_context>

<pallas_src>
import math

import jax
import jax.numpy as jnp
import numpy as np
from jax.experimental import pallas as pl
from jax.experimental.pallas import tpu as pltpu

D_MODEL = 32
NHEAD = 4
DIM_FF = 64
EPS = 1e-5
NEG_INF = -1e30

# ---------------------------------------------------------------------------
# Packed weight slab layout: (64, 640) f32, every block 128-lane-tile friendly
# ---------------------------------------------------------------------------
_IN_GM, _IN_SA, _IN_TX = 0, 128, 256        # (E, 3E) in-proj (Q cols pre-scaled)
_OUT_GM, _OUT_SA, _OUT_TX = 384, 416, 448   # (E, E) out-proj
_W1, _W2 = 512, 576                          # (E, F) and (F, E)
_BIAS_ROW0 = 32                              # bias/LN slab: rows 32..47, cols 0..127
_SLAB_ROWS, _SLAB_COLS = 64, 640


# ---------------------------------------------------------------------------
# Kernel factory (B is a static Python constant baked into the kernel)
# ---------------------------------------------------------------------------
def _make_kernel(batch: int):
    E, H, F = D_MODEL, NHEAD, DIM_FF
    Dh = E // H
    pow2 = batch > 0 and (batch & (batch - 1)) == 0

    def layernorm(x, g, b):
        mu = jnp.mean(x, axis=-1, keepdims=True)
        xc = x - mu
        var = jnp.mean(xc * xc, axis=-1, keepdims=True)
        return xc * jax.lax.rsqrt(var + EPS) * g + b

    mask_cache = {}

    def batch_mask(nq, nk):
        # rows/cols are batch-interleaved: row r belongs to batch r % B.
        if nk in mask_cache:                 # reuse (mask_gm == mask_sa when G == T)
            return mask_cache[nk]
        qi = jax.lax.broadcasted_iota(jnp.int32, (nq, nk), 0)
        ki = jax.lax.broadcasted_iota(jnp.int32, (nq, nk), 1)
        if pow2:
            qb, kb = qi & (batch - 1), ki & (batch - 1)
        else:
            qb, kb = qi % batch, ki % batch
        m = jnp.where(qb == kb, 0.0, NEG_INF).astype(jnp.float32)
        mask_cache[nk] = m
        return m

    def softmax_rows(s):
        s = s - jnp.max(s, axis=-1, keepdims=True)
        p = jnp.exp(s)
        # Exact divide (approx reciprocal caused the previous tolerance failure).
        return p / jnp.sum(p, axis=-1, keepdims=True)

    def attend(q, kv, ow, o_b, mask):
        # q: (Nq, E) already pre-scaled by 1/sqrt(Dh); kv: (Nk, 2E); ow: (E, E).
        out = None
        for h in range(H):                   # H = 4, static unroll
            qh = q[:, h * Dh:(h + 1) * Dh]
            kh = kv[:, h * Dh:(h + 1) * Dh]
            vh = kv[:, E + h * Dh:E + (h + 1) * Dh]
            s = jnp.einsum('td,sd->ts', qh, kh,
                           preferred_element_type=jnp.float32) + mask
            p = softmax_rows(s)
            head = jnp.dot(p, vh, preferred_element_type=jnp.float32)   # (Nq, Dh)
            # Per-head accumulating out-projection (no lane concat).
            contrib = jnp.dot(head, ow[h * Dh:(h + 1) * Dh, :],
                              preferred_element_type=jnp.float32)
            out = contrib if out is None else out + contrib
        return out + o_b

    def kernel(x_ref, gm_ref, mem_ref, w_ref, o_ref):
        x = x_ref[...]        # (T*B, E)
        gm = gm_ref[...]      # (G*B, E)
        mem = mem_ref[...]    # (S*B, E)

        # Hoisted bias / LayerNorm parameter views (single (16,128) load).
        bias = w_ref[_BIAS_ROW0:_BIAS_ROW0 + 16, 0:128]
        gm_qb, gm_kvb = bias[0:1, 0:E], bias[0:1, E:3 * E]
        sa_qkvb = bias[1:2, 0:3 * E]
        tx_qb, tx_kvb = bias[2:3, 0:E], bias[2:3, E:3 * E]
        gm_ob, sa_ob, tx_ob = bias[3:4, 0:E], bias[4:5, 0:E], bias[5:6, 0:E]
        n4_g, n4_b = bias[6:7, 0:E], bias[7:8, 0:E]
        n1_g, n1_b = bias[8:9, 0:E], bias[9:10, 0:E]
        n2_g, n2_b = bias[10:11, 0:E], bias[11:12, 0:E]
        n3_g, n3_b = bias[12:13, 0:E], bias[13:14, 0:E]
        b1, b2 = bias[14:15, 0:F], bias[15:16, 0:E]

        nq, ng, ns = x.shape[0], gm.shape[0], mem.shape[0]
        mask_gm = batch_mask(nq, ng)
        mask_sa = batch_mask(nq, nq)         # shared with mask_gm when G == T
        mask_tx = batch_mask(nq, ns)

        ow_gm = w_ref[0:E, _OUT_GM:_OUT_GM + E]
        ow_sa = w_ref[0:E, _OUT_SA:_OUT_SA + E]
        ow_tx = w_ref[0:E, _OUT_TX:_OUT_TX + E]

        # 1) x = norm4(x + gm_msa(x, gm, gm))
        q = jnp.dot(x, w_ref[0:E, _IN_GM:_IN_GM + E],
                    preferred_element_type=jnp.float32) + gm_qb
        kv = jnp.dot(gm, w_ref[0:E, _IN_GM + E:_IN_GM + 3 * E],
                     preferred_element_type=jnp.float32) + gm_kvb
        x = layernorm(x + attend(q, kv, ow_gm, gm_ob, mask_gm), n4_g, n4_b)

        # 2) x = norm1(x + self_attn(x, x, x))  -- fused QKV projection
        qkv = jnp.dot(x, w_ref[0:E, _IN_SA:_IN_SA + 3 * E],
                      preferred_element_type=jnp.float32) + sa_qkvb
        x = layernorm(
            x + attend(qkv[:, 0:E], qkv[:, E:3 * E], ow_sa, sa_ob, mask_sa),
            n1_g, n1_b)

        # 3) x = norm2(x + text_attn(x, memory, memory))
        q = jnp.dot(x, w_ref[0:E, _IN_TX:_IN_TX + E],
                    preferred_element_type=jnp.float32) + tx_qb
        kv = jnp.dot(mem, w_ref[0:E, _IN_TX + E:_IN_TX + 3 * E],
                     preferred_element_type=jnp.float32) + tx_kvb
        x = layernorm(x + attend(q, kv, ow_tx, tx_ob, mask_tx), n2_g, n2_b)

        # 4) x = norm3(x + linear2(relu(linear1(x))))
        h = jnp.maximum(
            jnp.dot(x, w_ref[0:E, _W1:_W1 + F],
                    preferred_element_type=jnp.float32) + b1, 0.0)
        ff = jnp.dot(h, w_ref[0:F, _W2:_W2 + E],
                     preferred_element_type=jnp.float32) + b2
        x = layernorm(x + ff, n3_g, n3_b)

        o_ref[...] = x

    return kernel


# ---------------------------------------------------------------------------
# Parameter packing (done once, outside the hot path): ONE (64, 640) slab
# ---------------------------------------------------------------------------
def pack_params(p):
    E, F = D_MODEL, DIM_FF
    scale = 1.0 / math.sqrt(E // NHEAD)
    W = np.zeros((_SLAB_ROWS, _SLAB_COLS), np.float32)

    def fold_in_w(w_t):                      # (E, 3E): pre-scale Q columns
        w = np.array(w_t, np.float32)
        w[:, :E] *= scale
        return w

    W[0:E, _IN_GM:_IN_GM + 3 * E] = fold_in_w(p["gm_in_w_t"])
    W[0:E, _IN_SA:_IN_SA + 3 * E] = fold_in_w(p["sa_in_w_t"])
    W[0:E, _IN_TX:_IN_TX + 3 * E] = fold_in_w(p["tx_in_w_t"])
    W[0:E, _OUT_GM:_OUT_GM + E] = np.asarray(p["gm_out_w_t"], np.float32)
    W[0:E, _OUT_SA:_OUT_SA + E] = np.asarray(p["sa_out_w_t"], np.float32)
    W[0:E, _OUT_TX:_OUT_TX + E] = np.asarray(p["tx_out_w_t"], np.float32)
    W[0:E, _W1:_W1 + F] = np.asarray(p["lin1_w_t"], np.float32)
    W[0:F, _W2:_W2 + E] = np.asarray(p["lin2_w_t"], np.float32)

    def row(v):
        v = np.ravel(np.asarray(v, np.float32))
        r = np.zeros((128,), np.float32)
        r[:v.shape[0]] = v
        return r

    def in_bias(v):                          # pre-scale the Q third of in-proj bias
        v = np.array(v, np.float32).ravel()
        v[:E] *= scale
        return row(v)

    bias = np.stack([
        in_bias(p["gm_in_b"]), in_bias(p["sa_in_b"]), in_bias(p["tx_in_b"]),
        row(p["gm_out_b"]), row(p["sa_out_b"]), row(p["tx_out_b"]),
        row(p["n4_g"]), row(p["n4_b"]),
        row(p["n1_g"]), row(p["n1_b"]),
        row(p["n2_g"]), row(p["n2_b"]),
        row(p["n3_g"]), row(p["n3_b"]),
        row(p["lin1_b"]), row(p["lin2_b"]),
    ])                                       # (16, 128)
    W[_BIAS_ROW0:_BIAS_ROW0 + 16, 0:128] = bias
    return jnp.asarray(W)


# ---------------------------------------------------------------------------
# Wrapper
# ---------------------------------------------------------------------------
def cdg_decoder_layer2(tgt, memory, gm, w_slab):
    """tgt: (T,B,E), memory: (S,B,E), gm: (G,B,E) -> (T,B,E). No transposes."""
    T, B, E = tgt.shape
    S = memory.shape[0]
    G = gm.shape[0]
    F = DIM_FF

    # Row-major flatten only (cheap): row r <-> (t = r // B, b = r % B).
    x = jnp.reshape(tgt, (T * B, E))
    mem = jnp.reshape(memory, (S * B, E))
    g = jnp.reshape(gm, (G * B, E))

    args = (x, g, mem, w_slab)               # 4 input DMAs total

    def full_spec(a):
        nd = a.ndim
        return pl.BlockSpec(a.shape, lambda i, nd=nd: (0,) * nd)

    # Rough cost hint for the XLA scheduler.
    Nq, Ng, Ns = T * B, G * B, S * B

    def mha_flops(nq, nk):
        return 2 * nq * E * E + 2 * nk * E * 2 * E + 4 * nq * nk * E + 2 * nq * E * E

    flops = mha_flops(Nq, Ng) + mha_flops(Nq, Nq) + mha_flops(Nq, Ns) + 4 * Nq * E * F
    transcendentals = Nq * (Ng + Nq + Ns)
    bytes_accessed = 4 * (sum(int(np.prod(a.shape)) for a in args) + Nq * E)

    out = pl.pallas_call(
        _make_kernel(B),
        out_shape=jax.ShapeDtypeStruct((T * B, E), jnp.float32),
        grid=(1,),
        in_specs=[full_spec(a) for a in args],
        out_specs=pl.BlockSpec((T * B, E), lambda i: (0, 0)),
        compiler_params=pltpu.CompilerParams(dimension_semantics=("arbitrary",)),
        cost_estimate=pl.CostEstimate(flops=int(flops),
                                      transcendentals=int(transcendentals),
                                      bytes_accessed=int(bytes_accessed)),
    )(*args)

    return jnp.reshape(out, (T, B, E))


# ---------------------------------------------------------------------------
# Deterministic parameter init (synthetic weights; no checkpoint load)
# ---------------------------------------------------------------------------
def init_params(key):
    E, F = D_MODEL, DIM_FF
    keys = jax.random.split(key, 8)

    def lin_w(k, shape, fan_in):
        return jax.random.normal(k, shape, jnp.float32) * (1.0 / math.sqrt(fan_in))

    p = {}
    for i, name in enumerate(["gm", "sa", "tx"]):
        k1, k2 = jax.random.split(keys[i], 2)
        w_in = lin_w(k1, (3 * E, E), E)        # in_proj_weight (3E, E)
        w_out = lin_w(k2, (E, E), E)           # out_proj.weight (E, E)
        p[f"{name}_in_w_t"] = w_in.T           # stored transposed: (E, 3E)
        p[f"{name}_in_b"] = jnp.full((1, 3 * E), 0.01, jnp.float32)
        p[f"{name}_out_w_t"] = w_out.T         # (E, E)
        p[f"{name}_out_b"] = jnp.zeros((1, E), jnp.float32)

    for n in ("n1", "n2", "n3", "n4"):
        p[f"{n}_g"] = jnp.ones((1, E), jnp.float32)
        p[f"{n}_b"] = jnp.zeros((1, E), jnp.float32)

    w1 = lin_w(keys[3], (F, E), E)             # linear1.weight (F, E)
    w2 = lin_w(keys[4], (E, F), F)             # linear2.weight (E, F)
    p["lin1_w_t"] = w1.T                       # (E, F)
    p["lin1_b"] = jnp.full((1, F), 0.02, jnp.float32)
    p["lin2_w_t"] = w2.T                       # (F, E)
    p["lin2_b"] = jnp.full((1, E), -0.02, jnp.float32)
    return p


# ---------------------------------------------------------------------------
# Pure-JAX reference for a correctness check (batch-major)
# ---------------------------------------------------------------------------
def ref_forward(x, gm, mem, p):  # all (B, L, E)
    E, H = D_MODEL, NHEAD
    Dh = E // H

    def mha(q_in, kv_in, in_w_t, in_b, out_w_t, out_b):
        q = q_in @ in_w_t[:, :E] + in_b[0, :E]
        k = kv_in @ in_w_t[:, E:2 * E] + in_b[0, E:2 * E]
        v = kv_in @ in_w_t[:, 2 * E:] + in_b[0, 2 * E:]
        B_, T_, _ = q.shape
        S_ = k.shape[1]
        qh = q.reshape(B_, T_, H, Dh).transpose(0, 2, 1, 3)
        kh = k.reshape(B_, S_, H, Dh).transpose(0, 2, 1, 3)
        vh = v.reshape(B_, S_, H, Dh).transpose(0, 2, 1, 3)
        s = jnp.einsum('bhtd,bhsd->bhts', qh, kh) / math.sqrt(Dh)
        pr = jax.nn.softmax(s, axis=-1)
        o = jnp.einsum('bhts,bhsd->bhtd', pr, vh).transpose(0, 2, 1, 3).reshape(B_, T_, E)
        return o @ out_w_t + out_b[0]

    def ln(x, g, b):
        mu = x.mean(-1, keepdims=True)
        var = ((x - mu) ** 2).mean(-1, keepdims=True)
        return (x - mu) / jnp.sqrt(var + EPS) * g[0] + b[0]

    x = ln(x + mha(x, gm, p["gm_in_w_t"], p["gm_in_b"], p["gm_out_w_t"], p["gm_out_b"]),
           p["n4_g"], p["n4_b"])
    x = ln(x + mha(x, x, p["sa_in_w_t"], p["sa_in_b"], p["sa_out_w_t"], p["sa_out_b"]),
           p["n1_g"], p["n1_b"])
    x = ln(x + mha(x, mem, p["tx_in_w_t"], p["tx_in_b"], p["tx_out_w_t"], p["tx_out_b"]),
           p["n2_g"], p["n2_b"])
    h = jnp.maximum(x @ p["lin1_w_t"] + p["lin1_b"][0], 0.0)
    x = ln(x + (h @ p["lin2_w_t"] + p["lin2_b"][0]), p["n3_g"], p["n3_b"])
    return x


if __name__ == "__main__":
    # Small shapes: seq-first (batch_first=False), batch=2, d_model=32, nhead=4.
    T, S, G, B, E = 8, 16, 8, 2, D_MODEL
    key = jax.random.PRNGKey(0)
    k_tgt, k_mem, k_gm, k_par = jax.random.split(key, 4)

    tgt = jax.random.normal(k_tgt, (T, B, E), jnp.float32)
    memory = jax.random.normal(k_mem, (S, B, E), jnp.float32)
    gm = jax.random.normal(k_gm, (G, B, E), jnp.float32)
    params = init_params(k_par)
    w_slab = pack_params(params)            # one-time weight packing (single slab)

    out = cdg_decoder_layer2(tgt, memory, gm, w_slab)
    out = jax.block_until_ready(out)

    ref = ref_forward(jnp.transpose(tgt, (1, 0, 2)),
                      jnp.transpose(gm, (1, 0, 2)),
                      jnp.transpose(memory, (1, 0, 2)),
                      params)
    ref = jnp.transpose(ref, (1, 0, 2))
    # Softmax is now exact (no approx reciprocal); the remaining tolerance covers
    # the reduced-precision f32 matmuls of the TPU XLA reference path.
    np.testing.assert_allclose(np.asarray(out), np.asarray(ref), atol=5e-3, rtol=5e-3)

    # TODO(synk): dropout layers and optional attention/key-padding masks are
    # omitted (eval-mode, masks are None in this synthetic setup).
    print("KERNEL_OK")
</pallas_src>

<mosaic_0001>
module attributes {stable_mosaic.version = 11 : i64} {
  func.func @kernel(%arg0: i32, %arg1: memref<16x32xf32, #tpu.memory_space<vmem>>, %arg2: memref<16x32xf32, #tpu.memory_space<vmem>>, %arg3: memref<32x32xf32, #tpu.memory_space<vmem>>, %arg4: memref<64x640xf32, #tpu.memory_space<vmem>>, %arg5: memref<16x32xf32, #tpu.memory_space<vmem>>) attributes {dimension_semantics = [#tpu.dimension_semantics<arbitrary>], iteration_bounds = array<i64: 1>, scalar_prefetch = 0 : i64, scratch_operands = 0 : i64, tpu.core_type = #tpu.core_type<tc>, window_params = [{pipeline_mode = #tpu.pipeline_mode<synchronous>, transform_indices = @transform_0, window_bounds = array<i64: 16, 32>}, {pipeline_mode = #tpu.pipeline_mode<synchronous>, transform_indices = @transform_1, window_bounds = array<i64: 16, 32>}, {pipeline_mode = #tpu.pipeline_mode<synchronous>, transform_indices = @transform_2, window_bounds = array<i64: 32, 32>}, {pipeline_mode = #tpu.pipeline_mode<synchronous>, transform_indices = @transform_3, window_bounds = array<i64: 64, 640>}, {pipeline_mode = #tpu.pipeline_mode<synchronous>, transform_indices = @transform_4, window_bounds = array<i64: 16, 32>}]} {
    %c0 = arith.constant 0 : index
    %c0_0 = arith.constant 0 : index
    %0 = vector.load %arg1[%c0, %c0_0] : memref<16x32xf32, #tpu.memory_space<vmem>>, vector<16x32xf32>
    %c0_1 = arith.constant 0 : index
    %c0_2 = arith.constant 0 : index
    %1 = vector.load %arg2[%c0_1, %c0_2] : memref<16x32xf32, #tpu.memory_space<vmem>>, vector<16x32xf32>
    %c0_3 = arith.constant 0 : index
    %c0_4 = arith.constant 0 : index
    %2 = vector.load %arg3[%c0_3, %c0_4] : memref<32x32xf32, #tpu.memory_space<vmem>>, vector<32x32xf32>
    %c32 = arith.constant 32 : index
    %c0_5 = arith.constant 0 : index
    %3 = vector.load %arg4[%c32, %c0_5] : memref<64x640xf32, #tpu.memory_space<vmem>>, vector<16x128xf32>
    %4 = vector.extract_strided_slice %3 {offsets = [0, 0], sizes = [1, 32], strides = [1, 1]} : vector<16x128xf32> to vector<1x32xf32>
    %5 = vector.extract_strided_slice %3 {offsets = [0, 32], sizes = [1, 64], strides = [1, 1]} : vector<16x128xf32> to vector<1x64xf32>
    %6 = vector.extract_strided_slice %3 {offsets = [1, 0], sizes = [1, 96], strides = [1, 1]} : vector<16x128xf32> to vector<1x96xf32>
    %7 = vector.extract_strided_slice %3 {offsets = [2, 0], sizes = [1, 32], strides = [1, 1]} : vector<16x128xf32> to vector<1x32xf32>
    %8 = vector.extract_strided_slice %3 {offsets = [2, 32], sizes = [1, 64], strides = [1, 1]} : vector<16x128xf32> to vector<1x64xf32>
    %9 = vector.extract_strided_slice %3 {offsets = [3, 0], sizes = [1, 32], strides = [1, 1]} : vector<16x128xf32> to vector<1x32xf32>
    %10 = vector.extract_strided_slice %3 {offsets = [4, 0], sizes = [1, 32], strides = [1, 1]} : vector<16x128xf32> to vector<1x32xf32>
    %11 = vector.extract_strided_slice %3 {offsets = [5, 0], sizes = [1, 32], strides = [1, 1]} : vector<16x128xf32> to vector<1x32xf32>
    %12 = vector.extract_strided_slice %3 {offsets = [6, 0], sizes = [1, 32], strides = [1, 1]} : vector<16x128xf32> to vector<1x32xf32>
    %13 = vector.extract_strided_slice %3 {offsets = [7, 0], sizes = [1, 32], strides = [1, 1]} : vector<16x128xf32> to vector<1x32xf32>
    %14 = vector.extract_strided_slice %3 {offsets = [8, 0], sizes = [1, 32], strides = [1, 1]} : vector<16x128xf32> to vector<1x32xf32>
    %15 = vector.extract_strided_slice %3 {offsets = [9, 0], sizes = [1, 32], strides = [1, 1]} : vector<16x128xf32> to vector<1x32xf32>
    %16 = vector.extract_strided_slice %3 {offsets = [10, 0], sizes = [1, 32], strides = [1, 1]} : vector<16x128xf32> to vector<1x32xf32>
    %17 = vector.extract_strided_slice %3 {offsets = [11, 0], sizes = [1, 32], strides = [1, 1]} : vector<16x128xf32> to vector<1x32xf32>
    %18 = vector.extract_strided_slice %3 {offsets = [12, 0], sizes = [1, 32], strides = [1, 1]} : vector<16x128xf32> to vector<1x32xf32>
    %19 = vector.extract_strided_slice %3 {offsets = [13, 0], sizes = [1, 32], strides = [1, 1]} : vector<16x128xf32> to vector<1x32xf32>
    %20 = vector.extract_strided_slice %3 {offsets = [14, 0], sizes = [1, 64], strides = [1, 1]} : vector<16x128xf32> to vector<1x64xf32>
    %21 = vector.extract_strided_slice %3 {offsets = [15, 0], sizes = [1, 32], strides = [1, 1]} : vector<16x128xf32> to vector<1x32xf32>
    %22 = tpu.iota {dimensions = array<i32: 0>} : vector<16x16xi32>
    %23 = tpu.iota {dimensions = array<i32: 1>} : vector<16x16xi32>
    %c1_i32 = arith.constant 1 : i32
    %24 = vector.broadcast %c1_i32 : i32 to vector<16x16xi32>
    %25 = arith.andi %22, %24 : vector<16x16xi32>
    %c1_i32_6 = arith.constant 1 : i32
    %26 = vector.broadcast %c1_i32_6 : i32 to vector<16x16xi32>
    %27 = arith.andi %23, %26 : vector<16x16xi32>
    %28 = arith.cmpi eq, %25, %27 : vector<16x16xi32>
    %cst = arith.constant 0.000000e+00 : f32
    %cst_7 = arith.constant -1.000000e+30 : f32
    %29 = vector.broadcast %cst : f32 to vector<16x16xf32>
    %30 = vector.broadcast %cst_7 : f32 to vector<16x16xf32>
    %31 = arith.select %28, %29, %30 : vector<16x16xi1>, vector<16x16xf32>
    %32 = tpu.iota {dimensions = array<i32: 0>} : vector<16x32xi32>
    %33 = tpu.iota {dimensions = array<i32: 1>} : vector<16x32xi32>
    %c1_i32_8 = arith.constant 1 : i32
    %34 = vector.broadcast %c1_i32_8 : i32 to vector<16x32xi32>
    %35 = arith.andi %32, %34 : vector<16x32xi32>
    %c1_i32_9 = arith.constant 1 : i32
    %36 = vector.broadcast %c1_i32_9 : i32 to vector<16x32xi32>
    %37 = arith.andi %33, %36 : vector<16x32xi32>
    %38 = arith.cmpi eq, %35, %37 : vector<16x32xi32>
    %cst_10 = arith.constant 0.000000e+00 : f32
    %cst_11 = arith.constant -1.000000e+30 : f32
    %39 = vector.broadcast %cst_10 : f32 to vector<16x32xf32>
    %40 = vector.broadcast %cst_11 : f32 to vector<16x32xf32>
    %41 = arith.select %38, %39, %40 : vector<16x32xi1>, vector<16x32xf32>
    %c0_12 = arith.constant 0 : index
    %c384 = arith.constant 384 : index
    %42 = vector.load %arg4[%c0_12, %c384] : memref<64x640xf32, #tpu.memory_space<vmem>>, vector<32x32xf32>
    %c0_13 = arith.constant 0 : index
    %c416 = arith.constant 416 : index
    %43 = vector.load %arg4[%c0_13, %c416] : memref<64x640xf32, #tpu.memory_space<vmem>>, vector<32x32xf32>
    %c0_14 = arith.constant 0 : index
    %c448 = arith.constant 448 : index
    %44 = vector.load %arg4[%c0_14, %c448] : memref<64x640xf32, #tpu.memory_space<vmem>>, vector<32x32xf32>
    %c0_15 = arith.constant 0 : index
    %c0_16 = arith.constant 0 : index
    %45 = vector.load %arg4[%c0_15, %c0_16] : memref<64x640xf32, #tpu.memory_space<vmem>>, vector<32x32xf32>
    %cst_17 = arith.constant dense<0.000000e+00> : vector<16x32xf32>
    %46 = tpu.matmul %0, %45, %cst_17 {dimension_numbers = #tpu.dot_dimension_numbers<[1], [0], [0], [1], [0, 0, 1, 1], [], []>} : vector<16x32xf32>, vector<32x32xf32>, vector<16x32xf32> -> vector<16x32xf32>
    %47 = vector.broadcast %4 : vector<1x32xf32> to vector<16x32xf32>
    %48 = arith.addf %46, %47 : vector<16x32xf32>
    %c0_18 = arith.constant 0 : index
    %c32_19 = arith.constant 32 : index
    %49 = vector.load %arg4[%c0_18, %c32_19] : memref<64x640xf32, #tpu.memory_space<vmem>>, vector<32x64xf32>
    %cst_20 = arith.constant dense<0.000000e+00> : vector<16x64xf32>
    %50 = tpu.matmul %1, %49, %cst_20 {dimension_numbers = #tpu.dot_dimension_numbers<[1], [0], [0], [1], [0, 0, 1, 1], [], []>} : vector<16x32xf32>, vector<32x64xf32>, vector<16x64xf32> -> vector<16x64xf32>
    %51 = vector.broadcast %5 : vector<1x64xf32> to vector<16x64xf32>
    %52 = arith.addf %50, %51 : vector<16x64xf32>
    %53 = vector.extract_strided_slice %48 {offsets = [0, 0], sizes = [16, 8], strides = [1, 1]} : vector<16x32xf32> to vector<16x8xf32>
    %54 = vector.extract_strided_slice %52 {offsets = [0, 0], sizes = [16, 8], strides = [1, 1]} : vector<16x64xf32> to vector<16x8xf32>
    %55 = vector.extract_strided_slice %52 {offsets = [0, 32], sizes = [16, 8], strides = [1, 1]} : vector<16x64xf32> to vector<16x8xf32>
    "tpu.trace_start"() <{level = 10 : i32, message = "td,sd->ts"}> : () -> ()
    %cst_21 = arith.constant dense<0.000000e+00> : vector<16x16xf32>
    %56 = tpu.matmul %53, %54, %cst_21 {dimension_numbers = #tpu.dot_dimension_numbers<[1], [1], [0], [0], [0, 0, 1, 0], [], []>} : vector<16x8xf32>, vector<16x8xf32>, vector<16x16xf32> -> vector<16x16xf32>
    "tpu.trace_stop"() : () -> ()
    %57 = arith.addf %56, %31 : vector<16x16xf32>
    %cst_22 = arith.constant dense<0xFF800000> : vector<16xf32>
    %58 = vector.multi_reduction <maximumf>, %57, %cst_22 [1] : vector<16x16xf32> to vector<16xf32>
    %59 = vector.shape_cast %58 : vector<16xf32> to vector<16x1xf32>
    %60 = vector.broadcast %59 : vector<16x1xf32> to vector<16x16xf32>
    %61 = arith.subf %57, %60 : vector<16x16xf32>
    %62 = math.exp %61 : vector<16x16xf32>
    %cst_23 = arith.constant dense<0.000000e+00> : vector<16xf32>
    %63 = vector.multi_reduction <add>, %62, %cst_23 [1] : vector<16x16xf32> to vector<16xf32>
    %64 = vector.shape_cast %63 : vector<16xf32> to vector<16x1xf32>
    %65 = vector.broadcast %64 : vector<16x1xf32> to vector<16x16xf32>
    %66 = arith.divf %62, %65 : vector<16x16xf32>
    %cst_24 = arith.constant dense<0.000000e+00> : vector<16x8xf32>
    %67 = tpu.matmul %66, %55, %cst_24 {dimension_numbers = #tpu.dot_dimension_numbers<[1], [0], [0], [1], [0, 0, 1, 1], [], []>} : vector<16x16xf32>, vector<16x8xf32>, vector<16x8xf32> -> vector<16x8xf32>
    %68 = vector.extract_strided_slice %42 {offsets = [0, 0], sizes = [8, 32], strides = [1, 1]} : vector<32x32xf32> to vector<8x32xf32>
    %cst_25 = arith.constant dense<0.000000e+00> : vector<16x32xf32>
    %69 = tpu.matmul %67, %68, %cst_25 {dimension_numbers = #tpu.dot_dimension_numbers<[1], [0], [0], [1], [0, 0, 1, 1], [], []>} : vector<16x8xf32>, vector<8x32xf32>, vector<16x32xf32> -> vector<16x32xf32>
    %70 = vector.extract_strided_slice %48 {offsets = [0, 8], sizes = [16, 8], strides = [1, 1]} : vector<16x32xf32> to vector<16x8xf32>
    %71 = vector.extract_strided_slice %52 {offsets = [0, 8], sizes = [16, 8], strides = [1, 1]} : vector<16x64xf32> to vector<16x8xf32>
    %72 = vector.extract_strided_slice %52 {offsets = [0, 40], sizes = [16, 8], strides = [1, 1]} : vector<16x64xf32> to vector<16x8xf32>
    "tpu.trace_start"() <{level = 10 : i32, message = "td,sd->ts"}> : () -> ()
    %cst_26 = arith.constant dense<0.000000e+00> : vector<16x16xf32>
    %73 = tpu.matmul %70, %71, %cst_26 {dimension_numbers = #tpu.dot_dimension_numbers<[1], [1], [0], [0], [0, 0, 1, 0], [], []>} : vector<16x8xf32>, vector<16x8xf32>, vector<16x16xf32> -> vector<16x16xf32>
    "tpu.trace_stop"() : () -> ()
    %74 = arith.addf %73, %31 : vector<16x16xf32>
    %cst_27 = arith.constant dense<0xFF800000> : vector<16xf32>
    %75 = vector.multi_reduction <maximumf>, %74, %cst_27 [1] : vector<16x16xf32> to vector<16xf32>
    %76 = vector.shape_cast %75 : vector<16xf32> to vector<16x1xf32>
    %77 = vector.broadcast %76 : vector<16x1xf32> to vector<16x16xf32>
    %78 = arith.subf %74, %77 : vector<16x16xf32>
    %79 = math.exp %78 : vector<16x16xf32>
    %cst_28 = arith.constant dense<0.000000e+00> : vector<16xf32>
    %80 = vector.multi_reduction <add>, %79, %cst_28 [1] : vector<16x16xf32> to vector<16xf32>
    %81 = vector.shape_cast %80 : vector<16xf32> to vector<16x1xf32>
    %82 = vector.broadcast %81 : vector<16x1xf32> to vector<16x16xf32>
    %83 = arith.divf %79, %82 : vector<16x16xf32>
    %cst_29 = arith.constant dense<0.000000e+00> : vector<16x8xf32>
    %84 = tpu.matmul %83, %72, %cst_29 {dimension_numbers = #tpu.dot_dimension_numbers<[1], [0], [0], [1], [0, 0, 1, 1], [], []>} : vector<16x16xf32>, vector<16x8xf32>, vector<16x8xf32> -> vector<16x8xf32>
    %85 = vector.extract_strided_slice %42 {offsets = [8, 0], sizes = [8, 32], strides = [1, 1]} : vector<32x32xf32> to vector<8x32xf32>
    %cst_30 = arith.constant dense<0.000000e+00> : vector<16x32xf32>
    %86 = tpu.matmul %84, %85, %cst_30 {dimension_numbers = #tpu.dot_dimension_numbers<[1], [0], [0], [1], [0, 0, 1, 1], [], []>} : vector<16x8xf32>, vector<8x32xf32>, vector<16x32xf32> -> vector<16x32xf32>
    %87 = arith.addf %69, %86 : vector<16x32xf32>
    %88 = vector.extract_strided_slice %48 {offsets = [0, 16], sizes = [16, 8], strides = [1, 1]} : vector<16x32xf32> to vector<16x8xf32>
    %89 = vector.extract_strided_slice %52 {offsets = [0, 16], sizes = [16, 8], strides = [1, 1]} : vector<16x64xf32> to vector<16x8xf32>
    %90 = vector.extract_strided_slice %52 {offsets = [0, 48], sizes = [16, 8], strides = [1, 1]} : vector<16x64xf32> to vector<16x8xf32>
    "tpu.trace_start"() <{level = 10 : i32, message = "td,sd->ts"}> : () -> ()
    %cst_31 = arith.constant dense<0.000000e+00> : vector<16x16xf32>
    %91 = tpu.matmul %88, %89, %cst_31 {dimension_numbers = #tpu.dot_dimension_numbers<[1], [1], [0], [0], [0, 0, 1, 0], [], []>} : vector<16x8xf32>, vector<16x8xf32>, vector<16x16xf32> -> vector<16x16xf32>
    "tpu.trace_stop"() : () -> ()
    %92 = arith.addf %91, %31 : vector<16x16xf32>
    %cst_32 = arith.constant dense<0xFF800000> : vector<16xf32>
    %93 = vector.multi_reduction <maximumf>, %92, %cst_32 [1] : vector<16x16xf32> to vector<16xf32>
    %94 = vector.shape_cast %93 : vector<16xf32> to vector<16x1xf32>
    %95 = vector.broadcast %94 : vector<16x1xf32> to vector<16x16xf32>
    %96 = arith.subf %92, %95 : vector<16x16xf32>
    %97 = math.exp %96 : vector<16x16xf32>
    %cst_33 = arith.constant dense<0.000000e+00> : vector<16xf32>
    %98 = vector.multi_reduction <add>, %97, %cst_33 [1] : vector<16x16xf32> to vector<16xf32>
    %99 = vector.shape_cast %98 : vector<16xf32> to vector<16x1xf32>
    %100 = vector.broadcast %99 : vector<16x1xf32> to vector<16x16xf32>
    %101 = arith.divf %97, %100 : vector<16x16xf32>
    %cst_34 = arith.constant dense<0.000000e+00> : vector<16x8xf32>
    %102 = tpu.matmul %101, %90, %cst_34 {dimension_numbers = #tpu.dot_dimension_numbers<[1], [0], [0], [1], [0, 0, 1, 1], [], []>} : vector<16x16xf32>, vector<16x8xf32>, vector<16x8xf32> -> vector<16x8xf32>
    %103 = vector.extract_strided_slice %42 {offsets = [16, 0], sizes = [8, 32], strides = [1, 1]} : vector<32x32xf32> to vector<8x32xf32>
    %cst_35 = arith.constant dense<0.000000e+00> : vector<16x32xf32>
    %104 = tpu.matmul %102, %103, %cst_35 {dimension_numbers = #tpu.dot_dimension_numbers<[1], [0], [0], [1], [0, 0, 1, 1], [], []>} : vector<16x8xf32>, vector<8x32xf32>, vector<16x32xf32> -> vector<16x32xf32>
    %105 = arith.addf %87, %104 : vector<16x32xf32>
    %106 = vector.extract_strided_slice %48 {offsets = [0, 24], sizes = [16, 8], strides = [1, 1]} : vector<16x32xf32> to vector<16x8xf32>
    %107 = vector.extract_strided_slice %52 {offsets = [0, 24], sizes = [16, 8], strides = [1, 1]} : vector<16x64xf32> to vector<16x8xf32>
    %108 = vector.extract_strided_slice %52 {offsets = [0, 56], sizes = [16, 8], strides = [1, 1]} : vector<16x64xf32> to vector<16x8xf32>
    "tpu.trace_start"() <{level = 10 : i32, message = "td,sd->ts"}> : () -> ()
    %cst_36 = arith.constant dense<0.000000e+00> : vector<16x16xf32>
    %109 = tpu.matmul %106, %107, %cst_36 {dimension_numbers = #tpu.dot_dimension_numbers<[1], [1], [0], [0], [0, 0, 1, 0], [], []>} : vector<16x8xf32>, vector<16x8xf32>, vector<16x16xf32> -> vector<16x16xf32>
    "tpu.trace_stop"() : () -> ()
    %110 = arith.addf %109, %31 : vector<16x16xf32>
    %cst_37 = arith.constant dense<0xFF800000> : vector<16xf32>
    %111 = vector.multi_reduction <maximumf>, %110, %cst_37 [1] : vector<16x16xf32> to vector<16xf32>
    %112 = vector.shape_cast %111 : vector<16xf32> to vector<16x1xf32>
    %113 = vector.broadcast %112 : vector<16x1xf32> to vector<16x16xf32>
    %114 = arith.subf %110, %113 : vector<16x16xf32>
    %115 = math.exp %114 : vector<16x16xf32>
    %cst_38 = arith.constant dense<0.000000e+00> : vector<16xf32>
    %116 = vector.multi_reduction <add>, %115, %cst_38 [1] : vector<16x16xf32> to vector<16xf32>
    %117 = vector.shape_cast %116 : vector<16xf32> to vector<16x1xf32>
    %118 = vector.broadcast %117 : vector<16x1xf32> to vector<16x16xf32>
    %119 = arith.divf %115, %118 : vector<16x16xf32>
    %cst_39 = arith.constant dense<0.000000e+00> : vector<16x8xf32>
    %120 = tpu.matmul %119, %108, %cst_39 {dimension_numbers = #tpu.dot_dimension_numbers<[1], [0], [0], [1], [0, 0, 1, 1], [], []>} : vector<16x16xf32>, vector<16x8xf32>, vector<16x8xf32> -> vector<16x8xf32>
    %121 = vector.extract_strided_slice %42 {offsets = [24, 0], sizes = [8, 32], strides = [1, 1]} : vector<32x32xf32> to vector<8x32xf32>
    %cst_40 = arith.constant dense<0.000000e+00> : vector<16x32xf32>
    %122 = tpu.matmul %120, %121, %cst_40 {dimension_numbers = #tpu.dot_dimension_numbers<[1], [0], [0], [1], [0, 0, 1, 1], [], []>} : vector<16x8xf32>, vector<8x32xf32>, vector<16x32xf32> -> vector<16x32xf32>
    %123 = arith.addf %105, %122 : vector<16x32xf32>
    %124 = vector.broadcast %9 : vector<1x32xf32> to vector<16x32xf32>
    %125 = arith.addf %123, %124 : vector<16x32xf32>
    %126 = arith.addf %0, %125 : vector<16x32xf32>
    %cst_41 = arith.constant dense<0.000000e+00> : vector<16xf32>
    %127 = vector.multi_reduction <add>, %126, %cst_41 [1] : vector<16x32xf32> to vector<16xf32>
    %128 = vector.shape_cast %127 : vector<16xf32> to vector<16x1xf32>
    %cst_42 = arith.constant 3.200000e+01 : f32
    %129 = vector.broadcast %cst_42 : f32 to vector<16x1xf32>
    %130 = arith.divf %128, %129 : vector<16x1xf32>
    %131 = vector.broadcast %130 : vector<16x1xf32> to vector<16x32xf32>
    %132 = arith.subf %126, %131 : vector<16x32xf32>
    %133 = arith.mulf %132, %132 : vector<16x32xf32>
    %cst_43 = arith.constant dense<0.000000e+00> : vector<16xf32>
    %134 = vector.multi_reduction <add>, %133, %cst_43 [1] : vector<16x32xf32> to vector<16xf32>
    %135 = vector.shape_cast %134 : vector<16xf32> to vector<16x1xf32>
    %cst_44 = arith.constant 3.200000e+01 : f32
    %136 = vector.broadcast %cst_44 : f32 to vector<16x1xf32>
    %137 = arith.divf %135, %136 : vector<16x1xf32>
    %cst_45 = arith.constant 9.99999974E-6 : f32
    %138 = vector.broadcast %cst_45 : f32 to vector<16x1xf32>
    %139 = arith.addf %137, %138 : vector<16x1xf32>
    %140 = math.rsqrt %139 : vector<16x1xf32>
    %141 = vector.broadcast %140 : vector<16x1xf32> to vector<16x32xf32>
    %142 = arith.mulf %132, %141 : vector<16x32xf32>
    %143 = vector.broadcast %12 : vector<1x32xf32> to vector<16x32xf32>
    %144 = arith.mulf %142, %143 : vector<16x32xf32>
    %145 = vector.broadcast %13 : vector<1x32xf32> to vector<16x32xf32>
    %146 = arith.addf %144, %145 : vector<16x32xf32>
    %c0_46 = arith.constant 0 : index
    %c128 = arith.constant 128 : index
    %147 = vector.load %arg4[%c0_46, %c128] : memref<64x640xf32, #tpu.memory_space<vmem>>, vector<32x96xf32>
    %cst_47 = arith.constant dense<0.000000e+00> : vector<16x96xf32>
    %148 = tpu.matmul %146, %147, %cst_47 {dimension_numbers = #tpu.dot_dimension_numbers<[1], [0], [0], [1], [0, 0, 1, 1], [], []>} : vector<16x32xf32>, vector<32x96xf32>, vector<16x96xf32> -> vector<16x96xf32>
    %149 = vector.broadcast %6 : vector<1x96xf32> to vector<16x96xf32>
    %150 = arith.addf %148, %149 : vector<16x96xf32>
    %151 = vector.extract_strided_slice %150 {offsets = [0, 0], sizes = [16, 32], strides = [1, 1]} : vector<16x96xf32> to vector<16x32xf32>
    %152 = vector.extract_strided_slice %150 {offsets = [0, 32], sizes = [16, 64], strides = [1, 1]} : vector<16x96xf32> to vector<16x64xf32>
    %153 = vector.extract_strided_slice %151 {offsets = [0, 0], sizes = [16, 8], strides = [1, 1]} : vector<16x32xf32> to vector<16x8xf32>
    %154 = vector.extract_strided_slice %152 {offsets = [0, 0], sizes = [16, 8], strides = [1, 1]} : vector<16x64xf32> to vector<16x8xf32>
    %155 = vector.extract_strided_slice %152 {offsets = [0, 32], sizes = [16, 8], strides = [1, 1]} : vector<16x64xf32> to vector<16x8xf32>
    "tpu.trace_start"() <{level = 10 : i32, message = "td,sd->ts"}> : () -> ()
    %cst_48 = arith.constant dense<0.000000e+00> : vector<16x16xf32>
    %156 = tpu.matmul %153, %154, %cst_48 {dimension_numbers = #tpu.dot_dimension_numbers<[1], [1], [0], [0], [0, 0, 1, 0], [], []>} : vector<16x8xf32>, vector<16x8xf32>, vector<16x16xf32> -> vector<16x16xf32>
    "tpu.trace_stop"() : () -> ()
    %157 = arith.addf %156, %31 : vector<16x16xf32>
    %cst_49 = arith.constant dense<0xFF800000> : vector<16xf32>
    %158 = vector.multi_reduction <maximumf>, %157, %cst_49 [1] : vector<16x16xf32> to vector<16xf32>
    %159 = vector.shape_cast %158 : vector<16xf32> to vector<16x1xf32>
    %160 = vector.broadcast %159 : vector<16x1xf32> to vector<16x16xf32>
    %161 = arith.subf %157, %160 : vector<16x16xf32>
    %162 = math.exp %161 : vector<16x16xf32>
    %cst_50 = arith.constant dense<0.000000e+00> : vector<16xf32>
    %163 = vector.multi_reduction <add>, %162, %cst_50 [1] : vector<16x16xf32> to vector<16xf32>
    %164 = vector.shape_cast %163 : vector<16xf32> to vector<16x1xf32>
    %165 = vector.broadcast %164 : vector<16x1xf32> to vector<16x16xf32>
    %166 = arith.divf %162, %165 : vector<16x16xf32>
    %cst_51 = arith.constant dense<0.000000e+00> : vector<16x8xf32>
    %167 = tpu.matmul %166, %155, %cst_51 {dimension_numbers = #tpu.dot_dimension_numbers<[1], [0], [0], [1], [0, 0, 1, 1], [], []>} : vector<16x16xf32>, vector<16x8xf32>, vector<16x8xf32> -> vector<16x8xf32>
    %168 = vector.extract_strided_slice %43 {offsets = [0, 0], sizes = [8, 32], strides = [1, 1]} : vector<32x32xf32> to vector<8x32xf32>
    %cst_52 = arith.constant dense<0.000000e+00> : vector<16x32xf32>
    %169 = tpu.matmul %167, %168, %cst_52 {dimension_numbers = #tpu.dot_dimension_numbers<[1], [0], [0], [1], [0, 0, 1, 1], [], []>} : vector<16x8xf32>, vector<8x32xf32>, vector<16x32xf32> -> vector<16x32xf32>
    %170 = vector.extract_strided_slice %151 {offsets = [0, 8], sizes = [16, 8], strides = [1, 1]} : vector<16x32xf32> to vector<16x8xf32>
    %171 = vector.extract_strided_slice %152 {offsets = [0, 8], sizes = [16, 8], strides = [1, 1]} : vector<16x64xf32> to vector<16x8xf32>
    %172 = vector.extract_strided_slice %152 {offsets = [0, 40], sizes = [16, 8], strides = [1, 1]} : vector<16x64xf32> to vector<16x8xf32>
    "tpu.trace_start"() <{level = 10 : i32, message = "td,sd->ts"}> : () -> ()
    %cst_53 = arith.constant dense<0.000000e+00> : vector<16x16xf32>
    %173 = tpu.matmul %170, %171, %cst_53 {dimension_numbers = #tpu.dot_dimension_numbers<[1], [1], [0], [0], [0, 0, 1, 0], [], []>} : vector<16x8xf32>, vector<16x8xf32>, vector<16x16xf32> -> vector<16x16xf32>
    "tpu.trace_stop"() : () -> ()
    %174 = arith.addf %173, %31 : vector<16x16xf32>
    %cst_54 = arith.constant dense<0xFF800000> : vector<16xf32>
    %175 = vector.multi_reduction <maximumf>, %174, %cst_54 [1] : vector<16x16xf32> to vector<16xf32>
    %176 = vector.shape_cast %175 : vector<16xf32> to vector<16x1xf32>
    %177 = vector.broadcast %176 : vector<16x1xf32> to vector<16x16xf32>
    %178 = arith.subf %174, %177 : vector<16x16xf32>
    %179 = math.exp %178 : vector<16x16xf32>
    %cst_55 = arith.constant dense<0.000000e+00> : vector<16xf32>
    %180 = vector.multi_reduction <add>, %179, %cst_55 [1] : vector<16x16xf32> to vector<16xf32>
    %181 = vector.shape_cast %180 : vector<16xf32> to vector<16x1xf32>
    %182 = vector.broadcast %181 : vector<16x1xf32> to vector<16x16xf32>
    %183 = arith.divf %179, %182 : vector<16x16xf32>
    %cst_56 = arith.constant dense<0.000000e+00> : vector<16x8xf32>
    %184 = tpu.matmul %183, %172, %cst_56 {dimension_numbers = #tpu.dot_dimension_numbers<[1], [0], [0], [1], [0, 0, 1, 1], [], []>} : vector<16x16xf32>, vector<16x8xf32>, vector<16x8xf32> -> vector<16x8xf32>
    %185 = vector.extract_strided_slice %43 {offsets = [8, 0], sizes = [8, 32], strides = [1, 1]} : vector<32x32xf32> to vector<8x32xf32>
    %cst_57 = arith.constant dense<0.000000e+00> : vector<16x32xf32>
    %186 = tpu.matmul %184, %185, %cst_57 {dimension_numbers = #tpu.dot_dimension_numbers<[1], [0], [0], [1], [0, 0, 1, 1], [], []>} : vector<16x8xf32>, vector<8x32xf32>, vector<16x32xf32> -> vector<16x32xf32>
    %187 = arith.addf %169, %186 : vector<16x32xf32>
    %188 = vector.extract_strided_slice %151 {offsets = [0, 16], sizes = [16, 8], strides = [1, 1]} : vector<16x32xf32> to vector<16x8xf32>
    %189 = vector.extract_strided_slice %152 {offsets = [0, 16], sizes = [16, 8], strides = [1, 1]} : vector<16x64xf32> to vector<16x8xf32>
    %190 = vector.extract_strided_slice %152 {offsets = [0, 48], sizes = [16, 8], strides = [1, 1]} : vector<16x64xf32> to vector<16x8xf32>
    "tpu.trace_start"() <{level = 10 : i32, message = "td,sd->ts"}> : () -> ()
    %cst_58 = arith.constant dense<0.000000e+00> : vector<16x16xf32>
    %191 = tpu.matmul %188, %189, %cst_58 {dimension_numbers = #tpu.dot_dimension_numbers<[1], [1], [0], [0], [0, 0, 1, 0], [], []>} : vector<16x8xf32>, vector<16x8xf32>, vector<16x16xf32> -> vector<16x16xf32>
    "tpu.trace_stop"() : () -> ()
    %192 = arith.addf %191, %31 : vector<16x16xf32>
    %cst_59 = arith.constant dense<0xFF800000> : vector<16xf32>
    %193 = vector.multi_reduction <maximumf>, %192, %cst_59 [1] : vector<16x16xf32> to vector<16xf32>
    %194 = vector.shape_cast %193 : vector<16xf32> to vector<16x1xf32>
    %195 = vector.broadcast %194 : vector<16x1xf32> to vector<16x16xf32>
    %196 = arith.subf %192, %195 : vector<16x16xf32>
    %197 = math.exp %196 : vector<16x16xf32>
    %cst_60 = arith.constant dense<0.000000e+00> : vector<16xf32>
    %198 = vector.multi_reduction <add>, %197, %cst_60 [1] : vector<16x16xf32> to vector<16xf32>
    %199 = vector.shape_cast %198 : vector<16xf32> to vector<16x1xf32>
    %200 = vector.broadcast %199 : vector<16x1xf32> to vector<16x16xf32>
    %201 = arith.divf %197, %200 : vector<16x16xf32>
    %cst_61 = arith.constant dense<0.000000e+00> : vector<16x8xf32>
    %202 = tpu.matmul %201, %190, %cst_61 {dimension_numbers = #tpu.dot_dimension_numbers<[1], [0], [0], [1], [0, 0, 1, 1], [], []>} : vector<16x16xf32>, vector<16x8xf32>, vector<16x8xf32> -> vector<16x8xf32>
    %203 = vector.extract_strided_slice %43 {offsets = [16, 0], sizes = [8, 32], strides = [1, 1]} : vector<32x32xf32> to vector<8x32xf32>
    %cst_62 = arith.constant dense<0.000000e+00> : vector<16x32xf32>
    %204 = tpu.matmul %202, %203, %cst_62 {dimension_numbers = #tpu.dot_dimension_numbers<[1], [0], [0], [1], [0, 0, 1, 1], [], []>} : vector<16x8xf32>, vector<8x32xf32>, vector<16x32xf32> -> vector<16x32xf32>
    %205 = arith.addf %187, %204 : vector<16x32xf32>
    %206 = vector.extract_strided_slice %151 {offsets = [0, 24], sizes = [16, 8], strides = [1, 1]} : vector<16x32xf32> to vector<16x8xf32>
    %207 = vector.extract_strided_slice %152 {offsets = [0, 24], sizes = [16, 8], strides = [1, 1]} : vector<16x64xf32> to vector<16x8xf32>
    %208 = vector.extract_strided_slice %152 {offsets = [0, 56], sizes = [16, 8], strides = [1, 1]} : vector<16x64xf32> to vector<16x8xf32>
    "tpu.trace_start"() <{level = 10 : i32, message = "td,sd->ts"}> : () -> ()
    %cst_63 = arith.constant dense<0.000000e+00> : vector<16x16xf32>
    %209 = tpu.matmul %206, %207, %cst_63 {dimension_numbers = #tpu.dot_dimension_numbers<[1], [1], [0], [0], [0, 0, 1, 0], [], []>} : vector<16x8xf32>, vector<16x8xf32>, vector<16x16xf32> -> vector<16x16xf32>
    "tpu.trace_stop"() : () -> ()
    %210 = arith.addf %209, %31 : vector<16x16xf32>
    %cst_64 = arith.constant dense<0xFF800000> : vector<16xf32>
    %211 = vector.multi_reduction <maximumf>, %210, %cst_64 [1] : vector<16x16xf32> to vector<16xf32>
    %212 = vector.shape_cast %211 : vector<16xf32> to vector<16x1xf32>
    %213 = vector.broadcast %212 : vector<16x1xf32> to vector<16x16xf32>
    %214 = arith.subf %210, %213 : vector<16x16xf32>
    %215 = math.exp %214 : vector<16x16xf32>
    %cst_65 = arith.constant dense<0.000000e+00> : vector<16xf32>
    %216 = vector.multi_reduction <add>, %215, %cst_65 [1] : vector<16x16xf32> to vector<16xf32>
    %217 = vector.shape_cast %216 : vector<16xf32> to vector<16x1xf32>
    %218 = vector.broadcast %217 : vector<16x1xf32> to vector<16x16xf32>
    %219 = arith.divf %215, %218 : vector<16x16xf32>
    %cst_66 = arith.constant dense<0.000000e+00> : vector<16x8xf32>
    %220 = tpu.matmul %219, %208, %cst_66 {dimension_numbers = #tpu.dot_dimension_numbers<[1], [0], [0], [1], [0, 0, 1, 1], [], []>} : vector<16x16xf32>, vector<16x8xf32>, vector<16x8xf32> -> vector<16x8xf32>
    %221 = vector.extract_strided_slice %43 {offsets = [24, 0], sizes = [8, 32], strides = [1, 1]} : vector<32x32xf32> to vector<8x32xf32>
    %cst_67 = arith.constant dense<0.000000e+00> : vector<16x32xf32>
    %222 = tpu.matmul %220, %221, %cst_67 {dimension_numbers = #tpu.dot_dimension_numbers<[1], [0], [0], [1], [0, 0, 1, 1], [], []>} : vector<16x8xf32>, vector<8x32xf32>, vector<16x32xf32> -> vector<16x32xf32>
    %223 = arith.addf %205, %222 : vector<16x32xf32>
    %224 = vector.broadcast %10 : vector<1x32xf32> to vector<16x32xf32>
    %225 = arith.addf %223, %224 : vector<16x32xf32>
    %226 = arith.addf %146, %225 : vector<16x32xf32>
    %cst_68 = arith.constant dense<0.000000e+00> : vector<16xf32>
    %227 = vector.multi_reduction <add>, %226, %cst_68 [1] : vector<16x32xf32> to vector<16xf32>
    %228 = vector.shape_cast %227 : vector<16xf32> to vector<16x1xf32>
    %cst_69 = arith.constant 3.200000e+01 : f32
    %229 = vector.broadcast %cst_69 : f32 to vector<16x1xf32>
    %230 = arith.divf %228, %229 : vector<16x1xf32>
    %231 = vector.broadcast %230 : vector<16x1xf32> to vector<16x32xf32>
    %232 = arith.subf %226, %231 : vector<16x32xf32>
    %233 = arith.mulf %232, %232 : vector<16x32xf32>
    %cst_70 = arith.constant dense<0.000000e+00> : vector<16xf32>
    %234 = vector.multi_reduction <add>, %233, %cst_70 [1] : vector<16x32xf32> to vector<16xf32>
    %235 = vector.shape_cast %234 : vector<16xf32> to vector<16x1xf32>
    %cst_71 = arith.constant 3.200000e+01 : f32
    %236 = vector.broadcast %cst_71 : f32 to vector<16x1xf32>
    %237 = arith.divf %235, %236 : vector<16x1xf32>
    %cst_72 = arith.constant 9.99999974E-6 : f32
    %238 = vector.broadcast %cst_72 : f32 to vector<16x1xf32>
    %239 = arith.addf %237, %238 : vector<16x1xf32>
    %240 = math.rsqrt %239 : vector<16x1xf32>
    %241 = vector.broadcast %240 : vector<16x1xf32> to vector<16x32xf32>
    %242 = arith.mulf %232, %241 : vector<16x32xf32>
    %243 = vector.broadcast %14 : vector<1x32xf32> to vector<16x32xf32>
    %244 = arith.mulf %242, %243 : vector<16x32xf32>
    %245 = vector.broadcast %15 : vector<1x32xf32> to vector<16x32xf32>
    %246 = arith.addf %244, %245 : vector<16x32xf32>
    %c0_73 = arith.constant 0 : index
    %c256 = arith.constant 256 : index
    %247 = vector.load %arg4[%c0_73, %c256] : memref<64x640xf32, #tpu.memory_space<vmem>>, vector<32x32xf32>
    %cst_74 = arith.constant dense<0.000000e+00> : vector<16x32xf32>
    %248 = tpu.matmul %246, %247, %cst_74 {dimension_numbers = #tpu.dot_dimension_numbers<[1], [0], [0], [1], [0, 0, 1, 1], [], []>} : vector<16x32xf32>, vector<32x32xf32>, vector<16x32xf32> -> vector<16x32xf32>
    %249 = vector.broadcast %7 : vector<1x32xf32> to vector<16x32xf32>
    %250 = arith.addf %248, %249 : vector<16x32xf32>
    %c0_75 = arith.constant 0 : index
    %c288 = arith.constant 288 : index
    %251 = vector.load %arg4[%c0_75, %c288] : memref<64x640xf32, #tpu.memory_space<vmem>>, vector<32x64xf32>
    %cst_76 = arith.constant dense<0.000000e+00> : vector<32x64xf32>
    %252 = tpu.matmul %2, %251, %cst_76 {dimension_numbers = #tpu.dot_dimension_numbers<[1], [0], [0], [1], [0, 0, 1, 1], [], []>} : vector<32x32xf32>, vector<32x64xf32>, vector<32x64xf32> -> vector<32x64xf32>
    %253 = vector.broadcast %8 : vector<1x64xf32> to vector<32x64xf32>
    %254 = arith.addf %252, %253 : vector<32x64xf32>
    %255 = vector.extract_strided_slice %250 {offsets = [0, 0], sizes = [16, 8], strides = [1, 1]} : vector<16x32xf32> to vector<16x8xf32>
    %256 = vector.extract_strided_slice %254 {offsets = [0, 0], sizes = [32, 8], strides = [1, 1]} : vector<32x64xf32> to vector<32x8xf32>
    %257 = vector.extract_strided_slice %254 {offsets = [0, 32], sizes = [32, 8], strides = [1, 1]} : vector<32x64xf32> to vector<32x8xf32>
    "tpu.trace_start"() <{level = 10 : i32, message = "td,sd->ts"}> : () -> ()
    %cst_77 = arith.constant dense<0.000000e+00> : vector<16x32xf32>
    %258 = tpu.matmul %255, %256, %cst_77 {dimension_numbers = #tpu.dot_dimension_numbers<[1], [1], [0], [0], [0, 0, 1, 0], [], []>} : vector<16x8xf32>, vector<32x8xf32>, vector<16x32xf32> -> vector<16x32xf32>
    "tpu.trace_stop"() : () -> ()
    %259 = arith.addf %258, %41 : vector<16x32xf32>
    %cst_78 = arith.constant dense<0xFF800000> : vector<16xf32>
    %260 = vector.multi_reduction <maximumf>, %259, %cst_78 [1] : vector<16x32xf32> to vector<16xf32>
    %261 = vector.shape_cast %260 : vector<16xf32> to vector<16x1xf32>
    %262 = vector.broadcast %261 : vector<16x1xf32> to vector<16x32xf32>
    %263 = arith.subf %259, %262 : vector<16x32xf32>
    %264 = math.exp %263 : vector<16x32xf32>
    %cst_79 = arith.constant dense<0.000000e+00> : vector<16xf32>
    %265 = vector.multi_reduction <add>, %264, %cst_79 [1] : vector<16x32xf32> to vector<16xf32>
    %266 = vector.shape_cast %265 : vector<16xf32> to vector<16x1xf32>
    %267 = vector.broadcast %266 : vector<16x1xf32> to vector<16x32xf32>
    %268 = arith.divf %264, %267 : vector<16x32xf32>
    %cst_80 = arith.constant dense<0.000000e+00> : vector<16x8xf32>
    %269 = tpu.matmul %268, %257, %cst_80 {dimension_numbers = #tpu.dot_dimension_numbers<[1], [0], [0], [1], [0, 0, 1, 1], [], []>} : vector<16x32xf32>, vector<32x8xf32>, vector<16x8xf32> -> vector<16x8xf32>
    %270 = vector.extract_strided_slice %44 {offsets = [0, 0], sizes = [8, 32], strides = [1, 1]} : vector<32x32xf32> to vector<8x32xf32>
    %cst_81 = arith.constant dense<0.000000e+00> : vector<16x32xf32>
    %271 = tpu.matmul %269, %270, %cst_81 {dimension_numbers = #tpu.dot_dimension_numbers<[1], [0], [0], [1], [0, 0, 1, 1], [], []>} : vector<16x8xf32>, vector<8x32xf32>, vector<16x32xf32> -> vector<16x32xf32>
    %272 = vector.extract_strided_slice %250 {offsets = [0, 8], sizes = [16, 8], strides = [1, 1]} : vector<16x32xf32> to vector<16x8xf32>
    %273 = vector.extract_strided_slice %254 {offsets = [0, 8], sizes = [32, 8], strides = [1, 1]} : vector<32x64xf32> to vector<32x8xf32>
    %274 = vector.extract_strided_slice %254 {offsets = [0, 40], sizes = [32, 8], strides = [1, 1]} : vector<32x64xf32> to vector<32x8xf32>
    "tpu.trace_start"() <{level = 10 : i32, message = "td,sd->ts"}> : () -> ()
    %cst_82 = arith.constant dense<0.000000e+00> : vector<16x32xf32>
    %275 = tpu.matmul %272, %273, %cst_82 {dimension_numbers = #tpu.dot_dimension_numbers<[1], [1], [0], [0], [0, 0, 1, 0], [], []>} : vector<16x8xf32>, vector<32x8xf32>, vector<16x32xf32> -> vector<16x32xf32>
    "tpu.trace_stop"() : () -> ()
    %276 = arith.addf %275, %41 : vector<16x32xf32>
    %cst_83 = arith.constant dense<0xFF800000> : vector<16xf32>
    %277 = vector.multi_reduction <maximumf>, %276, %cst_83 [1] : vector<16x32xf32> to vector<16xf32>
    %278 = vector.shape_cast %277 : vector<16xf32> to vector<16x1xf32>
    %279 = vector.broadcast %278 : vector<16x1xf32> to vector<16x32xf32>
    %280 = arith.subf %276, %279 : vector<16x32xf32>
    %281 = math.exp %280 : vector<16x32xf32>
    %cst_84 = arith.constant dense<0.000000e+00> : vector<16xf32>
    %282 = vector.multi_reduction <add>, %281, %cst_84 [1] : vector<16x32xf32> to vector<16xf32>
    %283 = vector.shape_cast %282 : vector<16xf32> to vector<16x1xf32>
    %284 = vector.broadcast %283 : vector<16x1xf32> to vector<16x32xf32>
    %285 = arith.divf %281, %284 : vector<16x32xf32>
    %cst_85 = arith.constant dense<0.000000e+00> : vector<16x8xf32>
    %286 = tpu.matmul %285, %274, %cst_85 {dimension_numbers = #tpu.dot_dimension_numbers<[1], [0], [0], [1], [0, 0, 1, 1], [], []>} : vector<16x32xf32>, vector<32x8xf32>, vector<16x8xf32> -> vector<16x8xf32>
    %287 = vector.extract_strided_slice %44 {offsets = [8, 0], sizes = [8, 32], strides = [1, 1]} : vector<32x32xf32> to vector<8x32xf32>
    %cst_86 = arith.constant dense<0.000000e+00> : vector<16x32xf32>
    %288 = tpu.matmul %286, %287, %cst_86 {dimension_numbers = #tpu.dot_dimension_numbers<[1], [0], [0], [1], [0, 0, 1, 1], [], []>} : vector<16x8xf32>, vector<8x32xf32>, vector<16x32xf32> -> vector<16x32xf32>
    %289 = arith.addf %271, %288 : vector<16x32xf32>
    %290 = vector.extract_strided_slice %250 {offsets = [0, 16], sizes = [16, 8], strides = [1, 1]} : vector<16x32xf32> to vector<16x8xf32>
    %291 = vector.extract_strided_slice %254 {offsets = [0, 16], sizes = [32, 8], strides = [1, 1]} : vector<32x64xf32> to vector<32x8xf32>
    %292 = vector.extract_strided_slice %254 {offsets = [0, 48], sizes = [32, 8], strides = [1, 1]} : vector<32x64xf32> to vector<32x8xf32>
    "tpu.trace_start"() <{level = 10 : i32, message = "td,sd->ts"}> : () -> ()
    %cst_87 = arith.constant dense<0.000000e+00> : vector<16x32xf32>
    %293 = tpu.matmul %290, %291, %cst_87 {dimension_numbers = #tpu.dot_dimension_numbers<[1], [1], [0], [0], [0, 0, 1, 0], [], []>} : vector<16x8xf32>, vector<32x8xf32>, vector<16x32xf32> -> vector<16x32xf32>
    "tpu.trace_stop"() : () -> ()
    %294 = arith.addf %293, %41 : vector<16x32xf32>
    %cst_88 = arith.constant dense<0xFF800000> : vector<16xf32>
    %295 = vector.multi_reduction <maximumf>, %294, %cst_88 [1] : vector<16x32xf32> to vector<16xf32>
    %296 = vector.shape_cast %295 : vector<16xf32> to vector<16x1xf32>
    %297 = vector.broadcast %296 : vector<16x1xf32> to vector<16x32xf32>
    %298 = arith.subf %294, %297 : vector<16x32xf32>
    %299 = math.exp %298 : vector<16x32xf32>
    %cst_89 = arith.constant dense<0.000000e+00> : vector<16xf32>
    %300 = vector.multi_reduction <add>, %299, %cst_89 [1] : vector<16x32xf32> to vector<16xf32>
    %301 = vector.shape_cast %300 : vector<16xf32> to vector<16x1xf32>
    %302 = vector.broadcast %301 : vector<16x1xf32> to vector<16x32xf32>
    %303 = arith.divf %299, %302 : vector<16x32xf32>
    %cst_90 = arith.constant dense<0.000000e+00> : vector<16x8xf32>
    %304 = tpu.matmul %303, %292, %cst_90 {dimension_numbers = #tpu.dot_dimension_numbers<[1], [0], [0], [1], [0, 0, 1, 1], [], []>} : vector<16x32xf32>, vector<32x8xf32>, vector<16x8xf32> -> vector<16x8xf32>
    %305 = vector.extract_strided_slice %44 {offsets = [16, 0], sizes = [8, 32], strides = [1, 1]} : vector<32x32xf32> to vector<8x32xf32>
    %cst_91 = arith.constant dense<0.000000e+00> : vector<16x32xf32>
    %306 = tpu.matmul %304, %305, %cst_91 {dimension_numbers = #tpu.dot_dimension_numbers<[1], [0], [0], [1], [0, 0, 1, 1], [], []>} : vector<16x8xf32>, vector<8x32xf32>, vector<16x32xf32> -> vector<16x32xf32>
    %307 = arith.addf %289, %306 : vector<16x32xf32>
    %308 = vector.extract_strided_slice %250 {offsets = [0, 24], sizes = [16, 8], strides = [1, 1]} : vector<16x32xf32> to vector<16x8xf32>
    %309 = vector.extract_strided_slice %254 {offsets = [0, 24], sizes = [32, 8], strides = [1, 1]} : vector<32x64xf32> to vector<32x8xf32>
    %310 = vector.extract_strided_slice %254 {offsets = [0, 56], sizes = [32, 8], strides = [1, 1]} : vector<32x64xf32> to vector<32x8xf32>
    "tpu.trace_start"() <{level = 10 : i32, message = "td,sd->ts"}> : () -> ()
    %cst_92 = arith.constant dense<0.000000e+00> : vector<16x32xf32>
    %311 = tpu.matmul %308, %309, %cst_92 {dimension_numbers = #tpu.dot_dimension_numbers<[1], [1], [0], [0], [0, 0, 1, 0], [], []>} : vector<16x8xf32>, vector<32x8xf32>, vector<16x32xf32> -> vector<16x32xf32>
    "tpu.trace_stop"() : () -> ()
    %312 = arith.addf %311, %41 : vector<16x32xf32>
    %cst_93 = arith.constant dense<0xFF800000> : vector<16xf32>
    %313 = vector.multi_reduction <maximumf>, %312, %cst_93 [1] : vector<16x32xf32> to vector<16xf32>
    %314 = vector.shape_cast %313 : vector<16xf32> to vector<16x1xf32>
    %315 = vector.broadcast %314 : vector<16x1xf32> to vector<16x32xf32>
    %316 = arith.subf %312, %315 : vector<16x32xf32>
    %317 = math.exp %316 : vector<16x32xf32>
    %cst_94 = arith.constant dense<0.000000e+00> : vector<16xf32>
    %318 = vector.multi_reduction <add>, %317, %cst_94 [1] : vector<16x32xf32> to vector<16xf32>
    %319 = vector.shape_cast %318 : vector<16xf32> to vector<16x1xf32>
    %320 = vector.broadcast %319 : vector<16x1xf32> to vector<16x32xf32>
    %321 = arith.divf %317, %320 : vector<16x32xf32>
    %cst_95 = arith.constant dense<0.000000e+00> : vector<16x8xf32>
    %322 = tpu.matmul %321, %310, %cst_95 {dimension_numbers = #tpu.dot_dimension_numbers<[1], [0], [0], [1], [0, 0, 1, 1], [], []>} : vector<16x32xf32>, vector<32x8xf32>, vector<16x8xf32> -> vector<16x8xf32>
    %323 = vector.extract_strided_slice %44 {offsets = [24, 0], sizes = [8, 32], strides = [1, 1]} : vector<32x32xf32> to vector<8x32xf32>
    %cst_96 = arith.constant dense<0.000000e+00> : vector<16x32xf32>
    %324 = tpu.matmul %322, %323, %cst_96 {dimension_numbers = #tpu.dot_dimension_numbers<[1], [0], [0], [1], [0, 0, 1, 1], [], []>} : vector<16x8xf32>, vector<8x32xf32>, vector<16x32xf32> -> vector<16x32xf32>
    %325 = arith.addf %307, %324 : vector<16x32xf32>
    %326 = vector.broadcast %11 : vector<1x32xf32> to vector<16x32xf32>
    %327 = arith.addf %325, %326 : vector<16x32xf32>
    %328 = arith.addf %246, %327 : vector<16x32xf32>
    %cst_97 = arith.constant dense<0.000000e+00> : vector<16xf32>
    %329 = vector.multi_reduction <add>, %328, %cst_97 [1] : vector<16x32xf32> to vector<16xf32>
    %330 = vector.shape_cast %329 : vector<16xf32> to vector<16x1xf32>
    %cst_98 = arith.constant 3.200000e+01 : f32
    %331 = vector.broadcast %cst_98 : f32 to vector<16x1xf32>
    %332 = arith.divf %330, %331 : vector<16x1xf32>
    %333 = vector.broadcast %332 : vector<16x1xf32> to vector<16x32xf32>
    %334 = arith.subf %328, %333 : vector<16x32xf32>
    %335 = arith.mulf %334, %334 : vector<16x32xf32>
    %cst_99 = arith.constant dense<0.000000e+00> : vector<16xf32>
    %336 = vector.multi_reduction <add>, %335, %cst_99 [1] : vector<16x32xf32> to vector<16xf32>
    %337 = vector.shape_cast %336 : vector<16xf32> to vector<16x1xf32>
    %cst_100 = arith.constant 3.200000e+01 : f32
    %338 = vector.broadcast %cst_100 : f32 to vector<16x1xf32>
    %339 = arith.divf %337, %338 : vector<16x1xf32>
    %cst_101 = arith.constant 9.99999974E-6 : f32
    %340 = vector.broadcast %cst_101 : f32 to vector<16x1xf32>
    %341 = arith.addf %339, %340 : vector<16x1xf32>
    %342 = math.rsqrt %341 : vector<16x1xf32>
    %343 = vector.broadcast %342 : vector<16x1xf32> to vector<16x32xf32>
    %344 = arith.mulf %334, %343 : vector<16x32xf32>
    %345 = vector.broadcast %16 : vector<1x32xf32> to vector<16x32xf32>
    %346 = arith.mulf %344, %345 : vector<16x32xf32>
    %347 = vector.broadcast %17 : vector<1x32xf32> to vector<16x32xf32>
    %348 = arith.addf %346, %347 : vector<16x32xf32>
    %c0_102 = arith.constant 0 : index
    %c512 = arith.constant 512 : index
    %349 = vector.load %arg4[%c0_102, %c512] : memref<64x640xf32, #tpu.memory_space<vmem>>, vector<32x64xf32>
    %cst_103 = arith.constant dense<0.000000e+00> : vector<16x64xf32>
    %350 = tpu.matmul %348, %349, %cst_103 {dimension_numbers = #tpu.dot_dimension_numbers<[1], [0], [0], [1], [0, 0, 1, 1], [], []>} : vector<16x32xf32>, vector<32x64xf32>, vector<16x64xf32> -> vector<16x64xf32>
    %351 = vector.broadcast %20 : vector<1x64xf32> to vector<16x64xf32>
    %352 = arith.addf %350, %351 : vector<16x64xf32>
    %cst_104 = arith.constant 0.000000e+00 : f32
    %353 = vector.broadcast %cst_104 : f32 to vector<16x64xf32>
    %354 = arith.maximumf %352, %353 : vector<16x64xf32>
    %c0_105 = arith.constant 0 : index
    %c576 = arith.constant 576 : index
    %355 = vector.load %arg4[%c0_105, %c576] : memref<64x640xf32, #tpu.memory_space<vmem>>, vector<64x32xf32>
    %cst_106 = arith.constant dense<0.000000e+00> : vector<16x32xf32>
    %356 = tpu.matmul %354, %355, %cst_106 {dimension_numbers = #tpu.dot_dimension_numbers<[1], [0], [0], [1], [0, 0, 1, 1], [], []>} : vector<16x64xf32>, vector<64x32xf32>, vector<16x32xf32> -> vector<16x32xf32>
    %357 = vector.broadcast %21 : vector<1x32xf32> to vector<16x32xf32>
    %358 = arith.addf %356, %357 : vector<16x32xf32>
    %359 = arith.addf %348, %358 : vector<16x32xf32>
    %cst_107 = arith.constant dense<0.000000e+00> : vector<16xf32>
    %360 = vector.multi_reduction <add>, %359, %cst_107 [1] : vector<16x32xf32> to vector<16xf32>
    %361 = vector.shape_cast %360 : vector<16xf32> to vector<16x1xf32>
    %cst_108 = arith.constant 3.200000e+01 : f32
    %362 = vector.broadcast %cst_108 : f32 to vector<16x1xf32>
    %363 = arith.divf %361, %362 : vector<16x1xf32>
    %364 = vector.broadcast %363 : vector<16x1xf32> to vector<16x32xf32>
    %365 = arith.subf %359, %364 : vector<16x32xf32>
    %366 = arith.mulf %365, %365 : vector<16x32xf32>
    %cst_109 = arith.constant dense<0.000000e+00> : vector<16xf32>
    %367 = vector.multi_reduction <add>, %366, %cst_109 [1] : vector<16x32xf32> to vector<16xf32>
    %368 = vector.shape_cast %367 : vector<16xf32> to vector<16x1xf32>
    %cst_110 = arith.constant 3.200000e+01 : f32
    %369 = vector.broadcast %cst_110 : f32 to vector<16x1xf32>
    %370 = arith.divf %368, %369 : vector<16x1xf32>
    %cst_111 = arith.constant 9.99999974E-6 : f32
    %371 = vector.broadcast %cst_111 : f32 to vector<16x1xf32>
    %372 = arith.addf %370, %371 : vector<16x1xf32>
    %373 = math.rsqrt %372 : vector<16x1xf32>
    %374 = vector.broadcast %373 : vector<16x1xf32> to vector<16x32xf32>
    %375 = arith.mulf %365, %374 : vector<16x32xf32>
    %376 = vector.broadcast %18 : vector<1x32xf32> to vector<16x32xf32>
    %377 = arith.mulf %375, %376 : vector<16x32xf32>
    %378 = vector.broadcast %19 : vector<1x32xf32> to vector<16x32xf32>
    %379 = arith.addf %377, %378 : vector<16x32xf32>
    %c0_112 = arith.constant 0 : index
    %c0_113 = arith.constant 0 : index
    %380 = vector.load %arg5[%c0_112, %c0_113] : memref<16x32xf32, #tpu.memory_space<vmem>>, vector<16x32xf32>
    tpu.vector_store %arg5[%c0_112, %c0_113], %379 {strides = array<i32>} : memref<16x32xf32, #tpu.memory_space<vmem>>, vector<16x32xf32>,
    return
  }
  func.func @transform_0(%arg0: i32) -> (i32, i32) {
    %c0_i32 = arith.constant 0 : i32
    %c0_i32_0 = arith.constant 0 : i32
    %c0_i32_1 = arith.constant 0 : i32
    return %c0_i32, %c0_i32_0 : i32, i32
  }
  func.func @transform_1(%arg0: i32) -> (i32, i32) {
    %c0_i32 = arith.constant 0 : i32
    %c0_i32_0 = arith.constant 0 : i32
    %c0_i32_1 = arith.constant 0 : i32
    return %c0_i32, %c0_i32_0 : i32, i32
  }
  func.func @transform_2(%arg0: i32) -> (i32, i32) {
    %c0_i32 = arith.constant 0 : i32
    %c0_i32_0 = arith.constant 0 : i32
    %c0_i32_1 = arith.constant 0 : i32
    return %c0_i32, %c0_i32_0 : i32, i32
  }
  func.func @transform_3(%arg0: i32) -> (i32, i32) {
    %c0_i32 = arith.constant 0 : i32
    %c0_i32_0 = arith.constant 0 : i32
    %c0_i32_1 = arith.constant 0 : i32
    return %c0_i32, %c0_i32_0 : i32, i32
  }
  func.func @transform_4(%arg0: i32) -> (i32, i32) {
    %c0_i32 = arith.constant 0 : i32
    %c0_i32_0 = arith.constant 0 : i32
    %c0_i32_1 = arith.constant 0 : i32
    return %c0_i32, %c0_i32_0 : i32, i32
  }
}

</mosaic_0001>

<llo_original>
// kernel: tpu_custom_call.1
$region0: #{tpu_custom_call.1}
  #allocation0 [shape = 'u32[]', space=smem, size = 0x4, offset = 0x4, fixed_abs, tag = 'smem constant byte address 0x4 - core index']
  #allocation1 [shape = 'u32[144,128]{1,0:T(1,128)}', space=vmem, size = 0x12000, scoped, tag = 'internal scratch']
  %s0 = inlined_call_operand.hbm [shape: f32[16,32], index: 0, kind: input, shape index: {}]
  %s1 = inlined_call_operand.hbm [shape: f32[16,32], index: 1, kind: input, shape index: {}]
  %s2 = inlined_call_operand.hbm [shape: f32[32,32], index: 2, kind: input, shape index: {}]
  %s3 = inlined_call_operand.hbm [shape: f32[64,640], index: 3, kind: input, shape index: {}]
  %s4 = inlined_call_operand.hbm [shape: f32[16,32], index: 4, kind: output, shape index: {}]
  %s5 = sld [smem:[#allocation0]]
  $region42: #{tpu_custom_call.1} parent=0
    _
  %s7 = ssub.s32 1, %s5
  %s8 = scalar_select 0, %s7, %s5
  $region1: #{tpu_custom_call.1} parent=0
    #allocation2 [shape = 'u8[8192]{0}', space=vmem, size = 0x2000, scoped, tag = 'input window, operand 0, single buffered']
    #allocation3 [shape = 's32[1]{0}', space=sflag, size = 0x4, scoped, tag = 'scoped memory for tpu_custom_call.1']
    #allocation4 [shape = 's32[1]{0}', space=sflag, size = 0x4, scoped, tag = 'scoped memory for tpu_custom_call.1']
    #allocation5 [shape = 'u8[8192]{0}', space=vmem, size = 0x2000, scoped, tag = 'input window, operand 1, single buffered']
    #allocation6 [shape = 's32[1]{0}', space=sflag, size = 0x4, scoped, tag = 'scoped memory for tpu_custom_call.1']
    #allocation7 [shape = 'u8[16384]{0}', space=vmem, size = 0x4000, scoped, tag = 'input window, operand 2, single buffered']
    #allocation8 [shape = 'u8[163840]{0}', space=vmem, size = 0x28000, scoped, tag = 'input window, operand 3, single buffered']
    #allocation9 [shape = 's32[1]{0}', space=sflag, size = 0x4, scoped, tag = 'scoped memory for tpu_custom_call.1']
    #allocation10 [shape = 'u8[8192]{0}', space=vmem, size = 0x2000, scoped, tag = 'output window, operand 0, single buffered']
    %9 = vsyncpa [#allocation3], 0
    %10 = vsyncpa [#allocation6], 0
    %11 = vsyncpa [#allocation9], 0
    %12 = vsyncpa [#allocation4], 0
    // Predicated region
    $region2: #{tpu_custom_call.1} parent=1 // pred_check
      _
    $region3: #{tpu_custom_call.1} parent=1 // pred_check_branch
      %14 = sbr.rel (0) target = $region5
    $region4: #{tpu_custom_call.1} parent=1 // pred_region
      %s16 = ssub.s32 256, 256
      %17 = vsyncadd [#allocation3], %s16
      %s18 = sshll.u32 [#allocation2], 4
      %s19 = int_to_ptr.vmem [resolvable:$true] %s18
      %24 = dma.hbm_to_vmem [thread:$0]  %s0, 256, %s19, [#allocation3], 128, 128, 8
    $region5: #{tpu_custom_call.1} parent=1 // pred_fallthru
      _
    // Predicated region
    $region6: #{tpu_custom_call.1} parent=1 // pred_check
      _
    $region7: #{tpu_custom_call.1} parent=1 // pred_check_branch
      %26 = sbr.rel (0) target = $region9
    $region8: #{tpu_custom_call.1} parent=1 // pred_region
      %s28 = ssub.s32 256, 256
      %29 = vsyncadd [#allocation6], %s28
      %s30 = sshll.u32 [#allocation5], 4
      %s31 = int_to_ptr.vmem [resolvable:$true] %s30
      %36 = dma.hbm_to_vmem [thread:$0]  %s1, 256, %s31, [#allocation6], 128, 128, 8
    $region9: #{tpu_custom_call.1} parent=1 // pred_fallthru
      _
    // Predicated region
    $region10: #{tpu_custom_call.1} parent=1 // pred_check
      _
    $region11: #{tpu_custom_call.1} parent=1 // pred_check_branch
      %38 = sbr.rel (0) target = $region13
    $region12: #{tpu_custom_call.1} parent=1 // pred_region
      %s40 = ssub.s32 512, 512
      %41 = vsyncadd [#allocation6], %s40
      %s42 = sshll.u32 [#allocation7], 4
      %s43 = int_to_ptr.vmem [resolvable:$true] %s42
      %48 = dma.hbm_to_vmem [thread:$0]  %s2, 512, %s43, [#allocation6], 128, 128, 8
    $region13: #{tpu_custom_call.1} parent=1 // pred_fallthru
      _
    // Predicated region
    $region14: #{tpu_custom_call.1} parent=1 // pred_check
      _
    $region15: #{tpu_custom_call.1} parent=1 // pred_check_branch
      %50 = sbr.rel (0) target = $region17
    $region16: #{tpu_custom_call.1} parent=1 // pred_region
      %s52 = ssub.s32 5120, 5120
      %53 = vsyncadd [#allocation9], %s52
      %s54 = sshll.u32 [#allocation8], 4
      %s55 = int_to_ptr.vmem [resolvable:$true] %s54
      %60 = dma.hbm_to_vmem [thread:$0]  %s3, 5120, %s55, [#allocation9], 640, 640, 40
    $region17: #{tpu_custom_call.1} parent=1 // pred_fallthru
      _
    // Predicated region
    $region18: #{tpu_custom_call.1} parent=1 // pred_check
      _
    $region19: #{tpu_custom_call.1} parent=1 // pred_check_branch
      %62 = sbr.rel (0) target = $region21
    $region20: #{tpu_custom_call.1} parent=1 // pred_region
      %63 = dma.done [#allocation3], 256
    $region21: #{tpu_custom_call.1} parent=1 // pred_fallthru
      _
    // Predicated region
    $region22: #{tpu_custom_call.1} parent=1 // pred_check
      _
    $region23: #{tpu_custom_call.1} parent=1 // pred_check_branch
      %65 = sbr.rel (0) target = $region25
    $region24: #{tpu_custom_call.1} parent=1 // pred_region
      %66 = dma.done [#allocation6], 256
    $region25: #{tpu_custom_call.1} parent=1 // pred_fallthru
      _
    // Predicated region
    $region26: #{tpu_custom_call.1} parent=1 // pred_check
      _
    $region27: #{tpu_custom_call.1} parent=1 // pred_check_branch
      %68 = sbr.rel (0) target = $region29
    $region28: #{tpu_custom_call.1} parent=1 // pred_region
      %69 = dma.done [#allocation6], 512
    $region29: #{tpu_custom_call.1} parent=1 // pred_fallthru
      _
    // Predicated region
    $region30: #{tpu_custom_call.1} parent=1 // pred_check
      _
    $region31: #{tpu_custom_call.1} parent=1 // pred_check_branch
      %71 = sbr.rel (0) target = $region33
    $region32: #{tpu_custom_call.1} parent=1 // pred_region
      %72 = dma.done [#allocation9], 5120
    $region33: #{tpu_custom_call.1} parent=1 // pred_fallthru
      _
    %v73 = vld [vmem:[#allocation2] sm:$0xff]
    %v74 = vld [vmem:[#allocation2 + $0x8] sm:$0xff]
    %v75 = vld [vmem:[#allocation5] sm:$0xff]
    %v76 = vld [vmem:[#allocation5 + $0x8] sm:$0xff]
    %v77 = vld [vmem:[#allocation7] sm:$0xff]
    %v78 = vld [vmem:[#allocation7 + $0x8] sm:$0xff]
    %v79 = vld [vmem:[#allocation7 + $0x10] sm:$0xff]
    %v80 = vld [vmem:[#allocation7 + $0x18] sm:$0xff]
    %v81 = vld [vmem:[#allocation8 + $0xa0] sm:$0xff]
    %v82 = vld [vmem:[#allocation8 + $0xc8] sm:$0xff]
    %v83 = vlaneseq
    %v84 = vshrl.u32 %v83, 7
    %v85 = vadd.s32 %v84, 8
    %v86 = vlaneseq
    %v87 = vand.u32 %v86, 127
    %v88 = vand.u32 %v84, 1
    %v89 = vand.u32 %v85, 1
    %v90 = vand.u32 %v87, 1
    %vm91 = vcmp.eq.s32.totalorder %v88, %v90
    %vm92 = vcmp.eq.s32.totalorder %v89, %v90
    %v93 = vsel %vm91, 0.0, -1e+30
    %v94 = vsel %vm92, 0.0, -1e+30
    %v95 = vld [vmem:[#allocation8 + $0x18] sm:$0xff]
    %v96 = vld [vmem:[#allocation8 + $0x40] sm:$0xff]
    %v97 = vld [vmem:[#allocation8 + $0x68] sm:$0xff]
    %v98 = vld [vmem:[#allocation8 + $0x90] sm:$0xff]
    %v99 = vld [vmem:[#allocation8] sm:$0xff]
    %v100 = vld [vmem:[#allocation8 + $0x28] sm:$0xff]
    %v101 = vld [vmem:[#allocation8 + $0x50] sm:$0xff]
    %v102 = vld [vmem:[#allocation8 + $0x78] sm:$0xff]
    %v103 = vlaneseq
    %v104 = vshrl.u32 %v103, 7
    %v105 = vsub.s32 0, %v104
    %v106 = vrot.slane %v81, %v105
    %vm107 = vcmask 261120
    %v109 = vsel %vm107, %v73, 0
    %v112 = vsel %vm107, %v74, 0
    %114 = vmatprep.subr.mxu0 0.0
    %115 = vmatpush1.msra.mxu0 %v99
    %116 = vmatprep.subr.mxu0 0.0
    %117 = vmatpush1.msra.mxu0 %v100
    %118 = vmatprep.subr.mxu0 0.0
    %119 = vmatpush1.msra.mxu0 %v101
    %120 = vmatprep.subr.mxu0 0.0
    %121 = vmatpush1.msra.mxu0 %v102
    %122 = vmatprep.subr.mxu0 0.0
    %123 = vmatpush1.msra.mxu0 0.0
    %124 = vmatprep.subr.mxu0 0.0
    %125 = vmatpush1.msra.mxu0 0.0
    %126 = vmatprep.subr.mxu0 0.0
    %127 = vmatpush1.msra.mxu0 0.0
    %128 = vmatprep.subr.mxu0 0.0
    %129 = vmatpush1.msra.mxu0 0.0
    %130 = vmatprep.subr.mxu0 0.0
    %131 = vmatpush1.msra.mxu0 0.0
    %132 = vmatprep.subr.mxu0 0.0
    %133 = vmatpush1.msra.mxu0 0.0
    %134 = vmatprep.subr.mxu0 0.0
    %135 = vmatpush1.msra.mxu0 0.0
    %136 = vmatprep.subr.mxu0 0.0
    %137 = vmatpush1.msra.mxu0 0.0
    %138 = vmatprep.subr.mxu0 0.0
    %139 = vmatpush1.msra.mxu0 0.0
    %140 = vmatprep.subr.mxu0 0.0
    %141 = vmatpush1.msra.mxu0 0.0
    %142 = vmatprep.subr.mxu0 0.0
    %143 = vmatpush1.msra.mxu0 0.0
    %144 = vmatprep.subr.mxu0 0.0
    %145 = vmatpush1.msra.mxu0 0.0
    %146 = vmatprep.subr.mxu0 0.0
    %147 = vmatpush1.msra.mxu0 0.0
    %148 = vmatprep.subr.mxu0 0.0
    %149 = vmatpush1.msra.mxu0 0.0
    %150 = vmatprep.subr.mxu0 0.0
    %151 = vmatpush1.msra.mxu0 0.0
    %152 = vmatprep.subr.mxu0 0.0
    %153 = vmatpush1.msra.mxu0 0.0
    %154 = vmatprep.subr.mxu0 0.0
    %155 = vmatpush1.msra.mxu0 0.0
    %156 = vmatprep.subr.mxu0 0.0
    %157 = vmatpush1.msra.mxu0 0.0
    %158 = vmatprep.subr.mxu0 0.0
    %159 = vmatpush1.msra.mxu0 0.0
    %160 = vmatprep.subr.mxu0 0.0
    %161 = vmatpush1.msra.mxu0 0.0
    %162 = vmatprep.subr.mxu0 0.0
    %163 = vmatpush1.msra.mxu0 0.0
    %164 = vmatprep.subr.mxu0 0.0
    %165 = vmatpush1.msra.mxu0 0.0
    %166 = vmatprep.subr.mxu0 0.0
    %167 = vmatpush1.msra.mxu0 0.0
    %168 = vmatprep.subr.mxu0 0.0
    %169 = vmatpush1.msra.mxu0 0.0
    %170 = vmatprep.subr.mxu0 0.0
    %171 = vmatpush1.msra.mxu0 0.0
    %172 = vmatprep.subr.mxu0 0.0
    %173 = vmatpush1.msra.mxu0 0.0
    %174 = vmatprep.subr.mxu0 0.0
    %175 = vmatpush1.msra.mxu0 0.0
    %176 = vmatprep.subr.mxu0 0.0
    %177 = vmatpush1.msra.mxu0 0.0
    %178 = vmatprep.mubr.f32.mxu0 0.0
    %179 = vmatmul.mubr.f32.gmra.mrb[0].mxu0 %v109
    %v180 = vpop.f32.mrb[0].mxu0
    %v181 = vadd.f32 %v106, %v180
    %v182 = vpop.f32.mrb[0].mxu0
    %183 = vmatprep.mubr.f32.mxu0 0.0
    %184 = vmatmul.mubr.f32.gmra.mrb[0].mxu0 %v112
    %v185 = vpop.f32.mrb[0].mxu0
    %v186 = vadd.f32 %v106, %v185
    %v187 = vpop.f32.mrb[0].mxu0
    %188 = vdwg.mxu0
    %193 = vrot.lane.b32.xlu0 %v99, 96
    %v194 = vpop.permute.xlu0 %193
    %195 = vrot.lane.b32.xlu0 %v100, 96
    %v196 = vpop.permute.xlu0 %195
    %197 = vrot.lane.b32.xlu0 %v101, 96
    %v198 = vpop.permute.xlu0 %197
    %199 = vrot.lane.b32.xlu0 %v102, 96
    %v200 = vpop.permute.xlu0 %199
    %206 = vrot.lane.b32.xlu0 %v106, 96
    %v207 = vpop.permute.xlu0 %206
    %v210 = vsel %vm107, %v75, 0
    %v213 = vsel %vm107, %v76, 0
    %215 = vmatprep.subr.mxu0 0.0
    %216 = vmatpush1.msra.mxu0 %v194
    %217 = vmatprep.subr.mxu0 0.0
    %218 = vmatpush1.msra.mxu0 %v196
    %219 = vmatprep.subr.mxu0 0.0
    %220 = vmatpush1.msra.mxu0 %v198
    %221 = vmatprep.subr.mxu0 0.0
    %222 = vmatpush1.msra.mxu0 %v200
    %223 = vmatprep.subr.mxu0 0.0
    %224 = vmatpush1.msra.mxu0 0.0
    %225 = vmatprep.subr.mxu0 0.0
    %226 = vmatpush1.msra.mxu0 0.0
    %227 = vmatprep.subr.mxu0 0.0
    %228 = vmatpush1.msra.mxu0 0.0
    %229 = vmatprep.subr.mxu0 0.0
    %230 = vmatpush1.msra.mxu0 0.0
    %231 = vmatprep.subr.mxu0 0.0
    %232 = vmatpush1.msra.mxu0 0.0
    %233 = vmatprep.subr.mxu0 0.0
    %234 = vmatpush1.msra.mxu0 0.0
    %235 = vmatprep.subr.mxu0 0.0
    %236 = vmatpush1.msra.mxu0 0.0
    %237 = vmatprep.subr.mxu0 0.0
    %238 = vmatpush1.msra.mxu0 0.0
    %239 = vmatprep.subr.mxu0 0.0
    %240 = vmatpush1.msra.mxu0 0.0
    %241 = vmatprep.subr.mxu0 0.0
    %242 = vmatpush1.msra.mxu0 0.0
    %243 = vmatprep.subr.mxu0 0.0
    %244 = vmatpush1.msra.mxu0 0.0
    %245 = vmatprep.subr.mxu0 0.0
    %246 = vmatpush1.msra.mxu0 0.0
    %247 = vmatprep.subr.mxu0 0.0
    %248 = vmatpush1.msra.mxu0 0.0
    %249 = vmatprep.subr.mxu0 0.0
    %250 = vmatpush1.msra.mxu0 0.0
    %251 = vmatprep.subr.mxu0 0.0
    %252 = vmatpush1.msra.mxu0 0.0
    %253 = vmatprep.subr.mxu0 0.0
    %254 = vmatpush1.msra.mxu0 0.0
    %255 = vmatprep.subr.mxu0 0.0
    %256 = vmatpush1.msra.mxu0 0.0
    %257 = vmatprep.subr.mxu0 0.0
    %258 = vmatpush1.msra.mxu0 0.0
    %259 = vmatprep.subr.mxu0 0.0
    %260 = vmatpush1.msra.mxu0 0.0
    %261 = vmatprep.subr.mxu0 0.0
    %262 = vmatpush1.msra.mxu0 0.0
    %263 = vmatprep.subr.mxu0 0.0
    %264 = vmatpush1.msra.mxu0 0.0
    %265 = vmatprep.subr.mxu0 0.0
    %266 = vmatpush1.msra.mxu0 0.0
    %267 = vmatprep.subr.mxu0 0.0
    %268 = vmatpush1.msra.mxu0 0.0
    %269 = vmatprep.subr.mxu0 0.0
    %270 = vmatpush1.msra.mxu0 0.0
    %271 = vmatprep.subr.mxu0 0.0
    %272 = vmatpush1.msra.mxu0 0.0
    %273 = vmatprep.subr.mxu0 0.0
    %274 = vmatpush1.msra.mxu0 0.0
    %275 = vmatprep.subr.mxu0 0.0
    %276 = vmatpush1.msra.mxu0 0.0
    %277 = vmatprep.subr.mxu0 0.0
    %278 = vmatpush1.msra.mxu0 0.0
    %279 = vmatprep.mubr.f32.mxu0 0.0
    %280 = vmatmul.mubr.f32.gmra.mrb[0].mxu0 %v210
    %v281 = vpop.f32.mrb[0].mxu0
    %v282 = vadd.f32 %v207, %v281
    %v283 = vpop.f32.mrb[0].mxu0
    %284 = vmatprep.mubr.f32.mxu0 0.0
    %285 = vmatmul.mubr.f32.gmra.mrb[0].mxu0 %v213
    %v286 = vpop.f32.mrb[0].mxu0
    %v287 = vadd.f32 %v207, %v286
    %v288 = vpop.f32.mrb[0].mxu0
    %289 = vdwg.mxu0
    %vm290 = vcmask 64512
    %v292 = vsel %vm290, %v181, 0
    %v295 = vsel %vm290, %v186, 0
    %v298 = vsel %vm290, %v282, 0
    %v301 = vsel %vm290, %v287, 0
    %303 = vmatprep.subr.mxu0 0.0
    %304 = vmatpush1.xpose.msra.mxu0 %v298
    %305 = vmatprep.subr.mxu0 0.0
    %306 = vmatpush1.xpose.msra.mxu0 %v301
    %307 = vmatprep.subr.mxu0 0.0
    %308 = vmatpush1.xpose.msra.mxu0 0.0
    %309 = vmatprep.subr.mxu0 0.0
    %310 = vmatpush1.xpose.msra.mxu0 0.0
    %311 = vmatprep.subr.mxu0 0.0
    %312 = vmatpush1.xpose.msra.mxu0 0.0
    %313 = vmatprep.subr.mxu0 0.0
    %314 = vmatpush1.xpose.msra.mxu0 0.0
    %315 = vmatprep.subr.mxu0 0.0
    %316 = vmatpush1.xpose.msra.mxu0 0.0
    %317 = vmatprep.subr.mxu0 0.0
    %318 = vmatpush1.xpose.msra.mxu0 0.0
    %319 = vmatprep.subr.mxu0 0.0
    %320 = vmatpush1.xpose.msra.mxu0 0.0
    %321 = vmatprep.subr.mxu0 0.0
    %322 = vmatpush1.xpose.msra.mxu0 0.0
    %323 = vmatprep.subr.mxu0 0.0
    %324 = vmatpush1.xpose.msra.mxu0 0.0
    %325 = vmatprep.subr.mxu0 0.0
    %326 = vmatpush1.xpose.msra.mxu0 0.0
    %327 = vmatprep.subr.mxu0 0.0
    %328 = vmatpush1.xpose.msra.mxu0 0.0
    %329 = vmatprep.subr.mxu0 0.0
    %330 = vmatpush1.xpose.msra.mxu0 0.0
    %331 = vmatprep.subr.mxu0 0.0
    %332 = vmatpush1.xpose.msra.mxu0 0.0
    %333 = vmatprep.subr.mxu0 0.0
    %334 = vmatpush1.xpose.msra.mxu0 0.0
    %335 = vmatprep.subr.mxu0 0.0
    %336 = vmatpush1.xpose.msra.mxu0 0.0
    %337 = vmatprep.subr.mxu0 0.0
    %338 = vmatpush1.xpose.msra.mxu0 0.0
    %339 = vmatprep.subr.mxu0 0.0
    %340 = vmatpush1.xpose.msra.mxu0 0.0
    %341 = vmatprep.subr.mxu0 0.0
    %342 = vmatpush1.xpose.msra.mxu0 0.0
    %343 = vmatprep.subr.mxu0 0.0
    %344 = vmatpush1.xpose.msra.mxu0 0.0
    %345 = vmatprep.subr.mxu0 0.0
    %346 = vmatpush1.xpose.msra.mxu0 0.0
    %347 = vmatprep.subr.mxu0 0.0
    %348 = vmatpush1.xpose.msra.mxu0 0.0
    %349 = vmatprep.subr.mxu0 0.0
    %350 = vmatpush1.xpose.msra.mxu0 0.0
    %351 = vmatprep.subr.mxu0 0.0
    %352 = vmatpush1.xpose.msra.mxu0 0.0
    %353 = vmatprep.subr.mxu0 0.0
    %354 = vmatpush1.xpose.msra.mxu0 0.0
    %355 = vmatprep.subr.mxu0 0.0
    %356 = vmatpush1.xpose.msra.mxu0 0.0
    %357 = vmatprep.subr.mxu0 0.0
    %358 = vmatpush1.xpose.msra.mxu0 0.0
    %359 = vmatprep.subr.mxu0 0.0
    %360 = vmatpush1.xpose.msra.mxu0 0.0
    %361 = vmatprep.subr.mxu0 0.0
    %362 = vmatpush1.xpose.msra.mxu0 0.0
    %363 = vmatprep.subr.mxu0 0.0
    %364 = vmatpush1.xpose.msra.mxu0 0.0
    %365 = vmatprep.subr.mxu0 0.0
    %366 = vmatpush1.xpose.msra.mxu0 0.0
    %367 = vmatprep.mubr.f32.mxu0 0.0
    %368 = vmatmul.mubr.f32.gmra.mrb[0].mxu0 %v292
    %v369 = vpop.f32.mrb[0].mxu0
    %v370 = vadd.f32 %v93, %v369
    %v371 = vpop.f32.mrb[0].mxu0
    %372 = vmatprep.mubr.f32.mxu0 0.0
    %373 = vmatmul.mubr.f32.gmra.mrb[0].mxu0 %v295
    %v374 = vpop.f32.mrb[0].mxu0
    %v375 = vadd.f32 %v94, %v374
    %v376 = vpop.f32.mrb[0].mxu0
    %377 = vdwg.mxu0
    %vm378 = vcmask 130048
    %v379 = vsel %vm378, %v370, -inf
    %380 = vmax.xlane.f32.xlu0 %v379
    %v381 = vpop.xlane.xlu0 %380
    %v382 = vsel %vm378, %v375, -inf
    %383 = vmax.xlane.f32.xlu0 %v382
    %v384 = vpop.xlane.xlu0 %383
    %v385 = vsub.f32 %v370, %v381
    %v386 = vsub.f32 %v375, %v384
    %v387 = vmul.f32 %v385, 1.442695
    %v388 = vpow.pop %v387
    %v389 = vmul.f32 %v386, 1.442695
    %v390 = vpow.pop %v389
    %v391 = vsel %vm378, %v388, 0.0
    %392 = vadd.xlane.f32.xlu0 %v391
    %v393 = vpop.xlane.xlu0 %392
    %v394 = vsel %vm378, %v390, 0.0
    %395 = vadd.xlane.f32.xlu0 %v394
    %v396 = vpop.xlane.xlu0 %395
    %v397 = vrcp.pop %v393
    %v398 = vmul.f32 %v388, %v397
    %v399 = vrcp.pop %v396
    %v400 = vmul.f32 %v390, %v399
    %401 = vrot.lane.b32.xlu0 %v282, 96
    %v402 = vpop.permute.xlu0 %401
    %403 = vrot.lane.b32.xlu0 %v287, 96
    %v404 = vpop.permute.xlu0 %403
    %v408 = vsel %vm378, %v398, 0
    %v411 = vsel %vm378, %v400, 0
    %413 = vmatprep.subr.mxu0 0.0
    %414 = vmatpush1.msra.mxu0 %v402
    %415 = vmatprep.subr.mxu0 0.0
    %416 = vmatpush1.msra.mxu0 %v404
    %417 = vmatprep.subr.mxu0 0.0
    %418 = vmatpush1.msra.mxu0 0.0
    %419 = vmatprep.subr.mxu0 0.0
    %420 = vmatpush1.msra.mxu0 0.0
    %421 = vmatprep.subr.mxu0 0.0
    %422 = vmatpush1.msra.mxu0 0.0
    %423 = vmatprep.subr.mxu0 0.0
    %424 = vmatpush1.msra.mxu0 0.0
    %425 = vmatprep.subr.mxu0 0.0
    %426 = vmatpush1.msra.mxu0 0.0
    %427 = vmatprep.subr.mxu0 0.0
    %428 = vmatpush1.msra.mxu0 0.0
    %429 = vmatprep.subr.mxu0 0.0
    %430 = vmatpush1.msra.mxu0 0.0
    %431 = vmatprep.subr.mxu0 0.0
    %432 = vmatpush1.msra.mxu0 0.0
    %433 = vmatprep.subr.mxu0 0.0
    %434 = vmatpush1.msra.mxu0 0.0
    %435 = vmatprep.subr.mxu0 0.0
    %436 = vmatpush1.msra.mxu0 0.0
    %437 = vmatprep.subr.mxu0 0.0
    %438 = vmatpush1.msra.mxu0 0.0
    %439 = vmatprep.subr.mxu0 0.0
    %440 = vmatpush1.msra.mxu0 0.0
    %441 = vmatprep.subr.mxu0 0.0
    %442 = vmatpush1.msra.mxu0 0.0
    %443 = vmatprep.subr.mxu0 0.0
    %444 = vmatpush1.msra.mxu0 0.0
    %445 = vmatprep.subr.mxu0 0.0
    %446 = vmatpush1.msra.mxu0 0.0
    %447 = vmatprep.subr.mxu0 0.0
    %448 = vmatpush1.msra.mxu0 0.0
    %449 = vmatprep.subr.mxu0 0.0
    %450 = vmatpush1.msra.mxu0 0.0
    %451 = vmatprep.subr.mxu0 0.0
    %452 = vmatpush1.msra.mxu0 0.0
    %453 = vmatprep.subr.mxu0 0.0
    %454 = vmatpush1.msra.mxu0 0.0
    %455 = vmatprep.subr.mxu0 0.0
    %456 = vmatpush1.msra.mxu0 0.0
    %457 = vmatprep.subr.mxu0 0.0
    %458 = vmatpush1.msra.mxu0 0.0
    %459 = vmatprep.subr.mxu0 0.0
    %460 = vmatpush1.msra.mxu0 0.0
    %461 = vmatprep.subr.mxu0 0.0
    %462 = vmatpush1.msra.mxu0 0.0
    %463 = vmatprep.subr.mxu0 0.0
    %464 = vmatpush1.msra.mxu0 0.0
    %465 = vmatprep.subr.mxu0 0.0
    %466 = vmatpush1.msra.mxu0 0.0
    %467 = vmatprep.subr.mxu0 0.0
    %468 = vmatpush1.msra.mxu0 0.0
    %469 = vmatprep.subr.mxu0 0.0
    %470 = vmatpush1.msra.mxu0 0.0
    %471 = vmatprep.subr.mxu0 0.0
    %472 = vmatpush1.msra.mxu0 0.0
    %473 = vmatprep.subr.mxu0 0.0
    %474 = vmatpush1.msra.mxu0 0.0
    %475 = vmatprep.subr.mxu0 0.0
    %476 = vmatpush1.msra.mxu0 0.0
    %477 = vmatprep.mubr.f32.mxu0 0.0
    %478 = vmatmul.mubr.f32.gmra.mrb[0].mxu0 %v408
    %v479 = vpop.f32.mrb[0].mxu0
    %v480 = vadd.f32 0.0, %v479
    %v481 = vpop.f32.mrb[0].mxu0
    %482 = vmatprep.mubr.f32.mxu0 0.0
    %483 = vmatmul.mubr.f32.gmra.mrb[0].mxu0 %v411
    %v484 = vpop.f32.mrb[0].mxu0
    %v485 = vadd.f32 0.0, %v484
    %v486 = vpop.f32.mrb[0].mxu0
    %487 = vdwg.mxu0
    %488 = vrot.lane.b32.xlu0 %v181, 120
    %v489 = vpop.permute.xlu0 %488
    %490 = vrot.lane.b32.xlu0 %v186, 120
    %v491 = vpop.permute.xlu0 %490
    %492 = vrot.lane.b32.xlu0 %v282, 120
    %v493 = vpop.permute.xlu0 %492
    %494 = vrot.lane.b32.xlu0 %v287, 120
    %v495 = vpop.permute.xlu0 %494
    %v496 = vsel %vm290, %v489, 0
    %v498 = vsel %vm290, %v491, 0
    %v500 = vsel %vm290, %v493, 0
    %v502 = vsel %vm290, %v495, 0
    %504 = vmatprep.subr.mxu0 0.0
    %505 = vmatpush1.xpose.msra.mxu0 %v500
    %506 = vmatprep.subr.mxu0 0.0
    %507 = vmatpush1.xpose.msra.mxu0 %v502
    %508 = vmatprep.subr.mxu0 0.0
    %509 = vmatpush1.xpose.msra.mxu0 0.0
    %510 = vmatprep.subr.mxu0 0.0
    %511 = vmatpush1.xpose.msra.mxu0 0.0
    %512 = vmatprep.subr.mxu0 0.0
    %513 = vmatpush1.xpose.msra.mxu0 0.0
    %514 = vmatprep.subr.mxu0 0.0
    %515 = vmatpush1.xpose.msra.mxu0 0.0
    %516 = vmatprep.subr.mxu0 0.0
    %517 = vmatpush1.xpose.msra.mxu0 0.0
    %518 = vmatprep.subr.mxu0 0.0
    %519 = vmatpush1.xpose.msra.mxu0 0.0
    %520 = vmatprep.subr.mxu0 0.0
    %521 = vmatpush1.xpose.msra.mxu0 0.0
    %522 = vmatprep.subr.mxu0 0.0
    %523 = vmatpush1.xpose.msra.mxu0 0.0
    %524 = vmatprep.subr.mxu0 0.0
    %525 = vmatpush1.xpose.msra.mxu0 0.0
    %526 = vmatprep.subr.mxu0 0.0
    %527 = vmatpush1.xpose.msra.mxu0 0.0
    %528 = vmatprep.subr.mxu0 0.0
    %529 = vmatpush1.xpose.msra.mxu0 0.0
    %530 = vmatprep.subr.mxu0 0.0
    %531 = vmatpush1.xpose.msra.mxu0 0.0
    %532 = vmatprep.subr.mxu0 0.0
    %533 = vmatpush1.xpose.msra.mxu0 0.0
    %534 = vmatprep.subr.mxu0 0.0
    %535 = vmatpush1.xpose.msra.mxu0 0.0
    %536 = vmatprep.subr.mxu0 0.0
    %537 = vmatpush1.xpose.msra.mxu0 0.0
    %538 = vmatprep.subr.mxu0 0.0
    %539 = vmatpush1.xpose.msra.mxu0 0.0
    %540 = vmatprep.subr.mxu0 0.0
    %541 = vmatpush1.xpose.msra.mxu0 0.0
    %542 = vmatprep.subr.mxu0 0.0
    %543 = vmatpush1.xpose.msra.mxu0 0.0
    %544 = vmatprep.subr.mxu0 0.0
    %545 = vmatpush1.xpose.msra.mxu0 0.0
    %546 = vmatprep.subr.mxu0 0.0
    %547 = vmatpush1.xpose.msra.mxu0 0.0
    %548 = vmatprep.subr.mxu0 0.0
    %549 = vmatpush1.xpose.msra.mxu0 0.0
    %550 = vmatprep.subr.mxu0 0.0
    %551 = vmatpush1.xpose.msra.mxu0 0.0
    %552 = vmatprep.subr.mxu0 0.0
    %553 = vmatpush1.xpose.msra.mxu0 0.0
    %554 = vmatprep.subr.mxu0 0.0
    %555 = vmatpush1.xpose.msra.mxu0 0.0
    %556 = vmatprep.subr.mxu0 0.0
    %557 = vmatpush1.xpose.msra.mxu0 0.0
    %558 = vmatprep.subr.mxu0 0.0
    %559 = vmatpush1.xpose.msra.mxu0 0.0
    %560 = vmatprep.subr.mxu0 0.0
    %561 = vmatpush1.xpose.msra.mxu0 0.0
    %562 = vmatprep.subr.mxu0 0.0
    %563 = vmatpush1.xpose.msra.mxu0 0.0
    %564 = vmatprep.subr.mxu0 0.0
    %565 = vmatpush1.xpose.msra.mxu0 0.0
    %566 = vmatprep.subr.mxu0 0.0
    %567 = vmatpush1.xpose.msra.mxu0 0.0
    %568 = vmatprep.mubr.f32.mxu0 0.0
    %569 = vmatmul.mubr.f32.gmra.mrb[0].mxu0 %v496
    %v570 = vpop.f32.mrb[0].mxu0
    %v571 = vadd.f32 %v93, %v570
    %v572 = vpop.f32.mrb[0].mxu0
    %573 = vmatprep.mubr.f32.mxu0 0.0
    %574 = vmatmul.mubr.f32.gmra.mrb[0].mxu0 %v498
    %v575 = vpop.f32.mrb[0].mxu0
    %v576 = vadd.f32 %v94, %v575
    %v577 = vpop.f32.mrb[0].mxu0
    %578 = vdwg.mxu0
    %v579 = vsel %vm378, %v571, -inf
    %580 = vmax.xlane.f32.xlu0 %v579
    %v581 = vpop.xlane.xlu0 %580
    %v582 = vsel %vm378, %v576, -inf
    %583 = vmax.xlane.f32.xlu0 %v582
    %v584 = vpop.xlane.xlu0 %583
    %v585 = vsub.f32 %v571, %v581
    %v586 = vsub.f32 %v576, %v584
    %v587 = vmul.f32 %v585, 1.442695
    %v588 = vpow.pop %v587
    %v589 = vmul.f32 %v586, 1.442695
    %v590 = vpow.pop %v589
    %v591 = vsel %vm378, %v588, 0.0
    %592 = vadd.xlane.f32.xlu0 %v591
    %v593 = vpop.xlane.xlu0 %592
    %v594 = vsel %vm378, %v590, 0.0
    %595 = vadd.xlane.f32.xlu0 %v594
    %v596 = vpop.xlane.xlu0 %595
    %v597 = vrcp.pop %v593
    %v598 = vmul.f32 %v588, %v597
    %v599 = vrcp.pop %v596
    %v600 = vmul.f32 %v590, %v599
    %601 = vrot.lane.b32.xlu0 %v282, 88
    %v602 = vpop.permute.xlu0 %601
    %603 = vrot.lane.b32.xlu0 %v287, 88
    %v604 = vpop.permute.xlu0 %603
    %v608 = vsel %vm378, %v598, 0
    %v611 = vsel %vm378, %v600, 0
    %613 = vmatprep.subr.mxu0 0.0
    %614 = vmatpush1.msra.mxu0 %v602
    %615 = vmatprep.subr.mxu0 0.0
    %616 = vmatpush1.msra.mxu0 %v604
    %617 = vmatprep.subr.mxu0 0.0
    %618 = vmatpush1.msra.mxu0 0.0
    %619 = vmatprep.subr.mxu0 0.0
    %620 = vmatpush1.msra.mxu0 0.0
    %621 = vmatprep.subr.mxu0 0.0
    %622 = vmatpush1.msra.mxu0 0.0
    %623 = vmatprep.subr.mxu0 0.0
    %624 = vmatpush1.msra.mxu0 0.0
    %625 = vmatprep.subr.mxu0 0.0
    %626 = vmatpush1.msra.mxu0 0.0
    %627 = vmatprep.subr.mxu0 0.0
    %628 = vmatpush1.msra.mxu0 0.0
    %629 = vmatprep.subr.mxu0 0.0
    %630 = vmatpush1.msra.mxu0 0.0
    %631 = vmatprep.subr.mxu0 0.0
    %632 = vmatpush1.msra.mxu0 0.0
    %633 = vmatprep.subr.mxu0 0.0
    %634 = vmatpush1.msra.mxu0 0.0
    %635 = vmatprep.subr.mxu0 0.0
    %636 = vmatpush1.msra.mxu0 0.0
    %637 = vmatprep.subr.mxu0 0.0
    %638 = vmatpush1.msra.mxu0 0.0
    %639 = vmatprep.subr.mxu0 0.0
    %640 = vmatpush1.msra.mxu0 0.0
    %641 = vmatprep.subr.mxu0 0.0
    %642 = vmatpush1.msra.mxu0 0.0
    %643 = vmatprep.subr.mxu0 0.0
    %644 = vmatpush1.msra.mxu0 0.0
    %645 = vmatprep.subr.mxu0 0.0
    %646 = vmatpush1.msra.mxu0 0.0
    %647 = vmatprep.subr.mxu0 0.0
    %648 = vmatpush1.msra.mxu0 0.0
    %649 = vmatprep.subr.mxu0 0.0
    %650 = vmatpush1.msra.mxu0 0.0
    %651 = vmatprep.subr.mxu0 0.0
    %652 = vmatpush1.msra.mxu0 0.0
    %653 = vmatprep.subr.mxu0 0.0
    %654 = vmatpush1.msra.mxu0 0.0
    %655 = vmatprep.subr.mxu0 0.0
    %656 = vmatpush1.msra.mxu0 0.0
    %657 = vmatprep.subr.mxu0 0.0
    %658 = vmatpush1.msra.mxu0 0.0
    %659 = vmatprep.subr.mxu0 0.0
    %660 = vmatpush1.msra.mxu0 0.0
    %661 = vmatprep.subr.mxu0 0.0
    %662 = vmatpush1.msra.mxu0 0.0
    %663 = vmatprep.subr.mxu0 0.0
    %664 = vmatpush1.msra.mxu0 0.0
    %665 = vmatprep.subr.mxu0 0.0
    %666 = vmatpush1.msra.mxu0 0.0
    %667 = vmatprep.subr.mxu0 0.0
    %668 = vmatpush1.msra.mxu0 0.0
    %669 = vmatprep.subr.mxu0 0.0
    %670 = vmatpush1.msra.mxu0 0.0
    %671 = vmatprep.subr.mxu0 0.0
    %672 = vmatpush1.msra.mxu0 0.0
    %673 = vmatprep.subr.mxu0 0.0
    %674 = vmatpush1.msra.mxu0 0.0
    %675 = vmatprep.subr.mxu0 0.0
    %676 = vmatpush1.msra.mxu0 0.0
    %677 = vmatprep.mubr.f32.mxu0 0.0
    %678 = vmatmul.mubr.f32.gmra.mrb[0].mxu0 %v608
    %v679 = vpop.f32.mrb[0].mxu0
    %v680 = vadd.f32 0.0, %v679
    %v681 = vpop.f32.mrb[0].mxu0
    %682 = vmatprep.mubr.f32.mxu0 0.0
    %683 = vmatmul.mubr.f32.gmra.mrb[0].mxu0 %v611
    %v684 = vpop.f32.mrb[0].mxu0
    %v685 = vadd.f32 0.0, %v684
    %v686 = vpop.f32.mrb[0].mxu0
    %687 = vdwg.mxu0
    %v689 = vsel %vm290, %v680, 0
    %v692 = vsel %vm290, %v685, 0
    %694 = vmatprep.subr.mxu0 0.0
    %695 = vmatpush1.msra.mxu0 %v96
    %696 = vmatprep.subr.mxu0 0.0
    %697 = vmatpush1.msra.mxu0 0.0
    %698 = vmatprep.subr.mxu0 0.0
    %699 = vmatpush1.msra.mxu0 0.0
    %700 = vmatprep.subr.mxu0 0.0
    %701 = vmatpush1.msra.mxu0 0.0
    %702 = vmatprep.subr.mxu0 0.0
    %703 = vmatpush1.msra.mxu0 0.0
    %704 = vmatprep.subr.mxu0 0.0
    %705 = vmatpush1.msra.mxu0 0.0
    %706 = vmatprep.subr.mxu0 0.0
    %707 = vmatpush1.msra.mxu0 0.0
    %708 = vmatprep.subr.mxu0 0.0
    %709 = vmatpush1.msra.mxu0 0.0
    %710 = vmatprep.subr.mxu0 0.0
    %711 = vmatpush1.msra.mxu0 0.0
    %712 = vmatprep.subr.mxu0 0.0
    %713 = vmatpush1.msra.mxu0 0.0
    %714 = vmatprep.subr.mxu0 0.0
    %715 = vmatpush1.msra.mxu0 0.0
    %716 = vmatprep.subr.mxu0 0.0
    %717 = vmatpush1.msra.mxu0 0.0
    %718 = vmatprep.subr.mxu0 0.0
    %719 = vmatpush1.msra.mxu0 0.0
    %720 = vmatprep.subr.mxu0 0.0
    %721 = vmatpush1.msra.mxu0 0.0
    %722 = vmatprep.subr.mxu0 0.0
    %723 = vmatpush1.msra.mxu0 0.0
    %724 = vmatprep.subr.mxu0 0.0
    %725 = vmatpush1.msra.mxu0 0.0
    %726 = vmatprep.subr.mxu0 0.0
    %727 = vmatpush1.msra.mxu0 0.0
    %728 = vmatprep.subr.mxu0 0.0
    %729 = vmatpush1.msra.mxu0 0.0
    %730 = vmatprep.subr.mxu0 0.0
    %731 = vmatpush1.msra.mxu0 0.0
    %732 = vmatprep.subr.mxu0 0.0
    %733 = vmatpush1.msra.mxu0 0.0
    %734 = vmatprep.subr.mxu0 0.0
    %735 = vmatpush1.msra.mxu0 0.0
    %736 = vmatprep.subr.mxu0 0.0
    %737 = vmatpush1.msra.mxu0 0.0
    %738 = vmatprep.subr.mxu0 0.0
    %739 = vmatpush1.msra.mxu0 0.0
    %740 = vmatprep.subr.mxu0 0.0
    %741 = vmatpush1.msra.mxu0 0.0
    %742 = vmatprep.subr.mxu0 0.0
    %743 = vmatpush1.msra.mxu0 0.0
    %744 = vmatprep.subr.mxu0 0.0
    %745 = vmatpush1.msra.mxu0 0.0
    %746 = vmatprep.subr.mxu0 0.0
    %747 = vmatpush1.msra.mxu0 0.0
    %748 = vmatprep.subr.mxu0 0.0
    %749 = vmatpush1.msra.mxu0 0.0
    %750 = vmatprep.subr.mxu0 0.0
    %751 = vmatpush1.msra.mxu0 0.0
    %752 = vmatprep.subr.mxu0 0.0
    %753 = vmatpush1.msra.mxu0 0.0
    %754 = vmatprep.subr.mxu0 0.0
    %755 = vmatpush1.msra.mxu0 0.0
    %756 = vmatprep.subr.mxu0 0.0
    %757 = vmatpush1.msra.mxu0 0.0
    %758 = vmatprep.mubr.f32.mxu0 0.0
    %759 = vmatmul.mubr.f32.gmra.mrb[0].mxu0 %v689
    %v760 = vpop.f32.mrb[0].mxu0
    %v761 = vadd.f32 0.0, %v760
    %v762 = vpop.f32.mrb[0].mxu0
    %763 = vmatprep.mubr.f32.mxu0 0.0
    %764 = vmatmul.mubr.f32.gmra.mrb[0].mxu0 %v692
    %v765 = vpop.f32.mrb[0].mxu0
    %v766 = vadd.f32 0.0, %v765
    %v767 = vpop.f32.mrb[0].mxu0
    %768 = vdwg.mxu0
    %v770 = vsel %vm290, %v480, 0
    %v773 = vsel %vm290, %v485, 0
    %775 = vmatprep.subr.mxu0 0.0
    %776 = vmatpush1.msra.mxu0 %v95
    %777 = vmatprep.subr.mxu0 0.0
    %778 = vmatpush1.msra.mxu0 0.0
    %779 = vmatprep.subr.mxu0 0.0
    %780 = vmatpush1.msra.mxu0 0.0
    %781 = vmatprep.subr.mxu0 0.0
    %782 = vmatpush1.msra.mxu0 0.0
    %783 = vmatprep.subr.mxu0 0.0
    %784 = vmatpush1.msra.mxu0 0.0
    %785 = vmatprep.subr.mxu0 0.0
    %786 = vmatpush1.msra.mxu0 0.0
    %787 = vmatprep.subr.mxu0 0.0
    %788 = vmatpush1.msra.mxu0 0.0
    %789 = vmatprep.subr.mxu0 0.0
    %790 = vmatpush1.msra.mxu0 0.0
    %791 = vmatprep.subr.mxu0 0.0
    %792 = vmatpush1.msra.mxu0 0.0
    %793 = vmatprep.subr.mxu0 0.0
    %794 = vmatpush1.msra.mxu0 0.0
    %795 = vmatprep.subr.mxu0 0.0
    %796 = vmatpush1.msra.mxu0 0.0
    %797 = vmatprep.subr.mxu0 0.0
    %798 = vmatpush1.msra.mxu0 0.0
    %799 = vmatprep.subr.mxu0 0.0
    %800 = vmatpush1.msra.mxu0 0.0
    %801 = vmatprep.subr.mxu0 0.0
    %802 = vmatpush1.msra.mxu0 0.0
    %803 = vmatprep.subr.mxu0 0.0
    %804 = vmatpush1.msra.mxu0 0.0
    %805 = vmatprep.subr.mxu0 0.0
    %806 = vmatpush1.msra.mxu0 0.0
    %807 = vmatprep.subr.mxu0 0.0
    %808 = vmatpush1.msra.mxu0 0.0
    %809 = vmatprep.subr.mxu0 0.0
    %810 = vmatpush1.msra.mxu0 0.0
    %811 = vmatprep.subr.mxu0 0.0
    %812 = vmatpush1.msra.mxu0 0.0
    %813 = vmatprep.subr.mxu0 0.0
    %814 = vmatpush1.msra.mxu0 0.0
    %815 = vmatprep.subr.mxu0 0.0
    %816 = vmatpush1.msra.mxu0 0.0
    %817 = vmatprep.subr.mxu0 0.0
    %818 = vmatpush1.msra.mxu0 0.0
    %819 = vmatprep.subr.mxu0 0.0
    %820 = vmatpush1.msra.mxu0 0.0
    %821 = vmatprep.subr.mxu0 0.0
    %822 = vmatpush1.msra.mxu0 0.0
    %823 = vmatprep.subr.mxu0 0.0
    %824 = vmatpush1.msra.mxu0 0.0
    %825 = vmatprep.subr.mxu0 0.0
    %826 = vmatpush1.msra.mxu0 0.0
    %827 = vmatprep.subr.mxu0 0.0
    %828 = vmatpush1.msra.mxu0 0.0
    %829 = vmatprep.subr.mxu0 0.0
    %830 = vmatpush1.msra.mxu0 0.0
    %831 = vmatprep.subr.mxu0 0.0
    %832 = vmatpush1.msra.mxu0 0.0
    %833 = vmatprep.subr.mxu0 0.0
    %834 = vmatpush1.msra.mxu0 0.0
    %835 = vmatprep.subr.mxu0 0.0
    %836 = vmatpush1.msra.mxu0 0.0
    %837 = vmatprep.subr.mxu0 0.0
    %838 = vmatpush1.msra.mxu0 0.0
    %839 = vmatprep.mubr.f32.mxu0 0.0
    %840 = vmatmul.mubr.f32.gmra.mrb[0].mxu0 %v770
    %v841 = vpop.f32.mrb[0].mxu0
    %v842 = vadd.f32 %v761, %v841
    %v843 = vpop.f32.mrb[0].mxu0
    %844 = vmatprep.mubr.f32.mxu0 0.0
    %845 = vmatmul.mubr.f32.gmra.mrb[0].mxu0 %v773
    %v846 = vpop.f32.mrb[0].mxu0
    %v847 = vadd.f32 %v766, %v846
    %v848 = vpop.f32.mrb[0].mxu0
    %849 = vdwg.mxu0
    %850 = vrot.lane.b32.xlu0 %v181, 112
    %v851 = vpop.permute.xlu0 %850
    %852 = vrot.lane.b32.xlu0 %v186, 112
    %v853 = vpop.permute.xlu0 %852
    %854 = vrot.lane.b32.xlu0 %v282, 112
    %v855 = vpop.permute.xlu0 %854
    %856 = vrot.lane.b32.xlu0 %v287, 112
    %v857 = vpop.permute.xlu0 %856
    %v858 = vsel %vm290, %v851, 0
    %v860 = vsel %vm290, %v853, 0
    %v862 = vsel %vm290, %v855, 0
    %v864 = vsel %vm290, %v857, 0
    %866 = vmatprep.subr.mxu0 0.0
    %867 = vmatpush1.xpose.msra.mxu0 %v862
    %868 = vmatprep.subr.mxu0 0.0
    %869 = vmatpush1.xpose.msra.mxu0 %v864
    %870 = vmatprep.subr.mxu0 0.0
    %871 = vmatpush1.xpose.msra.mxu0 0.0
    %872 = vmatprep.subr.mxu0 0.0
    %873 = vmatpush1.xpose.msra.mxu0 0.0
    %874 = vmatprep.subr.mxu0 0.0
    %875 = vmatpush1.xpose.msra.mxu0 0.0
    %876 = vmatprep.subr.mxu0 0.0
    %877 = vmatpush1.xpose.msra.mxu0 0.0
    %878 = vmatprep.subr.mxu0 0.0
    %879 = vmatpush1.xpose.msra.mxu0 0.0
    %880 = vmatprep.subr.mxu0 0.0
    %881 = vmatpush1.xpose.msra.mxu0 0.0
    %882 = vmatprep.subr.mxu0 0.0
    %883 = vmatpush1.xpose.msra.mxu0 0.0
    %884 = vmatprep.subr.mxu0 0.0
    %885 = vmatpush1.xpose.msra.mxu0 0.0
    %886 = vmatprep.subr.mxu0 0.0
    %887 = vmatpush1.xpose.msra.mxu0 0.0
    %888 = vmatprep.subr.mxu0 0.0
    %889 = vmatpush1.xpose.msra.mxu0 0.0
    %890 = vmatprep.subr.mxu0 0.0
    %891 = vmatpush1.xpose.msra.mxu0 0.0
    %892 = vmatprep.subr.mxu0 0.0
    %893 = vmatpush1.xpose.msra.mxu0 0.0
    %894 = vmatprep.subr.mxu0 0.0
    %895 = vmatpush1.xpose.msra.mxu0 0.0
    %896 = vmatprep.subr.mxu0 0.0
    %897 = vmatpush1.xpose.msra.mxu0 0.0
    %898 = vmatprep.subr.mxu0 0.0
    %899 = vmatpush1.xpose.msra.mxu0 0.0
    %900 = vmatprep.subr.mxu0 0.0
    %901 = vmatpush1.xpose.msra.mxu0 0.0
    %902 = vmatprep.subr.mxu0 0.0
    %903 = vmatpush1.xpose.msra.mxu0 0.0
    %904 = vmatprep.subr.mxu0 0.0
    %905 = vmatpush1.xpose.msra.mxu0 0.0
    %906 = vmatprep.subr.mxu0 0.0
    %907 = vmatpush1.xpose.msra.mxu0 0.0
    %908 = vmatprep.subr.mxu0 0.0
    %909 = vmatpush1.xpose.msra.mxu0 0.0
    %910 = vmatprep.subr.mxu0 0.0
    %911 = vmatpush1.xpose.msra.mxu0 0.0
    %912 = vmatprep.subr.mxu0 0.0
    %913 = vmatpush1.xpose.msra.mxu0 0.0
    %914 = vmatprep.subr.mxu0 0.0
    %915 = vmatpush1.xpose.msra.mxu0 0.0
    %916 = vmatprep.subr.mxu0 0.0
    %917 = vmatpush1.xpose.msra.mxu0 0.0
    %918 = vmatprep.subr.mxu0 0.0
    %919 = vmatpush1.xpose.msra.mxu0 0.0
    %920 = vmatprep.subr.mxu0 0.0
    %921 = vmatpush1.xpose.msra.mxu0 0.0
    %922 = vmatprep.subr.mxu0 0.0
    %923 = vmatpush1.xpose.msra.mxu0 0.0
    %924 = vmatprep.subr.mxu0 0.0
    %925 = vmatpush1.xpose.msra.mxu0 0.0
    %926 = vmatprep.subr.mxu0 0.0
    %927 = vmatpush1.xpose.msra.mxu0 0.0
    %928 = vmatprep.subr.mxu0 0.0
    %929 = vmatpush1.xpose.msra.mxu0 0.0
    %930 = vmatprep.mubr.f32.mxu0 0.0
    %931 = vmatmul.mubr.f32.gmra.mrb[0].mxu0 %v858
    %v932 = vpop.f32.mrb[0].mxu0
    %v933 = vadd.f32 %v93, %v932
    %v934 = vpop.f32.mrb[0].mxu0
    %935 = vmatprep.mubr.f32.mxu0 0.0
    %936 = vmatmul.mubr.f32.gmra.mrb[0].mxu0 %v860
    %v937 = vpop.f32.mrb[0].mxu0
    %v938 = vadd.f32 %v94, %v937
    %v939 = vpop.f32.mrb[0].mxu0
    %940 = vdwg.mxu0
    %v941 = vsel %vm378, %v933, -inf
    %942 = vmax.xlane.f32.xlu0 %v941
    %v943 = vpop.xlane.xlu0 %942
    %v944 = vsel %vm378, %v938, -inf
    %945 = vmax.xlane.f32.xlu0 %v944
    %v946 = vpop.xlane.xlu0 %945
    %v947 = vsub.f32 %v933, %v943
    %v948 = vsub.f32 %v938, %v946
    %v949 = vmul.f32 %v947, 1.442695
    %v950 = vpow.pop %v949
    %v951 = vmul.f32 %v948, 1.442695
    %v952 = vpow.pop %v951
    %v953 = vsel %vm378, %v950, 0.0
    %954 = vadd.xlane.f32.xlu0 %v953
    %v955 = vpop.xlane.xlu0 %954
    %v956 = vsel %vm378, %v952, 0.0
    %957 = vadd.xlane.f32.xlu0 %v956
    %v958 = vpop.xlane.xlu0 %957
    %v959 = vrcp.pop %v955
    %v960 = vmul.f32 %v950, %v959
    %v961 = vrcp.pop %v958
    %v962 = vmul.f32 %v952, %v961
    %963 = vrot.lane.b32.xlu0 %v282, 80
    %v964 = vpop.permute.xlu0 %963
    %965 = vrot.lane.b32.xlu0 %v287, 80
    %v966 = vpop.permute.xlu0 %965
    %v970 = vsel %vm378, %v960, 0
    %v973 = vsel %vm378, %v962, 0
    %975 = vmatprep.subr.mxu0 0.0
    %976 = vmatpush1.msra.mxu0 %v964
    %977 = vmatprep.subr.mxu0 0.0
    %978 = vmatpush1.msra.mxu0 %v966
    %979 = vmatprep.subr.mxu0 0.0
    %980 = vmatpush1.msra.mxu0 0.0
    %981 = vmatprep.subr.mxu0 0.0
    %982 = vmatpush1.msra.mxu0 0.0
    %983 = vmatprep.subr.mxu0 0.0
    %984 = vmatpush1.msra.mxu0 0.0
    %985 = vmatprep.subr.mxu0 0.0
    %986 = vmatpush1.msra.mxu0 0.0
    %987 = vmatprep.subr.mxu0 0.0
    %988 = vmatpush1.msra.mxu0 0.0
    %989 = vmatprep.subr.mxu0 0.0
    %990 = vmatpush1.msra.mxu0 0.0
    %991 = vmatprep.subr.mxu0 0.0
    %992 = vmatpush1.msra.mxu0 0.0
    %993 = vmatprep.subr.mxu0 0.0
    %994 = vmatpush1.msra.mxu0 0.0
    %995 = vmatprep.subr.mxu0 0.0
    %996 = vmatpush1.msra.mxu0 0.0
    %997 = vmatprep.subr.mxu0 0.0
    %998 = vmatpush1.msra.mxu0 0.0
    %999 = vmatprep.subr.mxu0 0.0
    %1000 = vmatpush1.msra.mxu0 0.0
    %1001 = vmatprep.subr.mxu0 0.0
    %1002 = vmatpush1.msra.mxu0 0.0
    %1003 = vmatprep.subr.mxu0 0.0
    %1004 = vmatpush1.msra.mxu0 0.0
    %1005 = vmatprep.subr.mxu0 0.0
    %1006 = vmatpush1.msra.mxu0 0.0
    %1007 = vmatprep.subr.mxu0 0.0
    %1008 = vmatpush1.msra.mxu0 0.0
    %1009 = vmatprep.subr.mxu0 0.0
    %1010 = vmatpush1.msra.mxu0 0.0
    %1011 = vmatprep.subr.mxu0 0.0
    %1012 = vmatpush1.msra.mxu0 0.0
    %1013 = vmatprep.subr.mxu0 0.0
    %1014 = vmatpush1.msra.mxu0 0.0
    %1015 = vmatprep.subr.mxu0 0.0
    %1016 = vmatpush1.msra.mxu0 0.0
    %1017 = vmatprep.subr.mxu0 0.0
    %1018 = vmatpush1.msra.mxu0 0.0
    %1019 = vmatprep.subr.mxu0 0.0
    %1020 = vmatpush1.msra.mxu0 0.0
    %1021 = vmatprep.subr.mxu0 0.0
    %1022 = vmatpush1.msra.mxu0 0.0
    %1023 = vmatprep.subr.mxu0 0.0
    %1024 = vmatpush1.msra.mxu0 0.0
    %1025 = vmatprep.subr.mxu0 0.0
    %1026 = vmatpush1.msra.mxu0 0.0
    %1027 = vmatprep.subr.mxu0 0.0
    %1028 = vmatpush1.msra.mxu0 0.0
    %1029 = vmatprep.subr.mxu0 0.0
    %1030 = vmatpush1.msra.mxu0 0.0
    %1031 = vmatprep.subr.mxu0 0.0
    %1032 = vmatpush1.msra.mxu0 0.0
    %1033 = vmatprep.subr.mxu0 0.0
    %1034 = vmatpush1.msra.mxu0 0.0
    %1035 = vmatprep.subr.mxu0 0.0
    %1036 = vmatpush1.msra.mxu0 0.0
    %1037 = vmatprep.subr.mxu0 0.0
    %1038 = vmatpush1.msra.mxu0 0.0
    %1039 = vmatprep.mubr.f32.mxu0 0.0
    %1040 = vmatmul.mubr.f32.gmra.mrb[0].mxu0 %v970
    %v1041 = vpop.f32.mrb[0].mxu0
    %v1042 = vadd.f32 0.0, %v1041
    %v1043 = vpop.f32.mrb[0].mxu0
    %1044 = vmatprep.mubr.f32.mxu0 0.0
    %1045 = vmatmul.mubr.f32.gmra.mrb[0].mxu0 %v973
    %v1046 = vpop.f32.mrb[0].mxu0
    %v1047 = vadd.f32 0.0, %v1046
    %v1048 = vpop.f32.mrb[0].mxu0
    %1049 = vdwg.mxu0
    %v1051 = vsel %vm290, %v1042, 0
    %v1054 = vsel %vm290, %v1047, 0
    %1056 = vmatprep.subr.mxu0 0.0
    %1057 = vmatpush1.msra.mxu0 %v97
    %1058 = vmatprep.subr.mxu0 0.0
    %1059 = vmatpush1.msra.mxu0 0.0
    %1060 = vmatprep.subr.mxu0 0.0
    %1061 = vmatpush1.msra.mxu0 0.0
    %1062 = vmatprep.subr.mxu0 0.0
    %1063 = vmatpush1.msra.mxu0 0.0
    %1064 = vmatprep.subr.mxu0 0.0
    %1065 = vmatpush1.msra.mxu0 0.0
    %1066 = vmatprep.subr.mxu0 0.0
    %1067 = vmatpush1.msra.mxu0 0.0
    %1068 = vmatprep.subr.mxu0 0.0
    %1069 = vmatpush1.msra.mxu0 0.0
    %1070 = vmatprep.subr.mxu0 0.0
    %1071 = vmatpush1.msra.mxu0 0.0
    %1072 = vmatprep.subr.mxu0 0.0
    %1073 = vmatpush1.msra.mxu0 0.0
    %1074 = vmatprep.subr.mxu0 0.0
    %1075 = vmatpush1.msra.mxu0 0.0
    %1076 = vmatprep.subr.mxu0 0.0
    %1077 = vmatpush1.msra.mxu0 0.0
    %1078 = vmatprep.subr.mxu0 0.0
    %1079 = vmatpush1.msra.mxu0 0.0
    %1080 = vmatprep.subr.mxu0 0.0
    %1081 = vmatpush1.msra.mxu0 0.0
    %1082 = vmatprep.subr.mxu0 0.0
    %1083 = vmatpush1.msra.mxu0 0.0
    %1084 = vmatprep.subr.mxu0 0.0
    %1085 = vmatpush1.msra.mxu0 0.0
    %1086 = vmatprep.subr.mxu0 0.0
    %1087 = vmatpush1.msra.mxu0 0.0
    %1088 = vmatprep.subr.mxu0 0.0
    %1089 = vmatpush1.msra.mxu0 0.0
    %1090 = vmatprep.subr.mxu0 0.0
    %1091 = vmatpush1.msra.mxu0 0.0
    %1092 = vmatprep.subr.mxu0 0.0
    %1093 = vmatpush1.msra.mxu0 0.0
    %1094 = vmatprep.subr.mxu0 0.0
    %1095 = vmatpush1.msra.mxu0 0.0
    %1096 = vmatprep.subr.mxu0 0.0
    %1097 = vmatpush1.msra.mxu0 0.0
    %1098 = vmatprep.subr.mxu0 0.0
    %1099 = vmatpush1.msra.mxu0 0.0
    %1100 = vmatprep.subr.mxu0 0.0
    %1101 = vmatpush1.msra.mxu0 0.0
    %1102 = vmatprep.subr.mxu0 0.0
    %1103 = vmatpush1.msra.mxu0 0.0
    %1104 = vmatprep.subr.mxu0 0.0
    %1105 = vmatpush1.msra.mxu0 0.0
    %1106 = vmatprep.subr.mxu0 0.0
    %1107 = vmatpush1.msra.mxu0 0.0
    %1108 = vmatprep.subr.mxu0 0.0
    %1109 = vmatpush1.msra.mxu0 0.0
    %1110 = vmatprep.subr.mxu0 0.0
    %1111 = vmatpush1.msra.mxu0 0.0
    %1112 = vmatprep.subr.mxu0 0.0
    %1113 = vmatpush1.msra.mxu0 0.0
    %1114 = vmatprep.subr.mxu0 0.0
    %1115 = vmatpush1.msra.mxu0 0.0
    %1116 = vmatprep.subr.mxu0 0.0
    %1117 = vmatpush1.msra.mxu0 0.0
    %1118 = vmatprep.subr.mxu0 0.0
    %1119 = vmatpush1.msra.mxu0 0.0
    %1120 = vmatprep.mubr.f32.mxu0 0.0
    %1121 = vmatmul.mubr.f32.gmra.mrb[0].mxu0 %v1051
    %v1122 = vpop.f32.mrb[0].mxu0
    %v1123 = vadd.f32 0.0, %v1122
    %v1124 = vpop.f32.mrb[0].mxu0
    %1125 = vmatprep.mubr.f32.mxu0 0.0
    %1126 = vmatmul.mubr.f32.gmra.mrb[0].mxu0 %v1054
    %v1127 = vpop.f32.mrb[0].mxu0
    %v1128 = vadd.f32 0.0, %v1127
    %v1129 = vpop.f32.mrb[0].mxu0
    %1130 = vdwg.mxu0
    %v1131 = vadd.f32 %v842, %v1123
    %v1132 = vadd.f32 %v847, %v1128
    %1133 = vrot.lane.b32.xlu0 %v181, 104
    %v1134 = vpop.permute.xlu0 %1133
    %1135 = vrot.lane.b32.xlu0 %v186, 104
    %v1136 = vpop.permute.xlu0 %1135
    %1137 = vrot.lane.b32.xlu0 %v282, 104
    %v1138 = vpop.permute.xlu0 %1137
    %1139 = vrot.lane.b32.xlu0 %v287, 104
    %v1140 = vpop.permute.xlu0 %1139
    %v1141 = vsel %vm290, %v1134, 0
    %v1143 = vsel %vm290, %v1136, 0
    %v1145 = vsel %vm290, %v1138, 0
    %v1147 = vsel %vm290, %v1140, 0
    %1149 = vmatprep.subr.mxu0 0.0
    %1150 = vmatpush1.xpose.msra.mxu0 %v1145
    %1151 = vmatprep.subr.mxu0 0.0
    %1152 = vmatpush1.xpose.msra.mxu0 %v1147
    %1153 = vmatprep.subr.mxu0 0.0
    %1154 = vmatpush1.xpose.msra.mxu0 0.0
    %1155 = vmatprep.subr.mxu0 0.0
    %1156 = vmatpush1.xpose.msra.mxu0 0.0
    %1157 = vmatprep.subr.mxu0 0.0
    %1158 = vmatpush1.xpose.msra.mxu0 0.0
    %1159 = vmatprep.subr.mxu0 0.0
    %1160 = vmatpush1.xpose.msra.mxu0 0.0
    %1161 = vmatprep.subr.mxu0 0.0
    %1162 = vmatpush1.xpose.msra.mxu0 0.0
    %1163 = vmatprep.subr.mxu0 0.0
    %1164 = vmatpush1.xpose.msra.mxu0 0.0
    %1165 = vmatprep.subr.mxu0 0.0
    %1166 = vmatpush1.xpose.msra.mxu0 0.0
    %1167 = vmatprep.subr.mxu0 0.0
    %1168 = vmatpush1.xpose.msra.mxu0 0.0
    %1169 = vmatprep.subr.mxu0 0.0
    %1170 = vmatpush1.xpose.msra.mxu0 0.0
    %1171 = vmatprep.subr.mxu0 0.0
    %1172 = vmatpush1.xpose.msra.mxu0 0.0
    %1173 = vmatprep.subr.mxu0 0.0
    %1174 = vmatpush1.xpose.msra.mxu0 0.0
    %1175 = vmatprep.subr.mxu0 0.0
    %1176 = vmatpush1.xpose.msra.mxu0 0.0
    %1177 = vmatprep.subr.mxu0 0.0
    %1178 = vmatpush1.xpose.msra.mxu0 0.0
    %1179 = vmatprep.subr.mxu0 0.0
    %1180 = vmatpush1.xpose.msra.mxu0 0.0
    %1181 = vmatprep.subr.mxu0 0.0
    %1182 = vmatpush1.xpose.msra.mxu0 0.0
    %1183 = vmatprep.subr.mxu0 0.0
    %1184 = vmatpush1.xpose.msra.mxu0 0.0
    %1185 = vmatprep.subr.mxu0 0.0
    %1186 = vmatpush1.xpose.msra.mxu0 0.0
    %1187 = vmatprep.subr.mxu0 0.0
    %1188 = vmatpush1.xpose.msra.mxu0 0.0
    %1189 = vmatprep.subr.mxu0 0.0
    %1190 = vmatpush1.xpose.msra.mxu0 0.0
    %1191 = vmatprep.subr.mxu0 0.0
    %1192 = vmatpush1.xpose.msra.mxu0 0.0
    %1193 = vmatprep.subr.mxu0 0.0
    %1194 = vmatpush1.xpose.msra.mxu0 0.0
    %1195 = vmatprep.subr.mxu0 0.0
    %1196 = vmatpush1.xpose.msra.mxu0 0.0
    %1197 = vmatprep.subr.mxu0 0.0
    %1198 = vmatpush1.xpose.msra.mxu0 0.0
    %1199 = vmatprep.subr.mxu0 0.0
    %1200 = vmatpush1.xpose.msra.mxu0 0.0
    %1201 = vmatprep.subr.mxu0 0.0
    %1202 = vmatpush1.xpose.msra.mxu0 0.0
    %1203 = vmatprep.subr.mxu0 0.0
    %1204 = vmatpush1.xpose.msra.mxu0 0.0
    %1205 = vmatprep.subr.mxu0 0.0
    %1206 = vmatpush1.xpose.msra.mxu0 0.0
    %1207 = vmatprep.subr.mxu0 0.0
    %1208 = vmatpush1.xpose.msra.mxu0 0.0
    %1209 = vmatprep.subr.mxu0 0.0
    %1210 = vmatpush1.xpose.msra.mxu0 0.0
    %1211 = vmatprep.subr.mxu0 0.0
    %1212 = vmatpush1.xpose.msra.mxu0 0.0
    %1213 = vmatprep.mubr.f32.mxu0 0.0
    %1214 = vmatmul.mubr.f32.gmra.mrb[0].mxu0 %v1141
    %v1215 = vpop.f32.mrb[0].mxu0
    %v1216 = vadd.f32 %v93, %v1215
    %v1217 = vpop.f32.mrb[0].mxu0
    %1218 = vmatprep.mubr.f32.mxu0 0.0
    %1219 = vmatmul.mubr.f32.gmra.mrb[0].mxu0 %v1143
    %v1220 = vpop.f32.mrb[0].mxu0
    %v1221 = vadd.f32 %v94, %v1220
    %v1222 = vpop.f32.mrb[0].mxu0
    %1223 = vdwg.mxu0
    %v1224 = vsel %vm378, %v1216, -inf
    %1225 = vmax.xlane.f32.xlu0 %v1224
    %v1226 = vpop.xlane.xlu0 %1225
    %v1227 = vsel %vm378, %v1221, -inf
    %1228 = vmax.xlane.f32.xlu0 %v1227
    %v1229 = vpop.xlane.xlu0 %1228
    %v1230 = vsub.f32 %v1216, %v1226
    %v1231 = vsub.f32 %v1221, %v1229
    %v1232 = vmul.f32 %v1230, 1.442695
    %v1233 = vpow.pop %v1232
    %v1234 = vmul.f32 %v1231, 1.442695
    %v1235 = vpow.pop %v1234
    %v1236 = vsel %vm378, %v1233, 0.0
    %1237 = vadd.xlane.f32.xlu0 %v1236
    %v1238 = vpop.xlane.xlu0 %1237
    %v1239 = vsel %vm378, %v1235, 0.0
    %1240 = vadd.xlane.f32.xlu0 %v1239
    %v1241 = vpop.xlane.xlu0 %1240
    %v1242 = vrcp.pop %v1238
    %v1243 = vmul.f32 %v1233, %v1242
    %v1244 = vrcp.pop %v1241
    %v1245 = vmul.f32 %v1235, %v1244
    %1246 = vrot.lane.b32.xlu0 %v282, 72
    %v1247 = vpop.permute.xlu0 %1246
    %1248 = vrot.lane.b32.xlu0 %v287, 72
    %v1249 = vpop.permute.xlu0 %1248
    %v1253 = vsel %vm378, %v1243, 0
    %v1256 = vsel %vm378, %v1245, 0
    %1258 = vmatprep.subr.mxu0 0.0
    %1259 = vmatpush1.msra.mxu0 %v1247
    %1260 = vmatprep.subr.mxu0 0.0
    %1261 = vmatpush1.msra.mxu0 %v1249
    %1262 = vmatprep.subr.mxu0 0.0
    %1263 = vmatpush1.msra.mxu0 0.0
    %1264 = vmatprep.subr.mxu0 0.0
    %1265 = vmatpush1.msra.mxu0 0.0
    %1266 = vmatprep.subr.mxu0 0.0
    %1267 = vmatpush1.msra.mxu0 0.0
    %1268 = vmatprep.subr.mxu0 0.0
    %1269 = vmatpush1.msra.mxu0 0.0
    %1270 = vmatprep.subr.mxu0 0.0
    %1271 = vmatpush1.msra.mxu0 0.0
    %1272 = vmatprep.subr.mxu0 0.0
    %1273 = vmatpush1.msra.mxu0 0.0
    %1274 = vmatprep.subr.mxu0 0.0
    %1275 = vmatpush1.msra.mxu0 0.0
    %1276 = vmatprep.subr.mxu0 0.0
    %1277 = vmatpush1.msra.mxu0 0.0
    %1278 = vmatprep.subr.mxu0 0.0
    %1279 = vmatpush1.msra.mxu0 0.0
    %1280 = vmatprep.subr.mxu0 0.0
    %1281 = vmatpush1.msra.mxu0 0.0
    %1282 = vmatprep.subr.mxu0 0.0
    %1283 = vmatpush1.msra.mxu0 0.0
    %1284 = vmatprep.subr.mxu0 0.0
    %1285 = vmatpush1.msra.mxu0 0.0
    %1286 = vmatprep.subr.mxu0 0.0
    %1287 = vmatpush1.msra.mxu0 0.0
    %1288 = vmatprep.subr.mxu0 0.0
    %1289 = vmatpush1.msra.mxu0 0.0
    %1290 = vmatprep.subr.mxu0 0.0
    %1291 = vmatpush1.msra.mxu0 0.0
    %1292 = vmatprep.subr.mxu0 0.0
    %1293 = vmatpush1.msra.mxu0 0.0
    %1294 = vmatprep.subr.mxu0 0.0
    %1295 = vmatpush1.msra.mxu0 0.0
    %1296 = vmatprep.subr.mxu0 0.0
    %1297 = vmatpush1.msra.mxu0 0.0
    %1298 = vmatprep.subr.mxu0 0.0
    %1299 = vmatpush1.msra.mxu0 0.0
    %1300 = vmatprep.subr.mxu0 0.0
    %1301 = vmatpush1.msra.mxu0 0.0
    %1302 = vmatprep.subr.mxu0 0.0
    %1303 = vmatpush1.msra.mxu0 0.0
    %1304 = vmatprep.subr.mxu0 0.0
    %1305 = vmatpush1.msra.mxu0 0.0
    %1306 = vmatprep.subr.mxu0 0.0
    %1307 = vmatpush1.msra.mxu0 0.0
    %1308 = vmatprep.subr.mxu0 0.0
    %1309 = vmatpush1.msra.mxu0 0.0
    %1310 = vmatprep.subr.mxu0 0.0
    %1311 = vmatpush1.msra.mxu0 0.0
    %1312 = vmatprep.subr.mxu0 0.0
    %1313 = vmatpush1.msra.mxu0 0.0
    %1314 = vmatprep.subr.mxu0 0.0
    %1315 = vmatpush1.msra.mxu0 0.0
    %1316 = vmatprep.subr.mxu0 0.0
    %1317 = vmatpush1.msra.mxu0 0.0
    %1318 = vmatprep.subr.mxu0 0.0
    %1319 = vmatpush1.msra.mxu0 0.0
    %1320 = vmatprep.subr.mxu0 0.0
    %1321 = vmatpush1.msra.mxu0 0.0
    %1322 = vmatprep.mubr.f32.mxu0 0.0
    %1323 = vmatmul.mubr.f32.gmra.mrb[0].mxu0 %v1253
    %v1324 = vpop.f32.mrb[0].mxu0
    %v1325 = vadd.f32 0.0, %v1324
    %v1326 = vpop.f32.mrb[0].mxu0
    %1327 = vmatprep.mubr.f32.mxu0 0.0
    %1328 = vmatmul.mubr.f32.gmra.mrb[0].mxu0 %v1256
    %v1329 = vpop.f32.mrb[0].mxu0
    %v1330 = vadd.f32 0.0, %v1329
    %v1331 = vpop.f32.mrb[0].mxu0
    %1332 = vdwg.mxu0
    %v1334 = vsel %vm290, %v1325, 0
    %v1337 = vsel %vm290, %v1330, 0
    %1339 = vmatprep.subr.mxu0 0.0
    %1340 = vmatpush1.msra.mxu0 %v98
    %1341 = vmatprep.subr.mxu0 0.0
    %1342 = vmatpush1.msra.mxu0 0.0
    %1343 = vmatprep.subr.mxu0 0.0
    %1344 = vmatpush1.msra.mxu0 0.0
    %1345 = vmatprep.subr.mxu0 0.0
    %1346 = vmatpush1.msra.mxu0 0.0
    %1347 = vmatprep.subr.mxu0 0.0
    %1348 = vmatpush1.msra.mxu0 0.0
    %1349 = vmatprep.subr.mxu0 0.0
    %1350 = vmatpush1.msra.mxu0 0.0
    %1351 = vmatprep.subr.mxu0 0.0
    %1352 = vmatpush1.msra.mxu0 0.0
    %1353 = vmatprep.subr.mxu0 0.0
    %1354 = vmatpush1.msra.mxu0 0.0
    %1355 = vmatprep.subr.mxu0 0.0
    %1356 = vmatpush1.msra.mxu0 0.0
    %1357 = vmatprep.subr.mxu0 0.0
    %1358 = vmatpush1.msra.mxu0 0.0
    %1359 = vmatprep.subr.mxu0 0.0
    %1360 = vmatpush1.msra.mxu0 0.0
    %1361 = vmatprep.subr.mxu0 0.0
    %1362 = vmatpush1.msra.mxu0 0.0
    %1363 = vmatprep.subr.mxu0 0.0
    %1364 = vmatpush1.msra.mxu0 0.0
    %1365 = vmatprep.subr.mxu0 0.0
    %1366 = vmatpush1.msra.mxu0 0.0
    %1367 = vmatprep.subr.mxu0 0.0
    %1368 = vmatpush1.msra.mxu0 0.0
    %1369 = vmatprep.subr.mxu0 0.0
    %1370 = vmatpush1.msra.mxu0 0.0
    %1371 = vmatprep.subr.mxu0 0.0
    %1372 = vmatpush1.msra.mxu0 0.0
    %1373 = vmatprep.subr.mxu0 0.0
    %1374 = vmatpush1.msra.mxu0 0.0
    %1375 = vmatprep.subr.mxu0 0.0
    %1376 = vmatpush1.msra.mxu0 0.0
    %1377 = vmatprep.subr.mxu0 0.0
    %1378 = vmatpush1.msra.mxu0 0.0
    %1379 = vmatprep.subr.mxu0 0.0
    %1380 = vmatpush1.msra.mxu0 0.0
    %1381 = vmatprep.subr.mxu0 0.0
    %1382 = vmatpush1.msra.mxu0 0.0
    %1383 = vmatprep.subr.mxu0 0.0
    %1384 = vmatpush1.msra.mxu0 0.0
    %1385 = vmatprep.subr.mxu0 0.0
    %1386 = vmatpush1.msra.mxu0 0.0
    %1387 = vmatprep.subr.mxu0 0.0
    %1388 = vmatpush1.msra.mxu0 0.0
    %1389 = vmatprep.subr.mxu0 0.0
    %1390 = vmatpush1.msra.mxu0 0.0
    %1391 = vmatprep.subr.mxu0 0.0
    %1392 = vmatpush1.msra.mxu0 0.0
    %1393 = vmatprep.subr.mxu0 0.0
    %1394 = vmatpush1.msra.mxu0 0.0
    %1395 = vmatprep.subr.mxu0 0.0
    %1396 = vmatpush1.msra.mxu0 0.0
    %1397 = vmatprep.subr.mxu0 0.0
    %1398 = vmatpush1.msra.mxu0 0.0
    %1399 = vmatprep.subr.mxu0 0.0
    %1400 = vmatpush1.msra.mxu0 0.0
    %1401 = vmatprep.subr.mxu0 0.0
    %1402 = vmatpush1.msra.mxu0 0.0
    %1403 = vmatprep.mubr.f32.mxu0 0.0
    %1404 = vmatmul.mubr.f32.gmra.mrb[0].mxu0 %v1334
    %v1405 = vpop.f32.mrb[0].mxu0
    %v1406 = vadd.f32 0.0, %v1405
    %v1407 = vpop.f32.mrb[0].mxu0
    %1408 = vmatprep.mubr.f32.mxu0 0.0
    %1409 = vmatmul.mubr.f32.gmra.mrb[0].mxu0 %v1337
    %v1410 = vpop.f32.mrb[0].mxu0
    %v1411 = vadd.f32 0.0, %v1410
    %v1412 = vpop.f32.mrb[0].mxu0
    %1413 = vdwg.mxu0
    %v1414 = vadd.f32 %v1131, %v1406
    %v1415 = vadd.f32 %v1132, %v1411
    %v1416 = vlaneseq
    %v1417 = vshrl.u32 %v1416, 7
    %v1418 = vsub.s32 3, %v1417
    %v1419 = vrot.slane %v81, %v1418
    %v1420 = vadd.f32 %v1414, %v1419
    %v1421 = vadd.f32 %v1415, %v1419
    %v1422 = vadd.f32 %v73, %v1420
    %v1423 = vadd.f32 %v74, %v1421
    %v1424 = vsel %vm107, %v1422, 0.0
    %1425 = vadd.xlane.f32.xlu0 %v1424
    %v1426 = vpop.xlane.xlu0 %1425
    %v1427 = vsel %vm107, %v1423, 0.0
    %1428 = vadd.xlane.f32.xlu0 %v1427
    %v1429 = vpop.xlane.xlu0 %1428
    %v1430 = vrcp.pop 32.0
    %v1431 = vmul.f32 %v1426, %v1430
    %v1432 = vmul.f32 %v1429, %v1430
    %v1433 = vsub.f32 %v1422, %v1431
    %v1434 = vsub.f32 %v1423, %v1432
    %v1435 = vmul.f32 %v1433, %v1433
    %v1436 = vmul.f32 %v1434, %v1434
    %v1437 = vsel %vm107, %v1435, 0.0
    %1438 = vadd.xlane.f32.xlu0 %v1437
    %v1439 = vpop.xlane.xlu0 %1438
    %v1440 = vsel %vm107, %v1436, 0.0
    %1441 = vadd.xlane.f32.xlu0 %v1440
    %v1442 = vpop.xlane.xlu0 %1441
    %v1443 = vmul.f32 %v1439, %v1430
    %v1444 = vmul.f32 %v1442, %v1430
    %v1445 = vadd.f32 %v1443, 1e-05
    %v1446 = vadd.f32 %v1444, 1e-05
    %v1447 = vrsqrt.pop %v1445
    %v1448 = vrsqrt.pop %v1446
    %v1449 = vmul.f32 %v1433, %v1447
    %v1450 = vmul.f32 %v1434, %v1448
    %v1451 = vlaneseq
    %v1452 = vshrl.u32 %v1451, 7
    %v1453 = vsub.s32 6, %v1452
    %v1454 = vrot.slane %v81, %v1453
    %v1455 = vmul.f32 %v1449, %v1454
    %v1456 = vmul.f32 %v1450, %v1454
    %v1457 = vlaneseq
    %v1458 = vshrl.u32 %v1457, 7
    %v1459 = vsub.s32 7, %v1458
    %v1460 = vrot.slane %v81, %v1459
    %v1461 = vadd.f32 %v1455, %v1460
    %v1462 = vadd.f32 %v1456, %v1460
    %v1463 = vld [vmem:[#allocation8 + $0x8] sm:$0xff]
    %v1464 = vld [vmem:[#allocation8 + $0x30] sm:$0xff]
    %v1465 = vld [vmem:[#allocation8 + $0x58] sm:$0xff]
    %v1466 = vld [vmem:[#allocation8 + $0x80] sm:$0xff]
    %v1467 = vlaneseq
    %v1468 = vshrl.u32 %v1467, 7
    %v1469 = vsub.s32 1, %v1468
    %v1470 = vrot.slane %v81, %v1469
    %v1472 = vsel %vm107, %v1461, 0
    %v1475 = vsel %vm107, %v1462, 0
    %1477 = vmatprep.subr.mxu0 0.0
    %1478 = vmatpush1.msra.mxu0 %v1463
    %1479 = vmatprep.subr.mxu0 0.0
    %1480 = vmatpush1.msra.mxu0 %v1464
    %1481 = vmatprep.subr.mxu0 0.0
    %1482 = vmatpush1.msra.mxu0 %v1465
    %1483 = vmatprep.subr.mxu0 0.0
    %1484 = vmatpush1.msra.mxu0 %v1466
    %1485 = vmatprep.subr.mxu0 0.0
    %1486 = vmatpush1.msra.mxu0 0.0
    %1487 = vmatprep.subr.mxu0 0.0
    %1488 = vmatpush1.msra.mxu0 0.0
    %1489 = vmatprep.subr.mxu0 0.0
    %1490 = vmatpush1.msra.mxu0 0.0
    %1491 = vmatprep.subr.mxu0 0.0
    %1492 = vmatpush1.msra.mxu0 0.0
    %1493 = vmatprep.subr.mxu0 0.0
    %1494 = vmatpush1.msra.mxu0 0.0
    %1495 = vmatprep.subr.mxu0 0.0
    %1496 = vmatpush1.msra.mxu0 0.0
    %1497 = vmatprep.subr.mxu0 0.0
    %1498 = vmatpush1.msra.mxu0 0.0
    %1499 = vmatprep.subr.mxu0 0.0
    %1500 = vmatpush1.msra.mxu0 0.0
    %1501 = vmatprep.subr.mxu0 0.0
    %1502 = vmatpush1.msra.mxu0 0.0
    %1503 = vmatprep.subr.mxu0 0.0
    %1504 = vmatpush1.msra.mxu0 0.0
    %1505 = vmatprep.subr.mxu0 0.0
    %1506 = vmatpush1.msra.mxu0 0.0
    %1507 = vmatprep.subr.mxu0 0.0
    %1508 = vmatpush1.msra.mxu0 0.0
    %1509 = vmatprep.subr.mxu0 0.0
    %1510 = vmatpush1.msra.mxu0 0.0
    %1511 = vmatprep.subr.mxu0 0.0
    %1512 = vmatpush1.msra.mxu0 0.0
    %1513 = vmatprep.subr.mxu0 0.0
    %1514 = vmatpush1.msra.mxu0 0.0
    %1515 = vmatprep.subr.mxu0 0.0
    %1516 = vmatpush1.msra.mxu0 0.0
    %1517 = vmatprep.subr.mxu0 0.0
    %1518 = vmatpush1.msra.mxu0 0.0
    %1519 = vmatprep.subr.mxu0 0.0
    %1520 = vmatpush1.msra.mxu0 0.0
    %1521 = vmatprep.subr.mxu0 0.0
    %1522 = vmatpush1.msra.mxu0 0.0
    %1523 = vmatprep.subr.mxu0 0.0
    %1524 = vmatpush1.msra.mxu0 0.0
    %1525 = vmatprep.subr.mxu0 0.0
    %1526 = vmatpush1.msra.mxu0 0.0
    %1527 = vmatprep.subr.mxu0 0.0
    %1528 = vmatpush1.msra.mxu0 0.0
    %1529 = vmatprep.subr.mxu0 0.0
    %1530 = vmatpush1.msra.mxu0 0.0
    %1531 = vmatprep.subr.mxu0 0.0
    %1532 = vmatpush1.msra.mxu0 0.0
    %1533 = vmatprep.subr.mxu0 0.0
    %1534 = vmatpush1.msra.mxu0 0.0
    %1535 = vmatprep.subr.mxu0 0.0
    %1536 = vmatpush1.msra.mxu0 0.0
    %1537 = vmatprep.subr.mxu0 0.0
    %1538 = vmatpush1.msra.mxu0 0.0
    %1539 = vmatprep.subr.mxu0 0.0
    %1540 = vmatpush1.msra.mxu0 0.0
    %1541 = vmatprep.mubr.f32.mxu0 0.0
    %1542 = vmatmul.mubr.f32.gmra.mrb[0].mxu0 %v1472
    %v1543 = vpop.f32.mrb[0].mxu0
    %v1544 = vadd.f32 %v1470, %v1543
    %v1545 = vpop.f32.mrb[0].mxu0
    %1546 = vmatprep.mubr.f32.mxu0 0.0
    %1547 = vmatmul.mubr.f32.gmra.mrb[0].mxu0 %v1475
    %v1548 = vpop.f32.mrb[0].mxu0
    %v1549 = vadd.f32 %v1470, %v1548
    %v1550 = vpop.f32.mrb[0].mxu0
    %1551 = vdwg.mxu0
    %1554 = vrot.lane.b32.xlu0 %v1544, 96
    %v1555 = vpop.permute.xlu0 %1554
    %1556 = vrot.lane.b32.xlu0 %v1549, 96
    %v1557 = vpop.permute.xlu0 %1556
    %v1558 = vsel %vm290, %v1544, 0
    %v1560 = vsel %vm290, %v1549, 0
    %v1562 = vsel %vm290, %v1555, 0
    %v1564 = vsel %vm290, %v1557, 0
    %1566 = vmatprep.subr.mxu0 0.0
    %1567 = vmatpush1.xpose.msra.mxu0 %v1562
    %1568 = vmatprep.subr.mxu0 0.0
    %1569 = vmatpush1.xpose.msra.mxu0 %v1564
    %1570 = vmatprep.subr.mxu0 0.0
    %1571 = vmatpush1.xpose.msra.mxu0 0.0
    %1572 = vmatprep.subr.mxu0 0.0
    %1573 = vmatpush1.xpose.msra.mxu0 0.0
    %1574 = vmatprep.subr.mxu0 0.0
    %1575 = vmatpush1.xpose.msra.mxu0 0.0
    %1576 = vmatprep.subr.mxu0 0.0
    %1577 = vmatpush1.xpose.msra.mxu0 0.0
    %1578 = vmatprep.subr.mxu0 0.0
    %1579 = vmatpush1.xpose.msra.mxu0 0.0
    %1580 = vmatprep.subr.mxu0 0.0
    %1581 = vmatpush1.xpose.msra.mxu0 0.0
    %1582 = vmatprep.subr.mxu0 0.0
    %1583 = vmatpush1.xpose.msra.mxu0 0.0
    %1584 = vmatprep.subr.mxu0 0.0
    %1585 = vmatpush1.xpose.msra.mxu0 0.0
    %1586 = vmatprep.subr.mxu0 0.0
    %1587 = vmatpush1.xpose.msra.mxu0 0.0
    %1588 = vmatprep.subr.mxu0 0.0
    %1589 = vmatpush1.xpose.msra.mxu0 0.0
    %1590 = vmatprep.subr.mxu0 0.0
    %1591 = vmatpush1.xpose.msra.mxu0 0.0
    %1592 = vmatprep.subr.mxu0 0.0
    %1593 = vmatpush1.xpose.msra.mxu0 0.0
    %1594 = vmatprep.subr.mxu0 0.0
    %1595 = vmatpush1.xpose.msra.mxu0 0.0
    %1596 = vmatprep.subr.mxu0 0.0
    %1597 = vmatpush1.xpose.msra.mxu0 0.0
    %1598 = vmatprep.subr.mxu0 0.0
    %1599 = vmatpush1.xpose.msra.mxu0 0.0
    %1600 = vmatprep.subr.mxu0 0.0
    %1601 = vmatpush1.xpose.msra.mxu0 0.0
    %1602 = vmatprep.subr.mxu0 0.0
    %1603 = vmatpush1.xpose.msra.mxu0 0.0
    %1604 = vmatprep.subr.mxu0 0.0
    %1605 = vmatpush1.xpose.msra.mxu0 0.0
    %1606 = vmatprep.subr.mxu0 0.0
    %1607 = vmatpush1.xpose.msra.mxu0 0.0
    %1608 = vmatprep.subr.mxu0 0.0
    %1609 = vmatpush1.xpose.msra.mxu0 0.0
    %1610 = vmatprep.subr.mxu0 0.0
    %1611 = vmatpush1.xpose.msra.mxu0 0.0
    %1612 = vmatprep.subr.mxu0 0.0
    %1613 = vmatpush1.xpose.msra.mxu0 0.0
    %1614 = vmatprep.subr.mxu0 0.0
    %1615 = vmatpush1.xpose.msra.mxu0 0.0
    %1616 = vmatprep.subr.mxu0 0.0
    %1617 = vmatpush1.xpose.msra.mxu0 0.0
    %1618 = vmatprep.subr.mxu0 0.0
    %1619 = vmatpush1.xpose.msra.mxu0 0.0
    %1620 = vmatprep.subr.mxu0 0.0
    %1621 = vmatpush1.xpose.msra.mxu0 0.0
    %1622 = vmatprep.subr.mxu0 0.0
    %1623 = vmatpush1.xpose.msra.mxu0 0.0
    %1624 = vmatprep.subr.mxu0 0.0
    %1625 = vmatpush1.xpose.msra.mxu0 0.0
    %1626 = vmatprep.subr.mxu0 0.0
    %1627 = vmatpush1.xpose.msra.mxu0 0.0
    %1628 = vmatprep.subr.mxu0 0.0
    %1629 = vmatpush1.xpose.msra.mxu0 0.0
    %1630 = vmatprep.mubr.f32.mxu0 0.0
    %1631 = vmatmul.mubr.f32.gmra.mrb[0].mxu0 %v1558
    %v1632 = vpop.f32.mrb[0].mxu0
    %v1633 = vadd.f32 %v93, %v1632
    %v1634 = vpop.f32.mrb[0].mxu0
    %1635 = vmatprep.mubr.f32.mxu0 0.0
    %1636 = vmatmul.mubr.f32.gmra.mrb[0].mxu0 %v1560
    %v1637 = vpop.f32.mrb[0].mxu0
    %v1638 = vadd.f32 %v94, %v1637
    %v1639 = vpop.f32.mrb[0].mxu0
    %1640 = vdwg.mxu0
    %v1641 = vsel %vm378, %v1633, -inf
    %1642 = vmax.xlane.f32.xlu0 %v1641
    %v1643 = vpop.xlane.xlu0 %1642
    %v1644 = vsel %vm378, %v1638, -inf
    %1645 = vmax.xlane.f32.xlu0 %v1644
    %v1646 = vpop.xlane.xlu0 %1645
    %v1647 = vsub.f32 %v1633, %v1643
    %v1648 = vsub.f32 %v1638, %v1646
    %v1649 = vmul.f32 %v1647, 1.442695
    %v1650 = vpow.pop %v1649
    %v1651 = vmul.f32 %v1648, 1.442695
    %v1652 = vpow.pop %v1651
    %v1653 = vsel %vm378, %v1650, 0.0
    %1654 = vadd.xlane.f32.xlu0 %v1653
    %v1655 = vpop.xlane.xlu0 %1654
    %v1656 = vsel %vm378, %v1652, 0.0
    %1657 = vadd.xlane.f32.xlu0 %v1656
    %v1658 = vpop.xlane.xlu0 %1657
    %v1659 = vrcp.pop %v1655
    %v1660 = vmul.f32 %v1650, %v1659
    %v1661 = vrcp.pop %v1658
    %v1662 = vmul.f32 %v1652, %v1661
    %1663 = vrot.lane.b32.xlu0 %v1544, 64
    %v1664 = vpop.permute.xlu0 %1663
    %1665 = vrot.lane.b32.xlu0 %v1549, 64
    %v1666 = vpop.permute.xlu0 %1665
    %v1670 = vsel %vm378, %v1660, 0
    %v1673 = vsel %vm378, %v1662, 0
    %1675 = vmatprep.subr.mxu0 0.0
    %1676 = vmatpush1.msra.mxu0 %v1664
    %1677 = vmatprep.subr.mxu0 0.0
    %1678 = vmatpush1.msra.mxu0 %v1666
    %1679 = vmatprep.subr.mxu0 0.0
    %1680 = vmatpush1.msra.mxu0 0.0
    %1681 = vmatprep.subr.mxu0 0.0
    %1682 = vmatpush1.msra.mxu0 0.0
    %1683 = vmatprep.subr.mxu0 0.0
    %1684 = vmatpush1.msra.mxu0 0.0
    %1685 = vmatprep.subr.mxu0 0.0
    %1686 = vmatpush1.msra.mxu0 0.0
    %1687 = vmatprep.subr.mxu0 0.0
    %1688 = vmatpush1.msra.mxu0 0.0
    %1689 = vmatprep.subr.mxu0 0.0
    %1690 = vmatpush1.msra.mxu0 0.0
    %1691 = vmatprep.subr.mxu0 0.0
    %1692 = vmatpush1.msra.mxu0 0.0
    %1693 = vmatprep.subr.mxu0 0.0
    %1694 = vmatpush1.msra.mxu0 0.0
    %1695 = vmatprep.subr.mxu0 0.0
    %1696 = vmatpush1.msra.mxu0 0.0
    %1697 = vmatprep.subr.mxu0 0.0
    %1698 = vmatpush1.msra.mxu0 0.0
    %1699 = vmatprep.subr.mxu0 0.0
    %1700 = vmatpush1.msra.mxu0 0.0
    %1701 = vmatprep.subr.mxu0 0.0
    %1702 = vmatpush1.msra.mxu0 0.0
    %1703 = vmatprep.subr.mxu0 0.0
    %1704 = vmatpush1.msra.mxu0 0.0
    %1705 = vmatprep.subr.mxu0 0.0
    %1706 = vmatpush1.msra.mxu0 0.0
    %1707 = vmatprep.subr.mxu0 0.0
    %1708 = vmatpush1.msra.mxu0 0.0
    %1709 = vmatprep.subr.mxu0 0.0
    %1710 = vmatpush1.msra.mxu0 0.0
    %1711 = vmatprep.subr.mxu0 0.0
    %1712 = vmatpush1.msra.mxu0 0.0
    %1713 = vmatprep.subr.mxu0 0.0
    %1714 = vmatpush1.msra.mxu0 0.0
    %1715 = vmatprep.subr.mxu0 0.0
    %1716 = vmatpush1.msra.mxu0 0.0
    %1717 = vmatprep.subr.mxu0 0.0
    %1718 = vmatpush1.msra.mxu0 0.0
    %1719 = vmatprep.subr.mxu0 0.0
    %1720 = vmatpush1.msra.mxu0 0.0
    %1721 = vmatprep.subr.mxu0 0.0
    %1722 = vmatpush1.msra.mxu0 0.0
    %1723 = vmatprep.subr.mxu0 0.0
    %1724 = vmatpush1.msra.mxu0 0.0
    %1725 = vmatprep.subr.mxu0 0.0
    %1726 = vmatpush1.msra.mxu0 0.0
    %1727 = vmatprep.subr.mxu0 0.0
    %1728 = vmatpush1.msra.mxu0 0.0
    %1729 = vmatprep.subr.mxu0 0.0
    %1730 = vmatpush1.msra.mxu0 0.0
    %1731 = vmatprep.subr.mxu0 0.0
    %1732 = vmatpush1.msra.mxu0 0.0
    %1733 = vmatprep.subr.mxu0 0.0
    %1734 = vmatpush1.msra.mxu0 0.0
    %1735 = vmatprep.subr.mxu0 0.0
    %1736 = vmatpush1.msra.mxu0 0.0
    %1737 = vmatprep.subr.mxu0 0.0
    %1738 = vmatpush1.msra.mxu0 0.0
    %1739 = vmatprep.mubr.f32.mxu0 0.0
    %1740 = vmatmul.mubr.f32.gmra.mrb[0].mxu0 %v1670
    %v1741 = vpop.f32.mrb[0].mxu0
    %v1742 = vadd.f32 0.0, %v1741
    %v1743 = vpop.f32.mrb[0].mxu0
    %1744 = vmatprep.mubr.f32.mxu0 0.0
    %1745 = vmatmul.mubr.f32.gmra.mrb[0].mxu0 %v1673
    %v1746 = vpop.f32.mrb[0].mxu0
    %v1747 = vadd.f32 0.0, %v1746
    %v1748 = vpop.f32.mrb[0].mxu0
    %1749 = vdwg.mxu0
    %1750 = vrot.lane.b32.xlu0 %v1544, 120
    %v1751 = vpop.permute.xlu0 %1750
    %1752 = vrot.lane.b32.xlu0 %v1549, 120
    %v1753 = vpop.permute.xlu0 %1752
    %1754 = vrot.lane.b32.xlu0 %v1544, 88
    %v1755 = vpop.permute.xlu0 %1754
    %1756 = vrot.lane.b32.xlu0 %v1549, 88
    %v1757 = vpop.permute.xlu0 %1756
    %v1758 = vsel %vm290, %v1751, 0
    %v1760 = vsel %vm290, %v1753, 0
    %v1762 = vsel %vm290, %v1755, 0
    %v1764 = vsel %vm290, %v1757, 0
    %1766 = vmatprep.subr.mxu0 0.0
    %1767 = vmatpush1.xpose.msra.mxu0 %v1762
    %1768 = vmatprep.subr.mxu0 0.0
    %1769 = vmatpush1.xpose.msra.mxu0 %v1764
    %1770 = vmatprep.subr.mxu0 0.0
    %1771 = vmatpush1.xpose.msra.mxu0 0.0
    %1772 = vmatprep.subr.mxu0 0.0
    %1773 = vmatpush1.xpose.msra.mxu0 0.0
    %1774 = vmatprep.subr.mxu0 0.0
    %1775 = vmatpush1.xpose.msra.mxu0 0.0
    %1776 = vmatprep.subr.mxu0 0.0
    %1777 = vmatpush1.xpose.msra.mxu0 0.0
    %1778 = vmatprep.subr.mxu0 0.0
    %1779 = vmatpush1.xpose.msra.mxu0 0.0
    %1780 = vmatprep.subr.mxu0 0.0
    %1781 = vmatpush1.xpose.msra.mxu0 0.0
    %1782 = vmatprep.subr.mxu0 0.0
    %1783 = vmatpush1.xpose.msra.mxu0 0.0
    %1784 = vmatprep.subr.mxu0 0.0
    %1785 = vmatpush1.xpose.msra.mxu0 0.0
    %1786 = vmatprep.subr.mxu0 0.0
    %1787 = vmatpush1.xpose.msra.mxu0 0.0
    %1788 = vmatprep.subr.mxu0 0.0
    %1789 = vmatpush1.xpose.msra.mxu0 0.0
    %1790 = vmatprep.subr.mxu0 0.0
    %1791 = vmatpush1.xpose.msra.mxu0 0.0
    %1792 = vmatprep.subr.mxu0 0.0
    %1793 = vmatpush1.xpose.msra.mxu0 0.0
    %1794 = vmatprep.subr.mxu0 0.0
    %1795 = vmatpush1.xpose.msra.mxu0 0.0
    %1796 = vmatprep.subr.mxu0 0.0
    %1797 = vmatpush1.xpose.msra.mxu0 0.0
    %1798 = vmatprep.subr.mxu0 0.0
    %1799 = vmatpush1.xpose.msra.mxu0 0.0
    %1800 = vmatprep.subr.mxu0 0.0
    %1801 = vmatpush1.xpose.msra.mxu0 0.0
    %1802 = vmatprep.subr.mxu0 0.0
    %1803 = vmatpush1.xpose.msra.mxu0 0.0
    %1804 = vmatprep.subr.mxu0 0.0
    %1805 = vmatpush1.xpose.msra.mxu0 0.0
    %1806 = vmatprep.subr.mxu0 0.0
    %1807 = vmatpush1.xpose.msra.mxu0 0.0
    %1808 = vmatprep.subr.mxu0 0.0
    %1809 = vmatpush1.xpose.msra.mxu0 0.0
    %1810 = vmatprep.subr.mxu0 0.0
    %1811 = vmatpush1.xpose.msra.mxu0 0.0
    %1812 = vmatprep.subr.mxu0 0.0
    %1813 = vmatpush1.xpose.msra.mxu0 0.0
    %1814 = vmatprep.subr.mxu0 0.0
    %1815 = vmatpush1.xpose.msra.mxu0 0.0
    %1816 = vmatprep.subr.mxu0 0.0
    %1817 = vmatpush1.xpose.msra.mxu0 0.0
    %1818 = vmatprep.subr.mxu0 0.0
    %1819 = vmatpush1.xpose.msra.mxu0 0.0
    %1820 = vmatprep.subr.mxu0 0.0
    %1821 = vmatpush1.xpose.msra.mxu0 0.0
    %1822 = vmatprep.subr.mxu0 0.0
    %1823 = vmatpush1.xpose.msra.mxu0 0.0
    %1824 = vmatprep.subr.mxu0 0.0
    %1825 = vmatpush1.xpose.msra.mxu0 0.0
    %1826 = vmatprep.subr.mxu0 0.0
    %1827 = vmatpush1.xpose.msra.mxu0 0.0
    %1828 = vmatprep.subr.mxu0 0.0
    %1829 = vmatpush1.xpose.msra.mxu0 0.0
    %1830 = vmatprep.mubr.f32.mxu0 0.0
    %1831 = vmatmul.mubr.f32.gmra.mrb[0].mxu0 %v1758
    %v1832 = vpop.f32.mrb[0].mxu0
    %v1833 = vadd.f32 %v93, %v1832
    %v1834 = vpop.f32.mrb[0].mxu0
    %1835 = vmatprep.mubr.f32.mxu0 0.0
    %1836 = vmatmul.mubr.f32.gmra.mrb[0].mxu0 %v1760
    %v1837 = vpop.f32.mrb[0].mxu0
    %v1838 = vadd.f32 %v94, %v1837
    %v1839 = vpop.f32.mrb[0].mxu0
    %1840 = vdwg.mxu0
    %v1841 = vsel %vm378, %v1833, -inf
    %1842 = vmax.xlane.f32.xlu0 %v1841
    %v1843 = vpop.xlane.xlu0 %1842
    %v1844 = vsel %vm378, %v1838, -inf
    %1845 = vmax.xlane.f32.xlu0 %v1844
    %v1846 = vpop.xlane.xlu0 %1845
    %v1847 = vsub.f32 %v1833, %v1843
    %v1848 = vsub.f32 %v1838, %v1846
    %v1849 = vmul.f32 %v1847, 1.442695
    %v1850 = vpow.pop %v1849
    %v1851 = vmul.f32 %v1848, 1.442695
    %v1852 = vpow.pop %v1851
    %v1853 = vsel %vm378, %v1850, 0.0
    %1854 = vadd.xlane.f32.xlu0 %v1853
    %v1855 = vpop.xlane.xlu0 %1854
    %v1856 = vsel %vm378, %v1852, 0.0
    %1857 = vadd.xlane.f32.xlu0 %v1856
    %v1858 = vpop.xlane.xlu0 %1857
    %v1859 = vrcp.pop %v1855
    %v1860 = vmul.f32 %v1850, %v1859
    %v1861 = vrcp.pop %v1858
    %v1862 = vmul.f32 %v1852, %v1861
    %1863 = vrot.lane.b32.xlu0 %v1544, 56
    %v1864 = vpop.permute.xlu0 %1863
    %1865 = vrot.lane.b32.xlu0 %v1549, 56
    %v1866 = vpop.permute.xlu0 %1865
    %v1870 = vsel %vm378, %v1860, 0
    %v1873 = vsel %vm378, %v1862, 0
    %1875 = vmatprep.subr.mxu0 0.0
    %1876 = vmatpush1.msra.mxu0 %v1864
    %1877 = vmatprep.subr.mxu0 0.0
    %1878 = vmatpush1.msra.mxu0 %v1866
    %1879 = vmatprep.subr.mxu0 0.0
    %1880 = vmatpush1.msra.mxu0 0.0
    %1881 = vmatprep.subr.mxu0 0.0
    %1882 = vmatpush1.msra.mxu0 0.0
    %1883 = vmatprep.subr.mxu0 0.0
    %1884 = vmatpush1.msra.mxu0 0.0
    %1885 = vmatprep.subr.mxu0 0.0
    %1886 = vmatpush1.msra.mxu0 0.0
    %1887 = vmatprep.subr.mxu0 0.0
    %1888 = vmatpush1.msra.mxu0 0.0
    %1889 = vmatprep.subr.mxu0 0.0
    %1890 = vmatpush1.msra.mxu0 0.0
    %1891 = vmatprep.subr.mxu0 0.0
    %1892 = vmatpush1.msra.mxu0 0.0
    %1893 = vmatprep.subr.mxu0 0.0
    %1894 = vmatpush1.msra.mxu0 0.0
    %1895 = vmatprep.subr.mxu0 0.0
    %1896 = vmatpush1.msra.mxu0 0.0
    %1897 = vmatprep.subr.mxu0 0.0
    %1898 = vmatpush1.msra.mxu0 0.0
    %1899 = vmatprep.subr.mxu0 0.0
    %1900 = vmatpush1.msra.mxu0 0.0
    %1901 = vmatprep.subr.mxu0 0.0
    %1902 = vmatpush1.msra.mxu0 0.0
    %1903 = vmatprep.subr.mxu0 0.0
    %1904 = vmatpush1.msra.mxu0 0.0
    %1905 = vmatprep.subr.mxu0 0.0
    %1906 = vmatpush1.msra.mxu0 0.0
    %1907 = vmatprep.subr.mxu0 0.0
    %1908 = vmatpush1.msra.mxu0 0.0
    %1909 = vmatprep.subr.mxu0 0.0
    %1910 = vmatpush1.msra.mxu0 0.0
    %1911 = vmatprep.subr.mxu0 0.0
    %1912 = vmatpush1.msra.mxu0 0.0
    %1913 = vmatprep.subr.mxu0 0.0
    %1914 = vmatpush1.msra.mxu0 0.0
    %1915 = vmatprep.subr.mxu0 0.0
    %1916 = vmatpush1.msra.mxu0 0.0
    %1917 = vmatprep.subr.mxu0 0.0
    %1918 = vmatpush1.msra.mxu0 0.0
    %1919 = vmatprep.subr.mxu0 0.0
    %1920 = vmatpush1.msra.mxu0 0.0
    %1921 = vmatprep.subr.mxu0 0.0
    %1922 = vmatpush1.msra.mxu0 0.0
    %1923 = vmatprep.subr.mxu0 0.0
    %1924 = vmatpush1.msra.mxu0 0.0
    %1925 = vmatprep.subr.mxu0 0.0
    %1926 = vmatpush1.msra.mxu0 0.0
    %1927 = vmatprep.subr.mxu0 0.0
    %1928 = vmatpush1.msra.mxu0 0.0
    %1929 = vmatprep.subr.mxu0 0.0
    %1930 = vmatpush1.msra.mxu0 0.0
    %1931 = vmatprep.subr.mxu0 0.0
    %1932 = vmatpush1.msra.mxu0 0.0
    %1933 = vmatprep.subr.mxu0 0.0
    %1934 = vmatpush1.msra.mxu0 0.0
    %1935 = vmatprep.subr.mxu0 0.0
    %1936 = vmatpush1.msra.mxu0 0.0
    %1937 = vmatprep.subr.mxu0 0.0
    %1938 = vmatpush1.msra.mxu0 0.0
    %1939 = vmatprep.mubr.f32.mxu0 0.0
    %1940 = vmatmul.mubr.f32.gmra.mrb[0].mxu0 %v1870
    %v1941 = vpop.f32.mrb[0].mxu0
    %v1942 = vadd.f32 0.0, %v1941
    %v1943 = vpop.f32.mrb[0].mxu0
    %1944 = vmatprep.mubr.f32.mxu0 0.0
    %1945 = vmatmul.mubr.f32.gmra.mrb[0].mxu0 %v1873
    %v1946 = vpop.f32.mrb[0].mxu0
    %v1947 = vadd.f32 0.0, %v1946
    %v1948 = vpop.f32.mrb[0].mxu0
    %1949 = vdwg.mxu0
    %1951 = vrot.lane.b32.xlu0 %v96, 96
    %v1952 = vpop.permute.xlu0 %1951
    %v1955 = vsel %vm290, %v1942, 0
    %v1958 = vsel %vm290, %v1947, 0
    %1960 = vmatprep.subr.mxu0 0.0
    %1961 = vmatpush1.msra.mxu0 %v1952
    %1962 = vmatprep.subr.mxu0 0.0
    %1963 = vmatpush1.msra.mxu0 0.0
    %1964 = vmatprep.subr.mxu0 0.0
    %1965 = vmatpush1.msra.mxu0 0.0
    %1966 = vmatprep.subr.mxu0 0.0
    %1967 = vmatpush1.msra.mxu0 0.0
    %1968 = vmatprep.subr.mxu0 0.0
    %1969 = vmatpush1.msra.mxu0 0.0
    %1970 = vmatprep.subr.mxu0 0.0
    %1971 = vmatpush1.msra.mxu0 0.0
    %1972 = vmatprep.subr.mxu0 0.0
    %1973 = vmatpush1.msra.mxu0 0.0
    %1974 = vmatprep.subr.mxu0 0.0
    %1975 = vmatpush1.msra.mxu0 0.0
    %1976 = vmatprep.subr.mxu0 0.0
    %1977 = vmatpush1.msra.mxu0 0.0
    %1978 = vmatprep.subr.mxu0 0.0
    %1979 = vmatpush1.msra.mxu0 0.0
    %1980 = vmatprep.subr.mxu0 0.0
    %1981 = vmatpush1.msra.mxu0 0.0
    %1982 = vmatprep.subr.mxu0 0.0
    %1983 = vmatpush1.msra.mxu0 0.0
    %1984 = vmatprep.subr.mxu0 0.0
    %1985 = vmatpush1.msra.mxu0 0.0
    %1986 = vmatprep.subr.mxu0 0.0
    %1987 = vmatpush1.msra.mxu0 0.0
    %1988 = vmatprep.subr.mxu0 0.0
    %1989 = vmatpush1.msra.mxu0 0.0
    %1990 = vmatprep.subr.mxu0 0.0
    %1991 = vmatpush1.msra.mxu0 0.0
    %1992 = vmatprep.subr.mxu0 0.0
    %1993 = vmatpush1.msra.mxu0 0.0
    %1994 = vmatprep.subr.mxu0 0.0
    %1995 = vmatpush1.msra.mxu0 0.0
    %1996 = vmatprep.subr.mxu0 0.0
    %1997 = vmatpush1.msra.mxu0 0.0
    %1998 = vmatprep.subr.mxu0 0.0
    %1999 = vmatpush1.msra.mxu0 0.0
    %2000 = vmatprep.subr.mxu0 0.0
    %2001 = vmatpush1.msra.mxu0 0.0
    %2002 = vmatprep.subr.mxu0 0.0
    %2003 = vmatpush1.msra.mxu0 0.0
    %2004 = vmatprep.subr.mxu0 0.0
    %2005 = vmatpush1.msra.mxu0 0.0
    %2006 = vmatprep.subr.mxu0 0.0
    %2007 = vmatpush1.msra.mxu0 0.0
    %2008 = vmatprep.subr.mxu0 0.0
    %2009 = vmatpush1.msra.mxu0 0.0
    %2010 = vmatprep.subr.mxu0 0.0
    %2011 = vmatpush1.msra.mxu0 0.0
    %2012 = vmatprep.subr.mxu0 0.0
    %2013 = vmatpush1.msra.mxu0 0.0
    %2014 = vmatprep.subr.mxu0 0.0
    %2015 = vmatpush1.msra.mxu0 0.0
    %2016 = vmatprep.subr.mxu0 0.0
    %2017 = vmatpush1.msra.mxu0 0.0
    %2018 = vmatprep.subr.mxu0 0.0
    %2019 = vmatpush1.msra.mxu0 0.0
    %2020 = vmatprep.subr.mxu0 0.0
    %2021 = vmatpush1.msra.mxu0 0.0
    %2022 = vmatprep.subr.mxu0 0.0
    %2023 = vmatpush1.msra.mxu0 0.0
    %2024 = vmatprep.mubr.f32.mxu0 0.0
    %2025 = vmatmul.mubr.f32.gmra.mrb[0].mxu0 %v1955
    %v2026 = vpop.f32.mrb[0].mxu0
    %v2027 = vadd.f32 0.0, %v2026
    %v2028 = vpop.f32.mrb[0].mxu0
    %2029 = vmatprep.mubr.f32.mxu0 0.0
    %2030 = vmatmul.mubr.f32.gmra.mrb[0].mxu0 %v1958
    %v2031 = vpop.f32.mrb[0].mxu0
    %v2032 = vadd.f32 0.0, %v2031
    %v2033 = vpop.f32.mrb[0].mxu0
    %2034 = vdwg.mxu0
    %2036 = vrot.lane.b32.xlu0 %v95, 96
    %v2037 = vpop.permute.xlu0 %2036
    %v2040 = vsel %vm290, %v1742, 0
    %v2043 = vsel %vm290, %v1747, 0
    %2045 = vmatprep.subr.mxu0 0.0
    %2046 = vmatpush1.msra.mxu0 %v2037
    %2047 = vmatprep.subr.mxu0 0.0
    %2048 = vmatpush1.msra.mxu0 0.0
    %2049 = vmatprep.subr.mxu0 0.0
    %2050 = vmatpush1.msra.mxu0 0.0
    %2051 = vmatprep.subr.mxu0 0.0
    %2052 = vmatpush1.msra.mxu0 0.0
    %2053 = vmatprep.subr.mxu0 0.0
    %2054 = vmatpush1.msra.mxu0 0.0
    %2055 = vmatprep.subr.mxu0 0.0
    %2056 = vmatpush1.msra.mxu0 0.0
    %2057 = vmatprep.subr.mxu0 0.0
    %2058 = vmatpush1.msra.mxu0 0.0
    %2059 = vmatprep.subr.mxu0 0.0
    %2060 = vmatpush1.msra.mxu0 0.0
    %2061 = vmatprep.subr.mxu0 0.0
    %2062 = vmatpush1.msra.mxu0 0.0
    %2063 = vmatprep.subr.mxu0 0.0
    %2064 = vmatpush1.msra.mxu0 0.0
    %2065 = vmatprep.subr.mxu0 0.0
    %2066 = vmatpush1.msra.mxu0 0.0
    %2067 = vmatprep.subr.mxu0 0.0
    %2068 = vmatpush1.msra.mxu0 0.0
    %2069 = vmatprep.subr.mxu0 0.0
    %2070 = vmatpush1.msra.mxu0 0.0
    %2071 = vmatprep.subr.mxu0 0.0
    %2072 = vmatpush1.msra.mxu0 0.0
    %2073 = vmatprep.subr.mxu0 0.0
    %2074 = vmatpush1.msra.mxu0 0.0
    %2075 = vmatprep.subr.mxu0 0.0
    %2076 = vmatpush1.msra.mxu0 0.0
    %2077 = vmatprep.subr.mxu0 0.0
    %2078 = vmatpush1.msra.mxu0 0.0
    %2079 = vmatprep.subr.mxu0 0.0
    %2080 = vmatpush1.msra.mxu0 0.0
    %2081 = vmatprep.subr.mxu0 0.0
    %2082 = vmatpush1.msra.mxu0 0.0
    %2083 = vmatprep.subr.mxu0 0.0
    %2084 = vmatpush1.msra.mxu0 0.0
    %2085 = vmatprep.subr.mxu0 0.0
    %2086 = vmatpush1.msra.mxu0 0.0
    %2087 = vmatprep.subr.mxu0 0.0
    %2088 = vmatpush1.msra.mxu0 0.0
    %2089 = vmatprep.subr.mxu0 0.0
    %2090 = vmatpush1.msra.mxu0 0.0
    %2091 = vmatprep.subr.mxu0 0.0
    %2092 = vmatpush1.msra.mxu0 0.0
    %2093 = vmatprep.subr.mxu0 0.0
    %2094 = vmatpush1.msra.mxu0 0.0
    %2095 = vmatprep.subr.mxu0 0.0
    %2096 = vmatpush1.msra.mxu0 0.0
    %2097 = vmatprep.subr.mxu0 0.0
    %2098 = vmatpush1.msra.mxu0 0.0
    %2099 = vmatprep.subr.mxu0 0.0
    %2100 = vmatpush1.msra.mxu0 0.0
    %2101 = vmatprep.subr.mxu0 0.0
    %2102 = vmatpush1.msra.mxu0 0.0
    %2103 = vmatprep.subr.mxu0 0.0
    %2104 = vmatpush1.msra.mxu0 0.0
    %2105 = vmatprep.subr.mxu0 0.0
    %2106 = vmatpush1.msra.mxu0 0.0
    %2107 = vmatprep.subr.mxu0 0.0
    %2108 = vmatpush1.msra.mxu0 0.0
    %2109 = vmatprep.mubr.f32.mxu0 0.0
    %2110 = vmatmul.mubr.f32.gmra.mrb[0].mxu0 %v2040
    %v2111 = vpop.f32.mrb[0].mxu0
    %v2112 = vadd.f32 %v2027, %v2111
    %v2113 = vpop.f32.mrb[0].mxu0
    %2114 = vmatprep.mubr.f32.mxu0 0.0
    %2115 = vmatmul.mubr.f32.gmra.mrb[0].mxu0 %v2043
    %v2116 = vpop.f32.mrb[0].mxu0
    %v2117 = vadd.f32 %v2032, %v2116
    %v2118 = vpop.f32.mrb[0].mxu0
    %2119 = vdwg.mxu0
    %2120 = vrot.lane.b32.xlu0 %v1544, 112
    %v2121 = vpop.permute.xlu0 %2120
    %2122 = vrot.lane.b32.xlu0 %v1549, 112
    %v2123 = vpop.permute.xlu0 %2122
    %2124 = vrot.lane.b32.xlu0 %v1544, 80
    %v2125 = vpop.permute.xlu0 %2124
    %2126 = vrot.lane.b32.xlu0 %v1549, 80
    %v2127 = vpop.permute.xlu0 %2126
    %v2128 = vsel %vm290, %v2121, 0
    %v2130 = vsel %vm290, %v2123, 0
    %v2132 = vsel %vm290, %v2125, 0
    %v2134 = vsel %vm290, %v2127, 0
    %2136 = vmatprep.subr.mxu0 0.0
    %2137 = vmatpush1.xpose.msra.mxu0 %v2132
    %2138 = vmatprep.subr.mxu0 0.0
    %2139 = vmatpush1.xpose.msra.mxu0 %v2134
    %2140 = vmatprep.subr.mxu0 0.0
    %2141 = vmatpush1.xpose.msra.mxu0 0.0
    %2142 = vmatprep.subr.mxu0 0.0
    %2143 = vmatpush1.xpose.msra.mxu0 0.0
    %2144 = vmatprep.subr.mxu0 0.0
    %2145 = vmatpush1.xpose.msra.mxu0 0.0
    %2146 = vmatprep.subr.mxu0 0.0
    %2147 = vmatpush1.xpose.msra.mxu0 0.0
    %2148 = vmatprep.subr.mxu0 0.0
    %2149 = vmatpush1.xpose.msra.mxu0 0.0
    %2150 = vmatprep.subr.mxu0 0.0
    %2151 = vmatpush1.xpose.msra.mxu0 0.0
    %2152 = vmatprep.subr.mxu0 0.0
    %2153 = vmatpush1.xpose.msra.mxu0 0.0
    %2154 = vmatprep.subr.mxu0 0.0
    %2155 = vmatpush1.xpose.msra.mxu0 0.0
    %2156 = vmatprep.subr.mxu0 0.0
    %2157 = vmatpush1.xpose.msra.mxu0 0.0
    %2158 = vmatprep.subr.mxu0 0.0
    %2159 = vmatpush1.xpose.msra.mxu0 0.0
    %2160 = vmatprep.subr.mxu0 0.0
    %2161 = vmatpush1.xpose.msra.mxu0 0.0
    %2162 = vmatprep.subr.mxu0 0.0
    %2163 = vmatpush1.xpose.msra.mxu0 0.0
    %2164 = vmatprep.subr.mxu0 0.0
    %2165 = vmatpush1.xpose.msra.mxu0 0.0
    %2166 = vmatprep.subr.mxu0 0.0
    %2167 = vmatpush1.xpose.msra.mxu0 0.0
    %2168 = vmatprep.subr.mxu0 0.0
    %2169 = vmatpush1.xpose.msra.mxu0 0.0
    %2170 = vmatprep.subr.mxu0 0.0
    %2171 = vmatpush1.xpose.msra.mxu0 0.0
    %2172 = vmatprep.subr.mxu0 0.0
    %2173 = vmatpush1.xpose.msra.mxu0 0.0
    %2174 = vmatprep.subr.mxu0 0.0
    %2175 = vmatpush1.xpose.msra.mxu0 0.0
    %2176 = vmatprep.subr.mxu0 0.0
    %2177 = vmatpush1.xpose.msra.mxu0 0.0
    %2178 = vmatprep.subr.mxu0 0.0
    %2179 = vmatpush1.xpose.msra.mxu0 0.0
    %2180 = vmatprep.subr.mxu0 0.0
    %2181 = vmatpush1.xpose.msra.mxu0 0.0
    %2182 = vmatprep.subr.mxu0 0.0
    %2183 = vmatpush1.xpose.msra.mxu0 0.0
    %2184 = vmatprep.subr.mxu0 0.0
    %2185 = vmatpush1.xpose.msra.mxu0 0.0
    %2186 = vmatprep.subr.mxu0 0.0
    %2187 = vmatpush1.xpose.msra.mxu0 0.0
    %2188 = vmatprep.subr.mxu0 0.0
    %2189 = vmatpush1.xpose.msra.mxu0 0.0
    %2190 = vmatprep.subr.mxu0 0.0
    %2191 = vmatpush1.xpose.msra.mxu0 0.0
    %2192 = vmatprep.subr.mxu0 0.0
    %2193 = vmatpush1.xpose.msra.mxu0 0.0
    %2194 = vmatprep.subr.mxu0 0.0
    %2195 = vmatpush1.xpose.msra.mxu0 0.0
    %2196 = vmatprep.subr.mxu0 0.0
    %2197 = vmatpush1.xpose.msra.mxu0 0.0
    %2198 = vmatprep.subr.mxu0 0.0
    %2199 = vmatpush1.xpose.msra.mxu0 0.0
    %2200 = vmatprep.mubr.f32.mxu0 0.0
    %2201 = vmatmul.mubr.f32.gmra.mrb[0].mxu0 %v2128
    %v2202 = vpop.f32.mrb[0].mxu0
    %v2203 = vadd.f32 %v93, %v2202
    %v2204 = vpop.f32.mrb[0].mxu0
    %2205 = vmatprep.mubr.f32.mxu0 0.0
    %2206 = vmatmul.mubr.f32.gmra.mrb[0].mxu0 %v2130
    %v2207 = vpop.f32.mrb[0].mxu0
    %v2208 = vadd.f32 %v94, %v2207
    %v2209 = vpop.f32.mrb[0].mxu0
    %2210 = vdwg.mxu0
    %v2211 = vsel %vm378, %v2203, -inf
    %2212 = vmax.xlane.f32.xlu0 %v2211
    %v2213 = vpop.xlane.xlu0 %2212
    %v2214 = vsel %vm378, %v2208, -inf
    %2215 = vmax.xlane.f32.xlu0 %v2214
    %v2216 = vpop.xlane.xlu0 %2215
    %v2217 = vsub.f32 %v2203, %v2213
    %v2218 = vsub.f32 %v2208, %v2216
    %v2219 = vmul.f32 %v2217, 1.442695
    %v2220 = vpow.pop %v2219
    %v2221 = vmul.f32 %v2218, 1.442695
    %v2222 = vpow.pop %v2221
    %v2223 = vsel %vm378, %v2220, 0.0
    %2224 = vadd.xlane.f32.xlu0 %v2223
    %v2225 = vpop.xlane.xlu0 %2224
    %v2226 = vsel %vm378, %v2222, 0.0
    %2227 = vadd.xlane.f32.xlu0 %v2226
    %v2228 = vpop.xlane.xlu0 %2227
    %v2229 = vrcp.pop %v2225
    %v2230 = vmul.f32 %v2220, %v2229
    %v2231 = vrcp.pop %v2228
    %v2232 = vmul.f32 %v2222, %v2231
    %2233 = vrot.lane.b32.xlu0 %v1544, 48
    %v2234 = vpop.permute.xlu0 %2233
    %2235 = vrot.lane.b32.xlu0 %v1549, 48
    %v2236 = vpop.permute.xlu0 %2235
    %v2240 = vsel %vm378, %v2230, 0
    %v2243 = vsel %vm378, %v2232, 0
    %2245 = vmatprep.subr.mxu0 0.0
    %2246 = vmatpush1.msra.mxu0 %v2234
    %2247 = vmatprep.subr.mxu0 0.0
    %2248 = vmatpush1.msra.mxu0 %v2236
    %2249 = vmatprep.subr.mxu0 0.0
    %2250 = vmatpush1.msra.mxu0 0.0
    %2251 = vmatprep.subr.mxu0 0.0
    %2252 = vmatpush1.msra.mxu0 0.0
    %2253 = vmatprep.subr.mxu0 0.0
    %2254 = vmatpush1.msra.mxu0 0.0
    %2255 = vmatprep.subr.mxu0 0.0
    %2256 = vmatpush1.msra.mxu0 0.0
    %2257 = vmatprep.subr.mxu0 0.0
    %2258 = vmatpush1.msra.mxu0 0.0
    %2259 = vmatprep.subr.mxu0 0.0
    %2260 = vmatpush1.msra.mxu0 0.0
    %2261 = vmatprep.subr.mxu0 0.0
    %2262 = vmatpush1.msra.mxu0 0.0
    %2263 = vmatprep.subr.mxu0 0.0
    %2264 = vmatpush1.msra.mxu0 0.0
    %2265 = vmatprep.subr.mxu0 0.0
    %2266 = vmatpush1.msra.mxu0 0.0
    %2267 = vmatprep.subr.mxu0 0.0
    %2268 = vmatpush1.msra.mxu0 0.0
    %2269 = vmatprep.subr.mxu0 0.0
    %2270 = vmatpush1.msra.mxu0 0.0
    %2271 = vmatprep.subr.mxu0 0.0
    %2272 = vmatpush1.msra.mxu0 0.0
    %2273 = vmatprep.subr.mxu0 0.0
    %2274 = vmatpush1.msra.mxu0 0.0
    %2275 = vmatprep.subr.mxu0 0.0
    %2276 = vmatpush1.msra.mxu0 0.0
    %2277 = vmatprep.subr.mxu0 0.0
    %2278 = vmatpush1.msra.mxu0 0.0
    %2279 = vmatprep.subr.mxu0 0.0
    %2280 = vmatpush1.msra.mxu0 0.0
    %2281 = vmatprep.subr.mxu0 0.0
    %2282 = vmatpush1.msra.mxu0 0.0
    %2283 = vmatprep.subr.mxu0 0.0
    %2284 = vmatpush1.msra.mxu0 0.0
    %2285 = vmatprep.subr.mxu0 0.0
    %2286 = vmatpush1.msra.mxu0 0.0
    %2287 = vmatprep.subr.mxu0 0.0
    %2288 = vmatpush1.msra.mxu0 0.0
    %2289 = vmatprep.subr.mxu0 0.0
    %2290 = vmatpush1.msra.mxu0 0.0
    %2291 = vmatprep.subr.mxu0 0.0
    %2292 = vmatpush1.msra.mxu0 0.0
    %2293 = vmatprep.subr.mxu0 0.0
    %2294 = vmatpush1.msra.mxu0 0.0
    %2295 = vmatprep.subr.mxu0 0.0
    %2296 = vmatpush1.msra.mxu0 0.0
    %2297 = vmatprep.subr.mxu0 0.0
    %2298 = vmatpush1.msra.mxu0 0.0
    %2299 = vmatprep.subr.mxu0 0.0
    %2300 = vmatpush1.msra.mxu0 0.0
    %2301 = vmatprep.subr.mxu0 0.0
    %2302 = vmatpush1.msra.mxu0 0.0
    %2303 = vmatprep.subr.mxu0 0.0
    %2304 = vmatpush1.msra.mxu0 0.0
    %2305 = vmatprep.subr.mxu0 0.0
    %2306 = vmatpush1.msra.mxu0 0.0
    %2307 = vmatprep.subr.mxu0 0.0
    %2308 = vmatpush1.msra.mxu0 0.0
    %2309 = vmatprep.mubr.f32.mxu0 0.0
    %2310 = vmatmul.mubr.f32.gmra.mrb[0].mxu0 %v2240
    %v2311 = vpop.f32.mrb[0].mxu0
    %v2312 = vadd.f32 0.0, %v2311
    %v2313 = vpop.f32.mrb[0].mxu0
    %2314 = vmatprep.mubr.f32.mxu0 0.0
    %2315 = vmatmul.mubr.f32.gmra.mrb[0].mxu0 %v2243
    %v2316 = vpop.f32.mrb[0].mxu0
    %v2317 = vadd.f32 0.0, %v2316
    %v2318 = vpop.f32.mrb[0].mxu0
    %2319 = vdwg.mxu0
    %2321 = vrot.lane.b32.xlu0 %v97, 96
    %v2322 = vpop.permute.xlu0 %2321
    %v2325 = vsel %vm290, %v2312, 0
    %v2328 = vsel %vm290, %v2317, 0
    %2330 = vmatprep.subr.mxu0 0.0
    %2331 = vmatpush1.msra.mxu0 %v2322
    %2332 = vmatprep.subr.mxu0 0.0
    %2333 = vmatpush1.msra.mxu0 0.0
    %2334 = vmatprep.subr.mxu0 0.0
    %2335 = vmatpush1.msra.mxu0 0.0
    %2336 = vmatprep.subr.mxu0 0.0
    %2337 = vmatpush1.msra.mxu0 0.0
    %2338 = vmatprep.subr.mxu0 0.0
    %2339 = vmatpush1.msra.mxu0 0.0
    %2340 = vmatprep.subr.mxu0 0.0
    %2341 = vmatpush1.msra.mxu0 0.0
    %2342 = vmatprep.subr.mxu0 0.0
    %2343 = vmatpush1.msra.mxu0 0.0
    %2344 = vmatprep.subr.mxu0 0.0
    %2345 = vmatpush1.msra.mxu0 0.0
    %2346 = vmatprep.subr.mxu0 0.0
    %2347 = vmatpush1.msra.mxu0 0.0
    %2348 = vmatprep.subr.mxu0 0.0
    %2349 = vmatpush1.msra.mxu0 0.0
    %2350 = vmatprep.subr.mxu0 0.0
    %2351 = vmatpush1.msra.mxu0 0.0
    %2352 = vmatprep.subr.mxu0 0.0
    %2353 = vmatpush1.msra.mxu0 0.0
    %2354 = vmatprep.subr.mxu0 0.0
    %2355 = vmatpush1.msra.mxu0 0.0
    %2356 = vmatprep.subr.mxu0 0.0
    %2357 = vmatpush1.msra.mxu0 0.0
    %2358 = vmatprep.subr.mxu0 0.0
    %2359 = vmatpush1.msra.mxu0 0.0
    %2360 = vmatprep.subr.mxu0 0.0
    %2361 = vmatpush1.msra.mxu0 0.0
    %2362 = vmatprep.subr.mxu0 0.0
    %2363 = vmatpush1.msra.mxu0 0.0
    %2364 = vmatprep.subr.mxu0 0.0
    %2365 = vmatpush1.msra.mxu0 0.0
    %2366 = vmatprep.subr.mxu0 0.0
    %2367 = vmatpush1.msra.mxu0 0.0
    %2368 = vmatprep.subr.mxu0 0.0
    %2369 = vmatpush1.msra.mxu0 0.0
    %2370 = vmatprep.subr.mxu0 0.0
    %2371 = vmatpush1.msra.mxu0 0.0
    %2372 = vmatprep.subr.mxu0 0.0
    %2373 = vmatpush1.msra.mxu0 0.0
    %2374 = vmatprep.subr.mxu0 0.0
    %2375 = vmatpush1.msra.mxu0 0.0
    %2376 = vmatprep.subr.mxu0 0.0
    %2377 = vmatpush1.msra.mxu0 0.0
    %2378 = vmatprep.subr.mxu0 0.0
    %2379 = vmatpush1.msra.mxu0 0.0
    %2380 = vmatprep.subr.mxu0 0.0
    %2381 = vmatpush1.msra.mxu0 0.0
    %2382 = vmatprep.subr.mxu0 0.0
    %2383 = vmatpush1.msra.mxu0 0.0
    %2384 = vmatprep.subr.mxu0 0.0
    %2385 = vmatpush1.msra.mxu0 0.0
    %2386 = vmatprep.subr.mxu0 0.0
    %2387 = vmatpush1.msra.mxu0 0.0
    %2388 = vmatprep.subr.mxu0 0.0
    %2389 = vmatpush1.msra.mxu0 0.0
    %2390 = vmatprep.subr.mxu0 0.0
    %2391 = vmatpush1.msra.mxu0 0.0
    %2392 = vmatprep.subr.mxu0 0.0
    %2393 = vmatpush1.msra.mxu0 0.0
    %2394 = vmatprep.mubr.f32.mxu0 0.0
    %2395 = vmatmul.mubr.f32.gmra.mrb[0].mxu0 %v2325
    %v2396 = vpop.f32.mrb[0].mxu0
    %v2397 = vadd.f32 0.0, %v2396
    %v2398 = vpop.f32.mrb[0].mxu0
    %2399 = vmatprep.mubr.f32.mxu0 0.0
    %2400 = vmatmul.mubr.f32.gmra.mrb[0].mxu0 %v2328
    %v2401 = vpop.f32.mrb[0].mxu0
    %v2402 = vadd.f32 0.0, %v2401
    %v2403 = vpop.f32.mrb[0].mxu0
    %2404 = vdwg.mxu0
    %v2405 = vadd.f32 %v2112, %v2397
    %v2406 = vadd.f32 %v2117, %v2402
    %2407 = vrot.lane.b32.xlu0 %v1544, 104
    %v2408 = vpop.permute.xlu0 %2407
    %2409 = vrot.lane.b32.xlu0 %v1549, 104
    %v2410 = vpop.permute.xlu0 %2409
    %2411 = vrot.lane.b32.xlu0 %v1544, 72
    %v2412 = vpop.permute.xlu0 %2411
    %2413 = vrot.lane.b32.xlu0 %v1549, 72
    %v2414 = vpop.permute.xlu0 %2413
    %v2415 = vsel %vm290, %v2408, 0
    %v2417 = vsel %vm290, %v2410, 0
    %v2419 = vsel %vm290, %v2412, 0
    %v2421 = vsel %vm290, %v2414, 0
    %2423 = vmatprep.subr.mxu0 0.0
    %2424 = vmatpush1.xpose.msra.mxu0 %v2419
    %2425 = vmatprep.subr.mxu0 0.0
    %2426 = vmatpush1.xpose.msra.mxu0 %v2421
    %2427 = vmatprep.subr.mxu0 0.0
    %2428 = vmatpush1.xpose.msra.mxu0 0.0
    %2429 = vmatprep.subr.mxu0 0.0
    %2430 = vmatpush1.xpose.msra.mxu0 0.0
    %2431 = vmatprep.subr.mxu0 0.0
    %2432 = vmatpush1.xpose.msra.mxu0 0.0
    %2433 = vmatprep.subr.mxu0 0.0
    %2434 = vmatpush1.xpose.msra.mxu0 0.0
    %2435 = vmatprep.subr.mxu0 0.0
    %2436 = vmatpush1.xpose.msra.mxu0 0.0
    %2437 = vmatprep.subr.mxu0 0.0
    %2438 = vmatpush1.xpose.msra.mxu0 0.0
    %2439 = vmatprep.subr.mxu0 0.0
    %2440 = vmatpush1.xpose.msra.mxu0 0.0
    %2441 = vmatprep.subr.mxu0 0.0
    %2442 = vmatpush1.xpose.msra.mxu0 0.0
    %2443 = vmatprep.subr.mxu0 0.0
    %2444 = vmatpush1.xpose.msra.mxu0 0.0
    %2445 = vmatprep.subr.mxu0 0.0
    %2446 = vmatpush1.xpose.msra.mxu0 0.0
    %2447 = vmatprep.subr.mxu0 0.0
    %2448 = vmatpush1.xpose.msra.mxu0 0.0
    %2449 = vmatprep.subr.mxu0 0.0
    %2450 = vmatpush1.xpose.msra.mxu0 0.0
    %2451 = vmatprep.subr.mxu0 0.0
    %2452 = vmatpush1.xpose.msra.mxu0 0.0
    %2453 = vmatprep.subr.mxu0 0.0
    %2454 = vmatpush1.xpose.msra.mxu0 0.0
    %2455 = vmatprep.subr.mxu0 0.0
    %2456 = vmatpush1.xpose.msra.mxu0 0.0
    %2457 = vmatprep.subr.mxu0 0.0
    %2458 = vmatpush1.xpose.msra.mxu0 0.0
    %2459 = vmatprep.subr.mxu0 0.0
    %2460 = vmatpush1.xpose.msra.mxu0 0.0
    %2461 = vmatprep.subr.mxu0 0.0
    %2462 = vmatpush1.xpose.msra.mxu0 0.0
    %2463 = vmatprep.subr.mxu0 0.0
    %2464 = vmatpush1.xpose.msra.mxu0 0.0
    %2465 = vmatprep.subr.mxu0 0.0
    %2466 = vmatpush1.xpose.msra.mxu0 0.0
    %2467 = vmatprep.subr.mxu0 0.0
    %2468 = vmatpush1.xpose.msra.mxu0 0.0
    %2469 = vmatprep.subr.mxu0 0.0
    %2470 = vmatpush1.xpose.msra.mxu0 0.0
    %2471 = vmatprep.subr.mxu0 0.0
    %2472 = vmatpush1.xpose.msra.mxu0 0.0
    %2473 = vmatprep.subr.mxu0 0.0
    %2474 = vmatpush1.xpose.msra.mxu0 0.0
    %2475 = vmatprep.subr.mxu0 0.0
    %2476 = vmatpush1.xpose.msra.mxu0 0.0
    %2477 = vmatprep.subr.mxu0 0.0
    %2478 = vmatpush1.xpose.msra.mxu0 0.0
    %2479 = vmatprep.subr.mxu0 0.0
    %2480 = vmatpush1.xpose.msra.mxu0 0.0
    %2481 = vmatprep.subr.mxu0 0.0
    %2482 = vmatpush1.xpose.msra.mxu0 0.0
    %2483 = vmatprep.subr.mxu0 0.0
    %2484 = vmatpush1.xpose.msra.mxu0 0.0
    %2485 = vmatprep.subr.mxu0 0.0
    %2486 = vmatpush1.xpose.msra.mxu0 0.0
    %2487 = vmatprep.mubr.f32.mxu0 0.0
    %2488 = vmatmul.mubr.f32.gmra.mrb[0].mxu0 %v2415
    %v2489 = vpop.f32.mrb[0].mxu0
    %v2490 = vadd.f32 %v93, %v2489
    %v2491 = vpop.f32.mrb[0].mxu0
    %2492 = vmatprep.mubr.f32.mxu0 0.0
    %2493 = vmatmul.mubr.f32.gmra.mrb[0].mxu0 %v2417
    %v2494 = vpop.f32.mrb[0].mxu0
    %v2495 = vadd.f32 %v94, %v2494
    %v2496 = vpop.f32.mrb[0].mxu0
    %2497 = vdwg.mxu0
    %v2498 = vsel %vm378, %v2490, -inf
    %2499 = vmax.xlane.f32.xlu0 %v2498
    %v2500 = vpop.xlane.xlu0 %2499
    %v2501 = vsel %vm378, %v2495, -inf
    %2502 = vmax.xlane.f32.xlu0 %v2501
    %v2503 = vpop.xlane.xlu0 %2502
    %v2504 = vsub.f32 %v2490, %v2500
    %v2505 = vsub.f32 %v2495, %v2503
    %v2506 = vmul.f32 %v2504, 1.442695
    %v2507 = vpow.pop %v2506
    %v2508 = vmul.f32 %v2505, 1.442695
    %v2509 = vpow.pop %v2508
    %v2510 = vsel %vm378, %v2507, 0.0
    %2511 = vadd.xlane.f32.xlu0 %v2510
    %v2512 = vpop.xlane.xlu0 %2511
    %v2513 = vsel %vm378, %v2509, 0.0
    %2514 = vadd.xlane.f32.xlu0 %v2513
    %v2515 = vpop.xlane.xlu0 %2514
    %v2516 = vrcp.pop %v2512
    %v2517 = vmul.f32 %v2507, %v2516
    %v2518 = vrcp.pop %v2515
    %v2519 = vmul.f32 %v2509, %v2518
    %2520 = vrot.lane.b32.xlu0 %v1544, 40
    %v2521 = vpop.permute.xlu0 %2520
    %2522 = vrot.lane.b32.xlu0 %v1549, 40
    %v2523 = vpop.permute.xlu0 %2522
    %v2527 = vsel %vm378, %v2517, 0
    %v2530 = vsel %vm378, %v2519, 0
    %2532 = vmatprep.subr.mxu0 0.0
    %2533 = vmatpush1.msra.mxu0 %v2521
    %2534 = vmatprep.subr.mxu0 0.0
    %2535 = vmatpush1.msra.mxu0 %v2523
    %2536 = vmatprep.subr.mxu0 0.0
    %2537 = vmatpush1.msra.mxu0 0.0
    %2538 = vmatprep.subr.mxu0 0.0
    %2539 = vmatpush1.msra.mxu0 0.0
    %2540 = vmatprep.subr.mxu0 0.0
    %2541 = vmatpush1.msra.mxu0 0.0
    %2542 = vmatprep.subr.mxu0 0.0
    %2543 = vmatpush1.msra.mxu0 0.0
    %2544 = vmatprep.subr.mxu0 0.0
    %2545 = vmatpush1.msra.mxu0 0.0
    %2546 = vmatprep.subr.mxu0 0.0
    %2547 = vmatpush1.msra.mxu0 0.0
    %2548 = vmatprep.subr.mxu0 0.0
    %2549 = vmatpush1.msra.mxu0 0.0
    %2550 = vmatprep.subr.mxu0 0.0
    %2551 = vmatpush1.msra.mxu0 0.0
    %2552 = vmatprep.subr.mxu0 0.0
    %2553 = vmatpush1.msra.mxu0 0.0
    %2554 = vmatprep.subr.mxu0 0.0
    %2555 = vmatpush1.msra.mxu0 0.0
    %2556 = vmatprep.subr.mxu0 0.0
    %2557 = vmatpush1.msra.mxu0 0.0
    %2558 = vmatprep.subr.mxu0 0.0
    %2559 = vmatpush1.msra.mxu0 0.0
    %2560 = vmatprep.subr.mxu0 0.0
    %2561 = vmatpush1.msra.mxu0 0.0
    %2562 = vmatprep.subr.mxu0 0.0
    %2563 = vmatpush1.msra.mxu0 0.0
    %2564 = vmatprep.subr.mxu0 0.0
    %2565 = vmatpush1.msra.mxu0 0.0
    %2566 = vmatprep.subr.mxu0 0.0
    %2567 = vmatpush1.msra.mxu0 0.0
    %2568 = vmatprep.subr.mxu0 0.0
    %2569 = vmatpush1.msra.mxu0 0.0
    %2570 = vmatprep.subr.mxu0 0.0
    %2571 = vmatpush1.msra.mxu0 0.0
    %2572 = vmatprep.subr.mxu0 0.0
    %2573 = vmatpush1.msra.mxu0 0.0
    %2574 = vmatprep.subr.mxu0 0.0
    %2575 = vmatpush1.msra.mxu0 0.0
    %2576 = vmatprep.subr.mxu0 0.0
    %2577 = vmatpush1.msra.mxu0 0.0
    %2578 = vmatprep.subr.mxu0 0.0
    %2579 = vmatpush1.msra.mxu0 0.0
    %2580 = vmatprep.subr.mxu0 0.0
    %2581 = vmatpush1.msra.mxu0 0.0
    %2582 = vmatprep.subr.mxu0 0.0
    %2583 = vmatpush1.msra.mxu0 0.0
    %2584 = vmatprep.subr.mxu0 0.0
    %2585 = vmatpush1.msra.mxu0 0.0
    %2586 = vmatprep.subr.mxu0 0.0
    %2587 = vmatpush1.msra.mxu0 0.0
    %2588 = vmatprep.subr.mxu0 0.0
    %2589 = vmatpush1.msra.mxu0 0.0
    %2590 = vmatprep.subr.mxu0 0.0
    %2591 = vmatpush1.msra.mxu0 0.0
    %2592 = vmatprep.subr.mxu0 0.0
    %2593 = vmatpush1.msra.mxu0 0.0
    %2594 = vmatprep.subr.mxu0 0.0
    %2595 = vmatpush1.msra.mxu0 0.0
    %2596 = vmatprep.mubr.f32.mxu0 0.0
    %2597 = vmatmul.mubr.f32.gmra.mrb[0].mxu0 %v2527
    %v2598 = vpop.f32.mrb[0].mxu0
    %v2599 = vadd.f32 0.0, %v2598
    %v2600 = vpop.f32.mrb[0].mxu0
    %2601 = vmatprep.mubr.f32.mxu0 0.0
    %2602 = vmatmul.mubr.f32.gmra.mrb[0].mxu0 %v2530
    %v2603 = vpop.f32.mrb[0].mxu0
    %v2604 = vadd.f32 0.0, %v2603
    %v2605 = vpop.f32.mrb[0].mxu0
    %2606 = vdwg.mxu0
    %2608 = vrot.lane.b32.xlu0 %v98, 96
    %v2609 = vpop.permute.xlu0 %2608
    %v2612 = vsel %vm290, %v2599, 0
    %v2615 = vsel %vm290, %v2604, 0
    %2617 = vmatprep.subr.mxu0 0.0
    %2618 = vmatpush1.msra.mxu0 %v2609
    %2619 = vmatprep.subr.mxu0 0.0
    %2620 = vmatpush1.msra.mxu0 0.0
    %2621 = vmatprep.subr.mxu0 0.0
    %2622 = vmatpush1.msra.mxu0 0.0
    %2623 = vmatprep.subr.mxu0 0.0
    %2624 = vmatpush1.msra.mxu0 0.0
    %2625 = vmatprep.subr.mxu0 0.0
    %2626 = vmatpush1.msra.mxu0 0.0
    %2627 = vmatprep.subr.mxu0 0.0
    %2628 = vmatpush1.msra.mxu0 0.0
    %2629 = vmatprep.subr.mxu0 0.0
    %2630 = vmatpush1.msra.mxu0 0.0
    %2631 = vmatprep.subr.mxu0 0.0
    %2632 = vmatpush1.msra.mxu0 0.0
    %2633 = vmatprep.subr.mxu0 0.0
    %2634 = vmatpush1.msra.mxu0 0.0
    %2635 = vmatprep.subr.mxu0 0.0
    %2636 = vmatpush1.msra.mxu0 0.0
    %2637 = vmatprep.subr.mxu0 0.0
    %2638 = vmatpush1.msra.mxu0 0.0
    %2639 = vmatprep.subr.mxu0 0.0
    %2640 = vmatpush1.msra.mxu0 0.0
    %2641 = vmatprep.subr.mxu0 0.0
    %2642 = vmatpush1.msra.mxu0 0.0
    %2643 = vmatprep.subr.mxu0 0.0
    %2644 = vmatpush1.msra.mxu0 0.0
    %2645 = vmatprep.subr.mxu0 0.0
    %2646 = vmatpush1.msra.mxu0 0.0
    %2647 = vmatprep.subr.mxu0 0.0
    %2648 = vmatpush1.msra.mxu0 0.0
    %2649 = vmatprep.subr.mxu0 0.0
    %2650 = vmatpush1.msra.mxu0 0.0
    %2651 = vmatprep.subr.mxu0 0.0
    %2652 = vmatpush1.msra.mxu0 0.0
    %2653 = vmatprep.subr.mxu0 0.0
    %2654 = vmatpush1.msra.mxu0 0.0
    %2655 = vmatprep.subr.mxu0 0.0
    %2656 = vmatpush1.msra.mxu0 0.0
    %2657 = vmatprep.subr.mxu0 0.0
    %2658 = vmatpush1.msra.mxu0 0.0
    %2659 = vmatprep.subr.mxu0 0.0
    %2660 = vmatpush1.msra.mxu0 0.0
    %2661 = vmatprep.subr.mxu0 0.0
    %2662 = vmatpush1.msra.mxu0 0.0
    %2663 = vmatprep.subr.mxu0 0.0
    %2664 = vmatpush1.msra.mxu0 0.0
    %2665 = vmatprep.subr.mxu0 0.0
    %2666 = vmatpush1.msra.mxu0 0.0
    %2667 = vmatprep.subr.mxu0 0.0
    %2668 = vmatpush1.msra.mxu0 0.0
    %2669 = vmatprep.subr.mxu0 0.0
    %2670 = vmatpush1.msra.mxu0 0.0
    %2671 = vmatprep.subr.mxu0 0.0
    %2672 = vmatpush1.msra.mxu0 0.0
    %2673 = vmatprep.subr.mxu0 0.0
    %2674 = vmatpush1.msra.mxu0 0.0
    %2675 = vmatprep.subr.mxu0 0.0
    %2676 = vmatpush1.msra.mxu0 0.0
    %2677 = vmatprep.subr.mxu0 0.0
    %2678 = vmatpush1.msra.mxu0 0.0
    %2679 = vmatprep.subr.mxu0 0.0
    %2680 = vmatpush1.msra.mxu0 0.0
    %2681 = vmatprep.mubr.f32.mxu0 0.0
    %2682 = vmatmul.mubr.f32.gmra.mrb[0].mxu0 %v2612
    %v2683 = vpop.f32.mrb[0].mxu0
    %v2684 = vadd.f32 0.0, %v2683
    %v2685 = vpop.f32.mrb[0].mxu0
    %2686 = vmatprep.mubr.f32.mxu0 0.0
    %2687 = vmatmul.mubr.f32.gmra.mrb[0].mxu0 %v2615
    %v2688 = vpop.f32.mrb[0].mxu0
    %v2689 = vadd.f32 0.0, %v2688
    %v2690 = vpop.f32.mrb[0].mxu0
    %2691 = vdwg.mxu0
    %v2692 = vadd.f32 %v2405, %v2684
    %v2693 = vadd.f32 %v2406, %v2689
    %v2694 = vlaneseq
    %v2695 = vshrl.u32 %v2694, 7
    %v2696 = vsub.s32 4, %v2695
    %v2697 = vrot.slane %v81, %v2696
    %v2698 = vadd.f32 %v2692, %v2697
    %v2699 = vadd.f32 %v2693, %v2697
    %v2700 = vadd.f32 %v1461, %v2698
    %v2701 = vadd.f32 %v1462, %v2699
    %v2702 = vsel %vm107, %v2700, 0.0
    %2703 = vadd.xlane.f32.xlu0 %v2702
    %v2704 = vpop.xlane.xlu0 %2703
    %v2705 = vsel %vm107, %v2701, 0.0
    %2706 = vadd.xlane.f32.xlu0 %v2705
    %v2707 = vpop.xlane.xlu0 %2706
    %v2708 = vmul.f32 %v2704, %v1430
    %v2709 = vmul.f32 %v2707, %v1430
    %v2710 = vsub.f32 %v2700, %v2708
    %v2711 = vsub.f32 %v2701, %v2709
    %v2712 = vmul.f32 %v2710, %v2710
    %v2713 = vmul.f32 %v2711, %v2711
    %v2714 = vsel %vm107, %v2712, 0.0
    %2715 = vadd.xlane.f32.xlu0 %v2714
    %v2716 = vpop.xlane.xlu0 %2715
    %v2717 = vsel %vm107, %v2713, 0.0
    %2718 = vadd.xlane.f32.xlu0 %v2717
    %v2719 = vpop.xlane.xlu0 %2718
    %v2720 = vmul.f32 %v2716, %v1430
    %v2721 = vmul.f32 %v2719, %v1430
    %v2722 = vadd.f32 %v2720, 1e-05
    %v2723 = vadd.f32 %v2721, 1e-05
    %v2724 = vrsqrt.pop %v2722
    %v2725 = vrsqrt.pop %v2723
    %v2726 = vmul.f32 %v2710, %v2724
    %v2727 = vmul.f32 %v2711, %v2725
    %v2728 = vlaneseq
    %v2729 = vshrl.u32 %v2728, 7
    %v2730 = vsub.s32 0, %v2729
    %v2731 = vrot.slane %v82, %v2730
    %v2732 = vmul.f32 %v2726, %v2731
    %v2733 = vmul.f32 %v2727, %v2731
    %v2734 = vlaneseq
    %v2735 = vshrl.u32 %v2734, 7
    %v2736 = vsub.s32 1, %v2735
    %v2737 = vrot.slane %v82, %v2736
    %v2738 = vadd.f32 %v2732, %v2737
    %v2739 = vadd.f32 %v2733, %v2737
    %v2740 = vld [vmem:[#allocation8 + $0x10] sm:$0xff]
    %v2741 = vld [vmem:[#allocation8 + $0x38] sm:$0xff]
    %v2742 = vld [vmem:[#allocation8 + $0x60] sm:$0xff]
    %v2743 = vld [vmem:[#allocation8 + $0x88] sm:$0xff]
    %v2744 = vlaneseq
    %v2745 = vshrl.u32 %v2744, 7
    %v2746 = vsub.s32 2, %v2745
    %v2747 = vrot.slane %v81, %v2746
    %v2749 = vsel %vm107, %v2738, 0
    %v2752 = vsel %vm107, %v2739, 0
    %2754 = vmatprep.subr.mxu0 0.0
    %2755 = vmatpush1.msra.mxu0 %v2740
    %2756 = vmatprep.subr.mxu0 0.0
    %2757 = vmatpush1.msra.mxu0 %v2741
    %2758 = vmatprep.subr.mxu0 0.0
    %2759 = vmatpush1.msra.mxu0 %v2742
    %2760 = vmatprep.subr.mxu0 0.0
    %2761 = vmatpush1.msra.mxu0 %v2743
    %2762 = vmatprep.subr.mxu0 0.0
    %2763 = vmatpush1.msra.mxu0 0.0
    %2764 = vmatprep.subr.mxu0 0.0
    %2765 = vmatpush1.msra.mxu0 0.0
    %2766 = vmatprep.subr.mxu0 0.0
    %2767 = vmatpush1.msra.mxu0 0.0
    %2768 = vmatprep.subr.mxu0 0.0
    %2769 = vmatpush1.msra.mxu0 0.0
    %2770 = vmatprep.subr.mxu0 0.0
    %2771 = vmatpush1.msra.mxu0 0.0
    %2772 = vmatprep.subr.mxu0 0.0
    %2773 = vmatpush1.msra.mxu0 0.0
    %2774 = vmatprep.subr.mxu0 0.0
    %2775 = vmatpush1.msra.mxu0 0.0
    %2776 = vmatprep.subr.mxu0 0.0
    %2777 = vmatpush1.msra.mxu0 0.0
    %2778 = vmatprep.subr.mxu0 0.0
    %2779 = vmatpush1.msra.mxu0 0.0
    %2780 = vmatprep.subr.mxu0 0.0
    %2781 = vmatpush1.msra.mxu0 0.0
    %2782 = vmatprep.subr.mxu0 0.0
    %2783 = vmatpush1.msra.mxu0 0.0
    %2784 = vmatprep.subr.mxu0 0.0
    %2785 = vmatpush1.msra.mxu0 0.0
    %2786 = vmatprep.subr.mxu0 0.0
    %2787 = vmatpush1.msra.mxu0 0.0
    %2788 = vmatprep.subr.mxu0 0.0
    %2789 = vmatpush1.msra.mxu0 0.0
    %2790 = vmatprep.subr.mxu0 0.0
    %2791 = vmatpush1.msra.mxu0 0.0
    %2792 = vmatprep.subr.mxu0 0.0
    %2793 = vmatpush1.msra.mxu0 0.0
    %2794 = vmatprep.subr.mxu0 0.0
    %2795 = vmatpush1.msra.mxu0 0.0
    %2796 = vmatprep.subr.mxu0 0.0
    %2797 = vmatpush1.msra.mxu0 0.0
    %2798 = vmatprep.subr.mxu0 0.0
    %2799 = vmatpush1.msra.mxu0 0.0
    %2800 = vmatprep.subr.mxu0 0.0
    %2801 = vmatpush1.msra.mxu0 0.0
    %2802 = vmatprep.subr.mxu0 0.0
    %2803 = vmatpush1.msra.mxu0 0.0
    %2804 = vmatprep.subr.mxu0 0.0
    %2805 = vmatpush1.msra.mxu0 0.0
    %2806 = vmatprep.subr.mxu0 0.0
    %2807 = vmatpush1.msra.mxu0 0.0
    %2808 = vmatprep.subr.mxu0 0.0
    %2809 = vmatpush1.msra.mxu0 0.0
    %2810 = vmatprep.subr.mxu0 0.0
    %2811 = vmatpush1.msra.mxu0 0.0
    %2812 = vmatprep.subr.mxu0 0.0
    %2813 = vmatpush1.msra.mxu0 0.0
    %2814 = vmatprep.subr.mxu0 0.0
    %2815 = vmatpush1.msra.mxu0 0.0
    %2816 = vmatprep.subr.mxu0 0.0
    %2817 = vmatpush1.msra.mxu0 0.0
    %2818 = vmatprep.mubr.f32.mxu0 0.0
    %2819 = vmatmul.mubr.f32.gmra.mrb[0].mxu0 %v2749
    %v2820 = vpop.f32.mrb[0].mxu0
    %v2821 = vadd.f32 %v2747, %v2820
    %v2822 = vpop.f32.mrb[0].mxu0
    %2823 = vmatprep.mubr.f32.mxu0 0.0
    %2824 = vmatmul.mubr.f32.gmra.mrb[0].mxu0 %v2752
    %v2825 = vpop.f32.mrb[0].mxu0
    %v2826 = vadd.f32 %v2747, %v2825
    %v2827 = vpop.f32.mrb[0].mxu0
    %2828 = vdwg.mxu0
    %2833 = vrot.lane.b32.xlu0 %v2740, 96
    %v2834 = vpop.permute.xlu0 %2833
    %2835 = vrot.lane.b32.xlu0 %v2741, 96
    %v2836 = vpop.permute.xlu0 %2835
    %2837 = vrot.lane.b32.xlu0 %v2742, 96
    %v2838 = vpop.permute.xlu0 %2837
    %2839 = vrot.lane.b32.xlu0 %v2743, 96
    %v2840 = vpop.permute.xlu0 %2839
    %2846 = vrot.lane.b32.xlu0 %v2747, 96
    %v2847 = vpop.permute.xlu0 %2846
    %v2850 = vsel %vm107, %v77, 0
    %v2853 = vsel %vm107, %v78, 0
    %v2856 = vsel %vm107, %v79, 0
    %v2859 = vsel %vm107, %v80, 0
    %2861 = vmatprep.subr.mxu0 0.0
    %2862 = vmatpush1.msra.mxu0 %v2834
    %2863 = vmatprep.subr.mxu0 0.0
    %2864 = vmatpush1.msra.mxu0 %v2836
    %2865 = vmatprep.subr.mxu0 0.0
    %2866 = vmatpush1.msra.mxu0 %v2838
    %2867 = vmatprep.subr.mxu0 0.0
    %2868 = vmatpush1.msra.mxu0 %v2840
    %2869 = vmatprep.subr.mxu0 0.0
    %2870 = vmatpush1.msra.mxu0 0.0
    %2871 = vmatprep.subr.mxu0 0.0
    %2872 = vmatpush1.msra.mxu0 0.0
    %2873 = vmatprep.subr.mxu0 0.0
    %2874 = vmatpush1.msra.mxu0 0.0
    %2875 = vmatprep.subr.mxu0 0.0
    %2876 = vmatpush1.msra.mxu0 0.0
    %2877 = vmatprep.subr.mxu0 0.0
    %2878 = vmatpush1.msra.mxu0 0.0
    %2879 = vmatprep.subr.mxu0 0.0
    %2880 = vmatpush1.msra.mxu0 0.0
    %2881 = vmatprep.subr.mxu0 0.0
    %2882 = vmatpush1.msra.mxu0 0.0
    %2883 = vmatprep.subr.mxu0 0.0
    %2884 = vmatpush1.msra.mxu0 0.0
    %2885 = vmatprep.subr.mxu0 0.0
    %2886 = vmatpush1.msra.mxu0 0.0
    %2887 = vmatprep.subr.mxu0 0.0
    %2888 = vmatpush1.msra.mxu0 0.0
    %2889 = vmatprep.subr.mxu0 0.0
    %2890 = vmatpush1.msra.mxu0 0.0
    %2891 = vmatprep.subr.mxu0 0.0
    %2892 = vmatpush1.msra.mxu0 0.0
    %2893 = vmatprep.subr.mxu0 0.0
    %2894 = vmatpush1.msra.mxu0 0.0
    %2895 = vmatprep.subr.mxu0 0.0
    %2896 = vmatpush1.msra.mxu0 0.0
    %2897 = vmatprep.subr.mxu0 0.0
    %2898 = vmatpush1.msra.mxu0 0.0
    %2899 = vmatprep.subr.mxu0 0.0
    %2900 = vmatpush1.msra.mxu0 0.0
    %2901 = vmatprep.subr.mxu0 0.0
    %2902 = vmatpush1.msra.mxu0 0.0
    %2903 = vmatprep.subr.mxu0 0.0
    %2904 = vmatpush1.msra.mxu0 0.0
    %2905 = vmatprep.subr.mxu0 0.0
    %2906 = vmatpush1.msra.mxu0 0.0
    %2907 = vmatprep.subr.mxu0 0.0
    %2908 = vmatpush1.msra.mxu0 0.0
    %2909 = vmatprep.subr.mxu0 0.0
    %2910 = vmatpush1.msra.mxu0 0.0
    %2911 = vmatprep.subr.mxu0 0.0
    %2912 = vmatpush1.msra.mxu0 0.0
    %2913 = vmatprep.subr.mxu0 0.0
    %2914 = vmatpush1.msra.mxu0 0.0
    %2915 = vmatprep.subr.mxu0 0.0
    %2916 = vmatpush1.msra.mxu0 0.0
    %2917 = vmatprep.subr.mxu0 0.0
    %2918 = vmatpush1.msra.mxu0 0.0
    %2919 = vmatprep.subr.mxu0 0.0
    %2920 = vmatpush1.msra.mxu0 0.0
    %2921 = vmatprep.subr.mxu0 0.0
    %2922 = vmatpush1.msra.mxu0 0.0
    %2923 = vmatprep.subr.mxu0 0.0
    %2924 = vmatpush1.msra.mxu0 0.0
    %2925 = vmatprep.mubr.f32.mxu0 0.0
    %2926 = vmatmul.mubr.f32.gmra.mrb[0].mxu0 %v2850
    %v2927 = vpop.f32.mrb[0].mxu0
    %v2928 = vadd.f32 %v2847, %v2927
    %v2929 = vpop.f32.mrb[0].mxu0
    %2930 = vmatprep.mubr.f32.mxu0 0.0
    %2931 = vmatmul.mubr.f32.gmra.mrb[0].mxu0 %v2853
    %v2932 = vpop.f32.mrb[0].mxu0
    %v2933 = vadd.f32 %v2847, %v2932
    %v2934 = vpop.f32.mrb[0].mxu0
    %2935 = vmatprep.mubr.f32.mxu0 0.0
    %2936 = vmatmul.mubr.f32.gmra.mrb[0].mxu0 %v2856
    %v2937 = vpop.f32.mrb[0].mxu0
    %v2938 = vadd.f32 %v2847, %v2937
    %v2939 = vpop.f32.mrb[0].mxu0
    %2940 = vmatprep.mubr.f32.mxu0 0.0
    %2941 = vmatmul.mubr.f32.gmra.mrb[0].mxu0 %v2859
    %v2942 = vpop.f32.mrb[0].mxu0
    %v2943 = vadd.f32 %v2847, %v2942
    %v2944 = vpop.f32.mrb[0].mxu0
    %2945 = vdwg.mxu0
    %v2947 = vsel %vm290, %v2821, 0
    %v2950 = vsel %vm290, %v2826, 0
    %v2953 = vsel %vm290, %v2928, 0
    %v2956 = vsel %vm290, %v2933, 0
    %v2959 = vsel %vm290, %v2938, 0
    %v2962 = vsel %vm290, %v2943, 0
    %2964 = vmatprep.subr.mxu0 0.0
    %2965 = vmatpush1.xpose.msra.mxu0 %v2953
    %2966 = vmatprep.subr.mxu0 0.0
    %2967 = vmatpush1.xpose.msra.mxu0 %v2956
    %2968 = vmatprep.subr.mxu0 0.0
    %2969 = vmatpush1.xpose.msra.mxu0 %v2959
    %2970 = vmatprep.subr.mxu0 0.0
    %2971 = vmatpush1.xpose.msra.mxu0 %v2962
    %2972 = vmatprep.subr.mxu0 0.0
    %2973 = vmatpush1.xpose.msra.mxu0 0.0
    %2974 = vmatprep.subr.mxu0 0.0
    %2975 = vmatpush1.xpose.msra.mxu0 0.0
    %2976 = vmatprep.subr.mxu0 0.0
    %2977 = vmatpush1.xpose.msra.mxu0 0.0
    %2978 = vmatprep.subr.mxu0 0.0
    %2979 = vmatpush1.xpose.msra.mxu0 0.0
    %2980 = vmatprep.subr.mxu0 0.0
    %2981 = vmatpush1.xpose.msra.mxu0 0.0
    %2982 = vmatprep.subr.mxu0 0.0
    %2983 = vmatpush1.xpose.msra.mxu0 0.0
    %2984 = vmatprep.subr.mxu0 0.0
    %2985 = vmatpush1.xpose.msra.mxu0 0.0
    %2986 = vmatprep.subr.mxu0 0.0
    %2987 = vmatpush1.xpose.msra.mxu0 0.0
    %2988 = vmatprep.subr.mxu0 0.0
    %2989 = vmatpush1.xpose.msra.mxu0 0.0
    %2990 = vmatprep.subr.mxu0 0.0
    %2991 = vmatpush1.xpose.msra.mxu0 0.0
    %2992 = vmatprep.subr.mxu0 0.0
    %2993 = vmatpush1.xpose.msra.mxu0 0.0
    %2994 = vmatprep.subr.mxu0 0.0
    %2995 = vmatpush1.xpose.msra.mxu0 0.0
    %2996 = vmatprep.subr.mxu0 0.0
    %2997 = vmatpush1.xpose.msra.mxu0 0.0
    %2998 = vmatprep.subr.mxu0 0.0
    %2999 = vmatpush1.xpose.msra.mxu0 0.0
    %3000 = vmatprep.subr.mxu0 0.0
    %3001 = vmatpush1.xpose.msra.mxu0 0.0
    %3002 = vmatprep.subr.mxu0 0.0
    %3003 = vmatpush1.xpose.msra.mxu0 0.0
    %3004 = vmatprep.subr.mxu0 0.0
    %3005 = vmatpush1.xpose.msra.mxu0 0.0
    %3006 = vmatprep.subr.mxu0 0.0
    %3007 = vmatpush1.xpose.msra.mxu0 0.0
    %3008 = vmatprep.subr.mxu0 0.0
    %3009 = vmatpush1.xpose.msra.mxu0 0.0
    %3010 = vmatprep.subr.mxu0 0.0
    %3011 = vmatpush1.xpose.msra.mxu0 0.0
    %3012 = vmatprep.subr.mxu0 0.0
    %3013 = vmatpush1.xpose.msra.mxu0 0.0
    %3014 = vmatprep.subr.mxu0 0.0
    %3015 = vmatpush1.xpose.msra.mxu0 0.0
    %3016 = vmatprep.subr.mxu0 0.0
    %3017 = vmatpush1.xpose.msra.mxu0 0.0
    %3018 = vmatprep.subr.mxu0 0.0
    %3019 = vmatpush1.xpose.msra.mxu0 0.0
    %3020 = vmatprep.subr.mxu0 0.0
    %3021 = vmatpush1.xpose.msra.mxu0 0.0
    %3022 = vmatprep.subr.mxu0 0.0
    %3023 = vmatpush1.xpose.msra.mxu0 0.0
    %3024 = vmatprep.subr.mxu0 0.0
    %3025 = vmatpush1.xpose.msra.mxu0 0.0
    %3026 = vmatprep.subr.mxu0 0.0
    %3027 = vmatpush1.xpose.msra.mxu0 0.0
    %3028 = vmatprep.mubr.f32.mxu0 0.0
    %3029 = vmatmul.mubr.f32.gmra.mrb[0].mxu0 %v2947
    %v3030 = vpop.f32.mrb[0].mxu0
    %v3031 = vadd.f32 %v93, %v3030
    %v3032 = vpop.f32.mrb[0].mxu0
    %3033 = vmatprep.mubr.f32.mxu0 0.0
    %3034 = vmatmul.mubr.f32.gmra.mrb[0].mxu0 %v2950
    %v3035 = vpop.f32.mrb[0].mxu0
    %v3036 = vadd.f32 %v94, %v3035
    %v3037 = vpop.f32.mrb[0].mxu0
    %3038 = vdwg.mxu0
    %v3039 = vsel %vm107, %v3031, -inf
    %3040 = vmax.xlane.f32.xlu0 %v3039
    %v3041 = vpop.xlane.xlu0 %3040
    %v3042 = vsel %vm107, %v3036, -inf
    %3043 = vmax.xlane.f32.xlu0 %v3042
    %v3044 = vpop.xlane.xlu0 %3043
    %v3045 = vsub.f32 %v3031, %v3041
    %v3046 = vsub.f32 %v3036, %v3044
    %v3047 = vmul.f32 %v3045, 1.442695
    %v3048 = vpow.pop %v3047
    %v3049 = vmul.f32 %v3046, 1.442695
    %v3050 = vpow.pop %v3049
    %v3051 = vsel %vm107, %v3048, 0.0
    %3052 = vadd.xlane.f32.xlu0 %v3051
    %v3053 = vpop.xlane.xlu0 %3052
    %v3054 = vsel %vm107, %v3050, 0.0
    %3055 = vadd.xlane.f32.xlu0 %v3054
    %v3056 = vpop.xlane.xlu0 %3055
    %v3057 = vrcp.pop %v3053
    %v3058 = vmul.f32 %v3048, %v3057
    %v3059 = vrcp.pop %v3056
    %v3060 = vmul.f32 %v3050, %v3059
    %3061 = vrot.lane.b32.xlu0 %v2928, 96
    %v3062 = vpop.permute.xlu0 %3061
    %3063 = vrot.lane.b32.xlu0 %v2933, 96
    %v3064 = vpop.permute.xlu0 %3063
    %3065 = vrot.lane.b32.xlu0 %v2938, 96
    %v3066 = vpop.permute.xlu0 %3065
    %3067 = vrot.lane.b32.xlu0 %v2943, 96
    %v3068 = vpop.permute.xlu0 %3067
    %v3074 = vsel %vm107, %v3058, 0
    %v3077 = vsel %vm107, %v3060, 0
    %3079 = vmatprep.subr.mxu0 0.0
    %3080 = vmatpush1.msra.mxu0 %v3062
    %3081 = vmatprep.subr.mxu0 0.0
    %3082 = vmatpush1.msra.mxu0 %v3064
    %3083 = vmatprep.subr.mxu0 0.0
    %3084 = vmatpush1.msra.mxu0 %v3066
    %3085 = vmatprep.subr.mxu0 0.0
    %3086 = vmatpush1.msra.mxu0 %v3068
    %3087 = vmatprep.subr.mxu0 0.0
    %3088 = vmatpush1.msra.mxu0 0.0
    %3089 = vmatprep.subr.mxu0 0.0
    %3090 = vmatpush1.msra.mxu0 0.0
    %3091 = vmatprep.subr.mxu0 0.0
    %3092 = vmatpush1.msra.mxu0 0.0
    %3093 = vmatprep.subr.mxu0 0.0
    %3094 = vmatpush1.msra.mxu0 0.0
    %3095 = vmatprep.subr.mxu0 0.0
    %3096 = vmatpush1.msra.mxu0 0.0
    %3097 = vmatprep.subr.mxu0 0.0
    %3098 = vmatpush1.msra.mxu0 0.0
    %3099 = vmatprep.subr.mxu0 0.0
    %3100 = vmatpush1.msra.mxu0 0.0
    %3101 = vmatprep.subr.mxu0 0.0
    %3102 = vmatpush1.msra.mxu0 0.0
    %3103 = vmatprep.subr.mxu0 0.0
    %3104 = vmatpush1.msra.mxu0 0.0
    %3105 = vmatprep.subr.mxu0 0.0
    %3106 = vmatpush1.msra.mxu0 0.0
    %3107 = vmatprep.subr.mxu0 0.0
    %3108 = vmatpush1.msra.mxu0 0.0
    %3109 = vmatprep.subr.mxu0 0.0
    %3110 = vmatpush1.msra.mxu0 0.0
    %3111 = vmatprep.subr.mxu0 0.0
    %3112 = vmatpush1.msra.mxu0 0.0
    %3113 = vmatprep.subr.mxu0 0.0
    %3114 = vmatpush1.msra.mxu0 0.0
    %3115 = vmatprep.subr.mxu0 0.0
    %3116 = vmatpush1.msra.mxu0 0.0
    %3117 = vmatprep.subr.mxu0 0.0
    %3118 = vmatpush1.msra.mxu0 0.0
    %3119 = vmatprep.subr.mxu0 0.0
    %3120 = vmatpush1.msra.mxu0 0.0
    %3121 = vmatprep.subr.mxu0 0.0
    %3122 = vmatpush1.msra.mxu0 0.0
    %3123 = vmatprep.subr.mxu0 0.0
    %3124 = vmatpush1.msra.mxu0 0.0
    %3125 = vmatprep.subr.mxu0 0.0
    %3126 = vmatpush1.msra.mxu0 0.0
    %3127 = vmatprep.subr.mxu0 0.0
    %3128 = vmatpush1.msra.mxu0 0.0
    %3129 = vmatprep.subr.mxu0 0.0
    %3130 = vmatpush1.msra.mxu0 0.0
    %3131 = vmatprep.subr.mxu0 0.0
    %3132 = vmatpush1.msra.mxu0 0.0
    %3133 = vmatprep.subr.mxu0 0.0
    %3134 = vmatpush1.msra.mxu0 0.0
    %3135 = vmatprep.subr.mxu0 0.0
    %3136 = vmatpush1.msra.mxu0 0.0
    %3137 = vmatprep.subr.mxu0 0.0
    %3138 = vmatpush1.msra.mxu0 0.0
    %3139 = vmatprep.subr.mxu0 0.0
    %3140 = vmatpush1.msra.mxu0 0.0
    %3141 = vmatprep.subr.mxu0 0.0
    %3142 = vmatpush1.msra.mxu0 0.0
    %3143 = vmatprep.mubr.f32.mxu0 0.0
    %3144 = vmatmul.mubr.f32.gmra.mrb[0].mxu0 %v3074
    %v3145 = vpop.f32.mrb[0].mxu0
    %v3146 = vadd.f32 0.0, %v3145
    %v3147 = vpop.f32.mrb[0].mxu0
    %3148 = vmatprep.mubr.f32.mxu0 0.0
    %3149 = vmatmul.mubr.f32.gmra.mrb[0].mxu0 %v3077
    %v3150 = vpop.f32.mrb[0].mxu0
    %v3151 = vadd.f32 0.0, %v3150
    %v3152 = vpop.f32.mrb[0].mxu0
    %3153 = vdwg.mxu0
    %3154 = vrot.lane.b32.xlu0 %v2821, 120
    %v3155 = vpop.permute.xlu0 %3154
    %3156 = vrot.lane.b32.xlu0 %v2826, 120
    %v3157 = vpop.permute.xlu0 %3156
    %3158 = vrot.lane.b32.xlu0 %v2928, 120
    %v3159 = vpop.permute.xlu0 %3158
    %3160 = vrot.lane.b32.xlu0 %v2933, 120
    %v3161 = vpop.permute.xlu0 %3160
    %3162 = vrot.lane.b32.xlu0 %v2938, 120
    %v3163 = vpop.permute.xlu0 %3162
    %3164 = vrot.lane.b32.xlu0 %v2943, 120
    %v3165 = vpop.permute.xlu0 %3164
    %v3166 = vsel %vm290, %v3155, 0
    %v3168 = vsel %vm290, %v3157, 0
    %v3170 = vsel %vm290, %v3159, 0
    %v3172 = vsel %vm290, %v3161, 0
    %v3174 = vsel %vm290, %v3163, 0
    %v3176 = vsel %vm290, %v3165, 0
    %3178 = vmatprep.subr.mxu0 0.0
    %3179 = vmatpush1.xpose.msra.mxu0 %v3170
    %3180 = vmatprep.subr.mxu0 0.0
    %3181 = vmatpush1.xpose.msra.mxu0 %v3172
    %3182 = vmatprep.subr.mxu0 0.0
    %3183 = vmatpush1.xpose.msra.mxu0 %v3174
    %3184 = vmatprep.subr.mxu0 0.0
    %3185 = vmatpush1.xpose.msra.mxu0 %v3176
    %3186 = vmatprep.subr.mxu0 0.0
    %3187 = vmatpush1.xpose.msra.mxu0 0.0
    %3188 = vmatprep.subr.mxu0 0.0
    %3189 = vmatpush1.xpose.msra.mxu0 0.0
    %3190 = vmatprep.subr.mxu0 0.0
    %3191 = vmatpush1.xpose.msra.mxu0 0.0
    %3192 = vmatprep.subr.mxu0 0.0
    %3193 = vmatpush1.xpose.msra.mxu0 0.0
    %3194 = vmatprep.subr.mxu0 0.0
    %3195 = vmatpush1.xpose.msra.mxu0 0.0
    %3196 = vmatprep.subr.mxu0 0.0
    %3197 = vmatpush1.xpose.msra.mxu0 0.0
    %3198 = vmatprep.subr.mxu0 0.0
    %3199 = vmatpush1.xpose.msra.mxu0 0.0
    %3200 = vmatprep.subr.mxu0 0.0
    %3201 = vmatpush1.xpose.msra.mxu0 0.0
    %3202 = vmatprep.subr.mxu0 0.0
    %3203 = vmatpush1.xpose.msra.mxu0 0.0
    %3204 = vmatprep.subr.mxu0 0.0
    %3205 = vmatpush1.xpose.msra.mxu0 0.0
    %3206 = vmatprep.subr.mxu0 0.0
    %3207 = vmatpush1.xpose.msra.mxu0 0.0
    %3208 = vmatprep.subr.mxu0 0.0
    %3209 = vmatpush1.xpose.msra.mxu0 0.0
    %3210 = vmatprep.subr.mxu0 0.0
    %3211 = vmatpush1.xpose.msra.mxu0 0.0
    %3212 = vmatprep.subr.mxu0 0.0
    %3213 = vmatpush1.xpose.msra.mxu0 0.0
    %3214 = vmatprep.subr.mxu0 0.0
    %3215 = vmatpush1.xpose.msra.mxu0 0.0
    %3216 = vmatprep.subr.mxu0 0.0
    %3217 = vmatpush1.xpose.msra.mxu0 0.0
    %3218 = vmatprep.subr.mxu0 0.0
    %3219 = vmatpush1.xpose.msra.mxu0 0.0
    %3220 = vmatprep.subr.mxu0 0.0
    %3221 = vmatpush1.xpose.msra.mxu0 0.0
    %3222 = vmatprep.subr.mxu0 0.0
    %3223 = vmatpush1.xpose.msra.mxu0 0.0
    %3224 = vmatprep.subr.mxu0 0.0
    %3225 = vmatpush1.xpose.msra.mxu0 0.0
    %3226 = vmatprep.subr.mxu0 0.0
    %3227 = vmatpush1.xpose.msra.mxu0 0.0
    %3228 = vmatprep.subr.mxu0 0.0
    %3229 = vmatpush1.xpose.msra.mxu0 0.0
    %3230 = vmatprep.subr.mxu0 0.0
    %3231 = vmatpush1.xpose.msra.mxu0 0.0
    %3232 = vmatprep.subr.mxu0 0.0
    %3233 = vmatpush1.xpose.msra.mxu0 0.0
    %3234 = vmatprep.subr.mxu0 0.0
    %3235 = vmatpush1.xpose.msra.mxu0 0.0
    %3236 = vmatprep.subr.mxu0 0.0
    %3237 = vmatpush1.xpose.msra.mxu0 0.0
    %3238 = vmatprep.subr.mxu0 0.0
    %3239 = vmatpush1.xpose.msra.mxu0 0.0
    %3240 = vmatprep.subr.mxu0 0.0
    %3241 = vmatpush1.xpose.msra.mxu0 0.0
    %3242 = vmatprep.mubr.f32.mxu0 0.0
    %3243 = vmatmul.mubr.f32.gmra.mrb[0].mxu0 %v3166
    %v3244 = vpop.f32.mrb[0].mxu0
    %v3245 = vadd.f32 %v93, %v3244
    %v3246 = vpop.f32.mrb[0].mxu0
    %3247 = vmatprep.mubr.f32.mxu0 0.0
    %3248 = vmatmul.mubr.f32.gmra.mrb[0].mxu0 %v3168
    %v3249 = vpop.f32.mrb[0].mxu0
    %v3250 = vadd.f32 %v94, %v3249
    %v3251 = vpop.f32.mrb[0].mxu0
    %3252 = vdwg.mxu0
    %v3253 = vsel %vm107, %v3245, -inf
    %3254 = vmax.xlane.f32.xlu0 %v3253
    %v3255 = vpop.xlane.xlu0 %3254
    %v3256 = vsel %vm107, %v3250, -inf
    %3257 = vmax.xlane.f32.xlu0 %v3256
    %v3258 = vpop.xlane.xlu0 %3257
    %v3259 = vsub.f32 %v3245, %v3255
    %v3260 = vsub.f32 %v3250, %v3258
    %v3261 = vmul.f32 %v3259, 1.442695
    %v3262 = vpow.pop %v3261
    %v3263 = vmul.f32 %v3260, 1.442695
    %v3264 = vpow.pop %v3263
    %v3265 = vsel %vm107, %v3262, 0.0
    %3266 = vadd.xlane.f32.xlu0 %v3265
    %v3267 = vpop.xlane.xlu0 %3266
    %v3268 = vsel %vm107, %v3264, 0.0
    %3269 = vadd.xlane.f32.xlu0 %v3268
    %v3270 = vpop.xlane.xlu0 %3269
    %v3271 = vrcp.pop %v3267
    %v3272 = vmul.f32 %v3262, %v3271
    %v3273 = vrcp.pop %v3270
    %v3274 = vmul.f32 %v3264, %v3273
    %3275 = vrot.lane.b32.xlu0 %v2928, 88
    %v3276 = vpop.permute.xlu0 %3275
    %3277 = vrot.lane.b32.xlu0 %v2933, 88
    %v3278 = vpop.permute.xlu0 %3277
    %3279 = vrot.lane.b32.xlu0 %v2938, 88
    %v3280 = vpop.permute.xlu0 %3279
    %3281 = vrot.lane.b32.xlu0 %v2943, 88
    %v3282 = vpop.permute.xlu0 %3281
    %v3288 = vsel %vm107, %v3272, 0
    %v3291 = vsel %vm107, %v3274, 0
    %3293 = vmatprep.subr.mxu0 0.0
    %3294 = vmatpush1.msra.mxu0 %v3276
    %3295 = vmatprep.subr.mxu0 0.0
    %3296 = vmatpush1.msra.mxu0 %v3278
    %3297 = vmatprep.subr.mxu0 0.0
    %3298 = vmatpush1.msra.mxu0 %v3280
    %3299 = vmatprep.subr.mxu0 0.0
    %3300 = vmatpush1.msra.mxu0 %v3282
    %3301 = vmatprep.subr.mxu0 0.0
    %3302 = vmatpush1.msra.mxu0 0.0
    %3303 = vmatprep.subr.mxu0 0.0
    %3304 = vmatpush1.msra.mxu0 0.0
    %3305 = vmatprep.subr.mxu0 0.0
    %3306 = vmatpush1.msra.mxu0 0.0
    %3307 = vmatprep.subr.mxu0 0.0
    %3308 = vmatpush1.msra.mxu0 0.0
    %3309 = vmatprep.subr.mxu0 0.0
    %3310 = vmatpush1.msra.mxu0 0.0
    %3311 = vmatprep.subr.mxu0 0.0
    %3312 = vmatpush1.msra.mxu0 0.0
    %3313 = vmatprep.subr.mxu0 0.0
    %3314 = vmatpush1.msra.mxu0 0.0
    %3315 = vmatprep.subr.mxu0 0.0
    %3316 = vmatpush1.msra.mxu0 0.0
    %3317 = vmatprep.subr.mxu0 0.0
    %3318 = vmatpush1.msra.mxu0 0.0
    %3319 = vmatprep.subr.mxu0 0.0
    %3320 = vmatpush1.msra.mxu0 0.0
    %3321 = vmatprep.subr.mxu0 0.0
    %3322 = vmatpush1.msra.mxu0 0.0
    %3323 = vmatprep.subr.mxu0 0.0
    %3324 = vmatpush1.msra.mxu0 0.0
    %3325 = vmatprep.subr.mxu0 0.0
    %3326 = vmatpush1.msra.mxu0 0.0
    %3327 = vmatprep.subr.mxu0 0.0
    %3328 = vmatpush1.msra.mxu0 0.0
    %3329 = vmatprep.subr.mxu0 0.0
    %3330 = vmatpush1.msra.mxu0 0.0
    %3331 = vmatprep.subr.mxu0 0.0
    %3332 = vmatpush1.msra.mxu0 0.0
    %3333 = vmatprep.subr.mxu0 0.0
    %3334 = vmatpush1.msra.mxu0 0.0
    %3335 = vmatprep.subr.mxu0 0.0
    %3336 = vmatpush1.msra.mxu0 0.0
    %3337 = vmatprep.subr.mxu0 0.0
    %3338 = vmatpush1.msra.mxu0 0.0
    %3339 = vmatprep.subr.mxu0 0.0
    %3340 = vmatpush1.msra.mxu0 0.0
    %3341 = vmatprep.subr.mxu0 0.0
    %3342 = vmatpush1.msra.mxu0 0.0
    %3343 = vmatprep.subr.mxu0 0.0
    %3344 = vmatpush1.msra.mxu0 0.0
    %3345 = vmatprep.subr.mxu0 0.0
    %3346 = vmatpush1.msra.mxu0 0.0
    %3347 = vmatprep.subr.mxu0 0.0
    %3348 = vmatpush1.msra.mxu0 0.0
    %3349 = vmatprep.subr.mxu0 0.0
    %3350 = vmatpush1.msra.mxu0 0.0
    %3351 = vmatprep.subr.mxu0 0.0
    %3352 = vmatpush1.msra.mxu0 0.0
    %3353 = vmatprep.subr.mxu0 0.0
    %3354 = vmatpush1.msra.mxu0 0.0
    %3355 = vmatprep.subr.mxu0 0.0
    %3356 = vmatpush1.msra.mxu0 0.0
    %3357 = vmatprep.mubr.f32.mxu0 0.0
    %3358 = vmatmul.mubr.f32.gmra.mrb[0].mxu0 %v3288
    %v3359 = vpop.f32.mrb[0].mxu0
    %v3360 = vadd.f32 0.0, %v3359
    %v3361 = vpop.f32.mrb[0].mxu0
    %3362 = vmatprep.mubr.f32.mxu0 0.0
    %3363 = vmatmul.mubr.f32.gmra.mrb[0].mxu0 %v3291
    %v3364 = vpop.f32.mrb[0].mxu0
    %v3365 = vadd.f32 0.0, %v3364
    %v3366 = vpop.f32.mrb[0].mxu0
    %3367 = vdwg.mxu0
    %3368 = vrot.lane.b32.xlu0 %v96, 64
    %v3369 = vpop.permute.xlu0 %3368
    %v3372 = vsel %vm290, %v3360, 0
    %v3375 = vsel %vm290, %v3365, 0
    %3377 = vmatprep.subr.mxu0 0.0
    %3378 = vmatpush1.msra.mxu0 %v3369
    %3379 = vmatprep.subr.mxu0 0.0
    %3380 = vmatpush1.msra.mxu0 0.0
    %3381 = vmatprep.subr.mxu0 0.0
    %3382 = vmatpush1.msra.mxu0 0.0
    %3383 = vmatprep.subr.mxu0 0.0
    %3384 = vmatpush1.msra.mxu0 0.0
    %3385 = vmatprep.subr.mxu0 0.0
    %3386 = vmatpush1.msra.mxu0 0.0
    %3387 = vmatprep.subr.mxu0 0.0
    %3388 = vmatpush1.msra.mxu0 0.0
    %3389 = vmatprep.subr.mxu0 0.0
    %3390 = vmatpush1.msra.mxu0 0.0
    %3391 = vmatprep.subr.mxu0 0.0
    %3392 = vmatpush1.msra.mxu0 0.0
    %3393 = vmatprep.subr.mxu0 0.0
    %3394 = vmatpush1.msra.mxu0 0.0
    %3395 = vmatprep.subr.mxu0 0.0
    %3396 = vmatpush1.msra.mxu0 0.0
    %3397 = vmatprep.subr.mxu0 0.0
    %3398 = vmatpush1.msra.mxu0 0.0
    %3399 = vmatprep.subr.mxu0 0.0
    %3400 = vmatpush1.msra.mxu0 0.0
    %3401 = vmatprep.subr.mxu0 0.0
    %3402 = vmatpush1.msra.mxu0 0.0
    %3403 = vmatprep.subr.mxu0 0.0
    %3404 = vmatpush1.msra.mxu0 0.0
    %3405 = vmatprep.subr.mxu0 0.0
    %3406 = vmatpush1.msra.mxu0 0.0
    %3407 = vmatprep.subr.mxu0 0.0
    %3408 = vmatpush1.msra.mxu0 0.0
    %3409 = vmatprep.subr.mxu0 0.0
    %3410 = vmatpush1.msra.mxu0 0.0
    %3411 = vmatprep.subr.mxu0 0.0
    %3412 = vmatpush1.msra.mxu0 0.0
    %3413 = vmatprep.subr.mxu0 0.0
    %3414 = vmatpush1.msra.mxu0 0.0
    %3415 = vmatprep.subr.mxu0 0.0
    %3416 = vmatpush1.msra.mxu0 0.0
    %3417 = vmatprep.subr.mxu0 0.0
    %3418 = vmatpush1.msra.mxu0 0.0
    %3419 = vmatprep.subr.mxu0 0.0
    %3420 = vmatpush1.msra.mxu0 0.0
    %3421 = vmatprep.subr.mxu0 0.0
    %3422 = vmatpush1.msra.mxu0 0.0
    %3423 = vmatprep.subr.mxu0 0.0
    %3424 = vmatpush1.msra.mxu0 0.0
    %3425 = vmatprep.subr.mxu0 0.0
    %3426 = vmatpush1.msra.mxu0 0.0
    %3427 = vmatprep.subr.mxu0 0.0
    %3428 = vmatpush1.msra.mxu0 0.0
    %3429 = vmatprep.subr.mxu0 0.0
    %3430 = vmatpush1.msra.mxu0 0.0
    %3431 = vmatprep.subr.mxu0 0.0
    %3432 = vmatpush1.msra.mxu0 0.0
    %3433 = vmatprep.subr.mxu0 0.0
    %3434 = vmatpush1.msra.mxu0 0.0
    %3435 = vmatprep.subr.mxu0 0.0
    %3436 = vmatpush1.msra.mxu0 0.0
    %3437 = vmatprep.subr.mxu0 0.0
    %3438 = vmatpush1.msra.mxu0 0.0
    %3439 = vmatprep.subr.mxu0 0.0
    %3440 = vmatpush1.msra.mxu0 0.0
    %3441 = vmatprep.mubr.f32.mxu0 0.0
    %3442 = vmatmul.mubr.f32.gmra.mrb[0].mxu0 %v3372
    %v3443 = vpop.f32.mrb[0].mxu0
    %v3444 = vadd.f32 0.0, %v3443
    %v3445 = vpop.f32.mrb[0].mxu0
    %3446 = vmatprep.mubr.f32.mxu0 0.0
    %3447 = vmatmul.mubr.f32.gmra.mrb[0].mxu0 %v3375
    %v3448 = vpop.f32.mrb[0].mxu0
    %v3449 = vadd.f32 0.0, %v3448
    %v3450 = vpop.f32.mrb[0].mxu0
    %3451 = vdwg.mxu0
    %3452 = vrot.lane.b32.xlu0 %v95, 64
    %v3453 = vpop.permute.xlu0 %3452
    %v3456 = vsel %vm290, %v3146, 0
    %v3459 = vsel %vm290, %v3151, 0
    %3461 = vmatprep.subr.mxu0 0.0
    %3462 = vmatpush1.msra.mxu0 %v3453
    %3463 = vmatprep.subr.mxu0 0.0
    %3464 = vmatpush1.msra.mxu0 0.0
    %3465 = vmatprep.subr.mxu0 0.0
    %3466 = vmatpush1.msra.mxu0 0.0
    %3467 = vmatprep.subr.mxu0 0.0
    %3468 = vmatpush1.msra.mxu0 0.0
    %3469 = vmatprep.subr.mxu0 0.0
    %3470 = vmatpush1.msra.mxu0 0.0
    %3471 = vmatprep.subr.mxu0 0.0
    %3472 = vmatpush1.msra.mxu0 0.0
    %3473 = vmatprep.subr.mxu0 0.0
    %3474 = vmatpush1.msra.mxu0 0.0
    %3475 = vmatprep.subr.mxu0 0.0
    %3476 = vmatpush1.msra.mxu0 0.0
    %3477 = vmatprep.subr.mxu0 0.0
    %3478 = vmatpush1.msra.mxu0 0.0
    %3479 = vmatprep.subr.mxu0 0.0
    %3480 = vmatpush1.msra.mxu0 0.0
    %3481 = vmatprep.subr.mxu0 0.0
    %3482 = vmatpush1.msra.mxu0 0.0
    %3483 = vmatprep.subr.mxu0 0.0
    %3484 = vmatpush1.msra.mxu0 0.0
    %3485 = vmatprep.subr.mxu0 0.0
    %3486 = vmatpush1.msra.mxu0 0.0
    %3487 = vmatprep.subr.mxu0 0.0
    %3488 = vmatpush1.msra.mxu0 0.0
    %3489 = vmatprep.subr.mxu0 0.0
    %3490 = vmatpush1.msra.mxu0 0.0
    %3491 = vmatprep.subr.mxu0 0.0
    %3492 = vmatpush1.msra.mxu0 0.0
    %3493 = vmatprep.subr.mxu0 0.0
    %3494 = vmatpush1.msra.mxu0 0.0
    %3495 = vmatprep.subr.mxu0 0.0
    %3496 = vmatpush1.msra.mxu0 0.0
    %3497 = vmatprep.subr.mxu0 0.0
    %3498 = vmatpush1.msra.mxu0 0.0
    %3499 = vmatprep.subr.mxu0 0.0
    %3500 = vmatpush1.msra.mxu0 0.0
    %3501 = vmatprep.subr.mxu0 0.0
    %3502 = vmatpush1.msra.mxu0 0.0
    %3503 = vmatprep.subr.mxu0 0.0
    %3504 = vmatpush1.msra.mxu0 0.0
    %3505 = vmatprep.subr.mxu0 0.0
    %3506 = vmatpush1.msra.mxu0 0.0
    %3507 = vmatprep.subr.mxu0 0.0
    %3508 = vmatpush1.msra.mxu0 0.0
    %3509 = vmatprep.subr.mxu0 0.0
    %3510 = vmatpush1.msra.mxu0 0.0
    %3511 = vmatprep.subr.mxu0 0.0
    %3512 = vmatpush1.msra.mxu0 0.0
    %3513 = vmatprep.subr.mxu0 0.0
    %3514 = vmatpush1.msra.mxu0 0.0
    %3515 = vmatprep.subr.mxu0 0.0
    %3516 = vmatpush1.msra.mxu0 0.0
    %3517 = vmatprep.subr.mxu0 0.0
    %3518 = vmatpush1.msra.mxu0 0.0
    %3519 = vmatprep.subr.mxu0 0.0
    %3520 = vmatpush1.msra.mxu0 0.0
    %3521 = vmatprep.subr.mxu0 0.0
    %3522 = vmatpush1.msra.mxu0 0.0
    %3523 = vmatprep.subr.mxu0 0.0
    %3524 = vmatpush1.msra.mxu0 0.0
    %3525 = vmatprep.mubr.f32.mxu0 0.0
    %3526 = vmatmul.mubr.f32.gmra.mrb[0].mxu0 %v3456
    %v3527 = vpop.f32.mrb[0].mxu0
    %v3528 = vadd.f32 %v3444, %v3527
    %v3529 = vpop.f32.mrb[0].mxu0
    %3530 = vmatprep.mubr.f32.mxu0 0.0
    %3531 = vmatmul.mubr.f32.gmra.mrb[0].mxu0 %v3459
    %v3532 = vpop.f32.mrb[0].mxu0
    %v3533 = vadd.f32 %v3449, %v3532
    %v3534 = vpop.f32.mrb[0].mxu0
    %3535 = vdwg.mxu0
    %3536 = vrot.lane.b32.xlu0 %v2821, 112
    %v3537 = vpop.permute.xlu0 %3536
    %3538 = vrot.lane.b32.xlu0 %v2826, 112
    %v3539 = vpop.permute.xlu0 %3538
    %3540 = vrot.lane.b32.xlu0 %v2928, 112
    %v3541 = vpop.permute.xlu0 %3540
    %3542 = vrot.lane.b32.xlu0 %v2933, 112
    %v3543 = vpop.permute.xlu0 %3542
    %3544 = vrot.lane.b32.xlu0 %v2938, 112
    %v3545 = vpop.permute.xlu0 %3544
    %3546 = vrot.lane.b32.xlu0 %v2943, 112
    %v3547 = vpop.permute.xlu0 %3546
    %v3548 = vsel %vm290, %v3537, 0
    %v3550 = vsel %vm290, %v3539, 0
    %v3552 = vsel %vm290, %v3541, 0
    %v3554 = vsel %vm290, %v3543, 0
    %v3556 = vsel %vm290, %v3545, 0
    %v3558 = vsel %vm290, %v3547, 0
    %3560 = vmatprep.subr.mxu0 0.0
    %3561 = vmatpush1.xpose.msra.mxu0 %v3552
    %3562 = vmatprep.subr.mxu0 0.0
    %3563 = vmatpush1.xpose.msra.mxu0 %v3554
    %3564 = vmatprep.subr.mxu0 0.0
    %3565 = vmatpush1.xpose.msra.mxu0 %v3556
    %3566 = vmatprep.subr.mxu0 0.0
    %3567 = vmatpush1.xpose.msra.mxu0 %v3558
    %3568 = vmatprep.subr.mxu0 0.0
    %3569 = vmatpush1.xpose.msra.mxu0 0.0
    %3570 = vmatprep.subr.mxu0 0.0
    %3571 = vmatpush1.xpose.msra.mxu0 0.0
    %3572 = vmatprep.subr.mxu0 0.0
    %3573 = vmatpush1.xpose.msra.mxu0 0.0
    %3574 = vmatprep.subr.mxu0 0.0
    %3575 = vmatpush1.xpose.msra.mxu0 0.0
    %3576 = vmatprep.subr.mxu0 0.0
    %3577 = vmatpush1.xpose.msra.mxu0 0.0
    %3578 = vmatprep.subr.mxu0 0.0
    %3579 = vmatpush1.xpose.msra.mxu0 0.0
    %3580 = vmatprep.subr.mxu0 0.0
    %3581 = vmatpush1.xpose.msra.mxu0 0.0
    %3582 = vmatprep.subr.mxu0 0.0
    %3583 = vmatpush1.xpose.msra.mxu0 0.0
    %3584 = vmatprep.subr.mxu0 0.0
    %3585 = vmatpush1.xpose.msra.mxu0 0.0
    %3586 = vmatprep.subr.mxu0 0.0
    %3587 = vmatpush1.xpose.msra.mxu0 0.0
    %3588 = vmatprep.subr.mxu0 0.0
    %3589 = vmatpush1.xpose.msra.mxu0 0.0
    %3590 = vmatprep.subr.mxu0 0.0
    %3591 = vmatpush1.xpose.msra.mxu0 0.0
    %3592 = vmatprep.subr.mxu0 0.0
    %3593 = vmatpush1.xpose.msra.mxu0 0.0
    %3594 = vmatprep.subr.mxu0 0.0
    %3595 = vmatpush1.xpose.msra.mxu0 0.0
    %3596 = vmatprep.subr.mxu0 0.0
    %3597 = vmatpush1.xpose.msra.mxu0 0.0
    %3598 = vmatprep.subr.mxu0 0.0
    %3599 = vmatpush1.xpose.msra.mxu0 0.0
    %3600 = vmatprep.subr.mxu0 0.0
    %3601 = vmatpush1.xpose.msra.mxu0 0.0
    %3602 = vmatprep.subr.mxu0 0.0
    %3603 = vmatpush1.xpose.msra.mxu0 0.0
    %3604 = vmatprep.subr.mxu0 0.0
    %3605 = vmatpush1.xpose.msra.mxu0 0.0
    %3606 = vmatprep.subr.mxu0 0.0
    %3607 = vmatpush1.xpose.msra.mxu0 0.0
    %3608 = vmatprep.subr.mxu0 0.0
    %3609 = vmatpush1.xpose.msra.mxu0 0.0
    %3610 = vmatprep.subr.mxu0 0.0
    %3611 = vmatpush1.xpose.msra.mxu0 0.0
    %3612 = vmatprep.subr.mxu0 0.0
    %3613 = vmatpush1.xpose.msra.mxu0 0.0
    %3614 = vmatprep.subr.mxu0 0.0
    %3615 = vmatpush1.xpose.msra.mxu0 0.0
    %3616 = vmatprep.subr.mxu0 0.0
    %3617 = vmatpush1.xpose.msra.mxu0 0.0
    %3618 = vmatprep.subr.mxu0 0.0
    %3619 = vmatpush1.xpose.msra.mxu0 0.0
    %3620 = vmatprep.subr.mxu0 0.0
    %3621 = vmatpush1.xpose.msra.mxu0 0.0
    %3622 = vmatprep.subr.mxu0 0.0
    %3623 = vmatpush1.xpose.msra.mxu0 0.0
    %3624 = vmatprep.mubr.f32.mxu0 0.0
    %3625 = vmatmul.mubr.f32.gmra.mrb[0].mxu0 %v3548
    %v3626 = vpop.f32.mrb[0].mxu0
    %v3627 = vadd.f32 %v93, %v3626
    %v3628 = vpop.f32.mrb[0].mxu0
    %3629 = vmatprep.mubr.f32.mxu0 0.0
    %3630 = vmatmul.mubr.f32.gmra.mrb[0].mxu0 %v3550
    %v3631 = vpop.f32.mrb[0].mxu0
    %v3632 = vadd.f32 %v94, %v3631
    %v3633 = vpop.f32.mrb[0].mxu0
    %3634 = vdwg.mxu0
    %v3635 = vsel %vm107, %v3627, -inf
    %3636 = vmax.xlane.f32.xlu0 %v3635
    %v3637 = vpop.xlane.xlu0 %3636
    %v3638 = vsel %vm107, %v3632, -inf
    %3639 = vmax.xlane.f32.xlu0 %v3638
    %v3640 = vpop.xlane.xlu0 %3639
    %v3641 = vsub.f32 %v3627, %v3637
    %v3642 = vsub.f32 %v3632, %v3640
    %v3643 = vmul.f32 %v3641, 1.442695
    %v3644 = vpow.pop %v3643
    %v3645 = vmul.f32 %v3642, 1.442695
    %v3646 = vpow.pop %v3645
    %v3647 = vsel %vm107, %v3644, 0.0
    %3648 = vadd.xlane.f32.xlu0 %v3647
    %v3649 = vpop.xlane.xlu0 %3648
    %v3650 = vsel %vm107, %v3646, 0.0
    %3651 = vadd.xlane.f32.xlu0 %v3650
    %v3652 = vpop.xlane.xlu0 %3651
    %v3653 = vrcp.pop %v3649
    %v3654 = vmul.f32 %v3644, %v3653
    %v3655 = vrcp.pop %v3652
    %v3656 = vmul.f32 %v3646, %v3655
    %3657 = vrot.lane.b32.xlu0 %v2928, 80
    %v3658 = vpop.permute.xlu0 %3657
    %3659 = vrot.lane.b32.xlu0 %v2933, 80
    %v3660 = vpop.permute.xlu0 %3659
    %3661 = vrot.lane.b32.xlu0 %v2938, 80
    %v3662 = vpop.permute.xlu0 %3661
    %3663 = vrot.lane.b32.xlu0 %v2943, 80
    %v3664 = vpop.permute.xlu0 %3663
    %v3670 = vsel %vm107, %v3654, 0
    %v3673 = vsel %vm107, %v3656, 0
    %3675 = vmatprep.subr.mxu0 0.0
    %3676 = vmatpush1.msra.mxu0 %v3658
    %3677 = vmatprep.subr.mxu0 0.0
    %3678 = vmatpush1.msra.mxu0 %v3660
    %3679 = vmatprep.subr.mxu0 0.0
    %3680 = vmatpush1.msra.mxu0 %v3662
    %3681 = vmatprep.subr.mxu0 0.0
    %3682 = vmatpush1.msra.mxu0 %v3664
    %3683 = vmatprep.subr.mxu0 0.0
    %3684 = vmatpush1.msra.mxu0 0.0
    %3685 = vmatprep.subr.mxu0 0.0
    %3686 = vmatpush1.msra.mxu0 0.0
    %3687 = vmatprep.subr.mxu0 0.0
    %3688 = vmatpush1.msra.mxu0 0.0
    %3689 = vmatprep.subr.mxu0 0.0
    %3690 = vmatpush1.msra.mxu0 0.0
    %3691 = vmatprep.subr.mxu0 0.0
    %3692 = vmatpush1.msra.mxu0 0.0
    %3693 = vmatprep.subr.mxu0 0.0
    %3694 = vmatpush1.msra.mxu0 0.0
    %3695 = vmatprep.subr.mxu0 0.0
    %3696 = vmatpush1.msra.mxu0 0.0
    %3697 = vmatprep.subr.mxu0 0.0
    %3698 = vmatpush1.msra.mxu0 0.0
    %3699 = vmatprep.subr.mxu0 0.0
    %3700 = vmatpush1.msra.mxu0 0.0
    %3701 = vmatprep.subr.mxu0 0.0
    %3702 = vmatpush1.msra.mxu0 0.0
    %3703 = vmatprep.subr.mxu0 0.0
    %3704 = vmatpush1.msra.mxu0 0.0
    %3705 = vmatprep.subr.mxu0 0.0
    %3706 = vmatpush1.msra.mxu0 0.0
    %3707 = vmatprep.subr.mxu0 0.0
    %3708 = vmatpush1.msra.mxu0 0.0
    %3709 = vmatprep.subr.mxu0 0.0
    %3710 = vmatpush1.msra.mxu0 0.0
    %3711 = vmatprep.subr.mxu0 0.0
    %3712 = vmatpush1.msra.mxu0 0.0
    %3713 = vmatprep.subr.mxu0 0.0
    %3714 = vmatpush1.msra.mxu0 0.0
    %3715 = vmatprep.subr.mxu0 0.0
    %3716 = vmatpush1.msra.mxu0 0.0
    %3717 = vmatprep.subr.mxu0 0.0
    %3718 = vmatpush1.msra.mxu0 0.0
    %3719 = vmatprep.subr.mxu0 0.0
    %3720 = vmatpush1.msra.mxu0 0.0
    %3721 = vmatprep.subr.mxu0 0.0
    %3722 = vmatpush1.msra.mxu0 0.0
    %3723 = vmatprep.subr.mxu0 0.0
    %3724 = vmatpush1.msra.mxu0 0.0
    %3725 = vmatprep.subr.mxu0 0.0
    %3726 = vmatpush1.msra.mxu0 0.0
    %3727 = vmatprep.subr.mxu0 0.0
    %3728 = vmatpush1.msra.mxu0 0.0
    %3729 = vmatprep.subr.mxu0 0.0
    %3730 = vmatpush1.msra.mxu0 0.0
    %3731 = vmatprep.subr.mxu0 0.0
    %3732 = vmatpush1.msra.mxu0 0.0
    %3733 = vmatprep.subr.mxu0 0.0
    %3734 = vmatpush1.msra.mxu0 0.0
    %3735 = vmatprep.subr.mxu0 0.0
    %3736 = vmatpush1.msra.mxu0 0.0
    %3737 = vmatprep.subr.mxu0 0.0
    %3738 = vmatpush1.msra.mxu0 0.0
    %3739 = vmatprep.mubr.f32.mxu0 0.0
    %3740 = vmatmul.mubr.f32.gmra.mrb[0].mxu0 %v3670
    %v3741 = vpop.f32.mrb[0].mxu0
    %v3742 = vadd.f32 0.0, %v3741
    %v3743 = vpop.f32.mrb[0].mxu0
    %3744 = vmatprep.mubr.f32.mxu0 0.0
    %3745 = vmatmul.mubr.f32.gmra.mrb[0].mxu0 %v3673
    %v3746 = vpop.f32.mrb[0].mxu0
    %v3747 = vadd.f32 0.0, %v3746
    %v3748 = vpop.f32.mrb[0].mxu0
    %3749 = vdwg.mxu0
    %3750 = vrot.lane.b32.xlu0 %v97, 64
    %v3751 = vpop.permute.xlu0 %3750
    %v3754 = vsel %vm290, %v3742, 0
    %v3757 = vsel %vm290, %v3747, 0
    %3759 = vmatprep.subr.mxu0 0.0
    %3760 = vmatpush1.msra.mxu0 %v3751
    %3761 = vmatprep.subr.mxu0 0.0
    %3762 = vmatpush1.msra.mxu0 0.0
    %3763 = vmatprep.subr.mxu0 0.0
    %3764 = vmatpush1.msra.mxu0 0.0
    %3765 = vmatprep.subr.mxu0 0.0
    %3766 = vmatpush1.msra.mxu0 0.0
    %3767 = vmatprep.subr.mxu0 0.0
    %3768 = vmatpush1.msra.mxu0 0.0
    %3769 = vmatprep.subr.mxu0 0.0
    %3770 = vmatpush1.msra.mxu0 0.0
    %3771 = vmatprep.subr.mxu0 0.0
    %3772 = vmatpush1.msra.mxu0 0.0
    %3773 = vmatprep.subr.mxu0 0.0
    %3774 = vmatpush1.msra.mxu0 0.0
    %3775 = vmatprep.subr.mxu0 0.0
    %3776 = vmatpush1.msra.mxu0 0.0
    %3777 = vmatprep.subr.mxu0 0.0
    %3778 = vmatpush1.msra.mxu0 0.0
    %3779 = vmatprep.subr.mxu0 0.0
    %3780 = vmatpush1.msra.mxu0 0.0
    %3781 = vmatprep.subr.mxu0 0.0
    %3782 = vmatpush1.msra.mxu0 0.0
    %3783 = vmatprep.subr.mxu0 0.0
    %3784 = vmatpush1.msra.mxu0 0.0
    %3785 = vmatprep.subr.mxu0 0.0
    %3786 = vmatpush1.msra.mxu0 0.0
    %3787 = vmatprep.subr.mxu0 0.0
    %3788 = vmatpush1.msra.mxu0 0.0
    %3789 = vmatprep.subr.mxu0 0.0
    %3790 = vmatpush1.msra.mxu0 0.0
    %3791 = vmatprep.subr.mxu0 0.0
    %3792 = vmatpush1.msra.mxu0 0.0
    %3793 = vmatprep.subr.mxu0 0.0
    %3794 = vmatpush1.msra.mxu0 0.0
    %3795 = vmatprep.subr.mxu0 0.0
    %3796 = vmatpush1.msra.mxu0 0.0
    %3797 = vmatprep.subr.mxu0 0.0
    %3798 = vmatpush1.msra.mxu0 0.0
    %3799 = vmatprep.subr.mxu0 0.0
    %3800 = vmatpush1.msra.mxu0 0.0
    %3801 = vmatprep.subr.mxu0 0.0
    %3802 = vmatpush1.msra.mxu0 0.0
    %3803 = vmatprep.subr.mxu0 0.0
    %3804 = vmatpush1.msra.mxu0 0.0
    %3805 = vmatprep.subr.mxu0 0.0
    %3806 = vmatpush1.msra.mxu0 0.0
    %3807 = vmatprep.subr.mxu0 0.0
    %3808 = vmatpush1.msra.mxu0 0.0
    %3809 = vmatprep.subr.mxu0 0.0
    %3810 = vmatpush1.msra.mxu0 0.0
    %3811 = vmatprep.subr.mxu0 0.0
    %3812 = vmatpush1.msra.mxu0 0.0
    %3813 = vmatprep.subr.mxu0 0.0
    %3814 = vmatpush1.msra.mxu0 0.0
    %3815 = vmatprep.subr.mxu0 0.0
    %3816 = vmatpush1.msra.mxu0 0.0
    %3817 = vmatprep.subr.mxu0 0.0
    %3818 = vmatpush1.msra.mxu0 0.0
    %3819 = vmatprep.subr.mxu0 0.0
    %3820 = vmatpush1.msra.mxu0 0.0
    %3821 = vmatprep.subr.mxu0 0.0
    %3822 = vmatpush1.msra.mxu0 0.0
    %3823 = vmatprep.mubr.f32.mxu0 0.0
    %3824 = vmatmul.mubr.f32.gmra.mrb[0].mxu0 %v3754
    %v3825 = vpop.f32.mrb[0].mxu0
    %v3826 = vadd.f32 0.0, %v3825
    %v3827 = vpop.f32.mrb[0].mxu0
    %3828 = vmatprep.mubr.f32.mxu0 0.0
    %3829 = vmatmul.mubr.f32.gmra.mrb[0].mxu0 %v3757
    %v3830 = vpop.f32.mrb[0].mxu0
    %v3831 = vadd.f32 0.0, %v3830
    %v3832 = vpop.f32.mrb[0].mxu0
    %3833 = vdwg.mxu0
    %v3834 = vadd.f32 %v3528, %v3826
    %v3835 = vadd.f32 %v3533, %v3831
    %3836 = vrot.lane.b32.xlu0 %v2821, 104
    %v3837 = vpop.permute.xlu0 %3836
    %3838 = vrot.lane.b32.xlu0 %v2826, 104
    %v3839 = vpop.permute.xlu0 %3838
    %3840 = vrot.lane.b32.xlu0 %v2928, 104
    %v3841 = vpop.permute.xlu0 %3840
    %3842 = vrot.lane.b32.xlu0 %v2933, 104
    %v3843 = vpop.permute.xlu0 %3842
    %3844 = vrot.lane.b32.xlu0 %v2938, 104
    %v3845 = vpop.permute.xlu0 %3844
    %3846 = vrot.lane.b32.xlu0 %v2943, 104
    %v3847 = vpop.permute.xlu0 %3846
    %v3848 = vsel %vm290, %v3837, 0
    %v3850 = vsel %vm290, %v3839, 0
    %v3852 = vsel %vm290, %v3841, 0
    %v3854 = vsel %vm290, %v3843, 0
    %v3856 = vsel %vm290, %v3845, 0
    %v3858 = vsel %vm290, %v3847, 0
    %3860 = vmatprep.subr.mxu0 0.0
    %3861 = vmatpush1.xpose.msra.mxu0 %v3852
    %3862 = vmatprep.subr.mxu0 0.0
    %3863 = vmatpush1.xpose.msra.mxu0 %v3854
    %3864 = vmatprep.subr.mxu0 0.0
    %3865 = vmatpush1.xpose.msra.mxu0 %v3856
    %3866 = vmatprep.subr.mxu0 0.0
    %3867 = vmatpush1.xpose.msra.mxu0 %v3858
    %3868 = vmatprep.subr.mxu0 0.0
    %3869 = vmatpush1.xpose.msra.mxu0 0.0
    %3870 = vmatprep.subr.mxu0 0.0
    %3871 = vmatpush1.xpose.msra.mxu0 0.0
    %3872 = vmatprep.subr.mxu0 0.0
    %3873 = vmatpush1.xpose.msra.mxu0 0.0
    %3874 = vmatprep.subr.mxu0 0.0
    %3875 = vmatpush1.xpose.msra.mxu0 0.0
    %3876 = vmatprep.subr.mxu0 0.0
    %3877 = vmatpush1.xpose.msra.mxu0 0.0
    %3878 = vmatprep.subr.mxu0 0.0
    %3879 = vmatpush1.xpose.msra.mxu0 0.0
    %3880 = vmatprep.subr.mxu0 0.0
    %3881 = vmatpush1.xpose.msra.mxu0 0.0
    %3882 = vmatprep.subr.mxu0 0.0
    %3883 = vmatpush1.xpose.msra.mxu0 0.0
    %3884 = vmatprep.subr.mxu0 0.0
    %3885 = vmatpush1.xpose.msra.mxu0 0.0
    %3886 = vmatprep.subr.mxu0 0.0
    %3887 = vmatpush1.xpose.msra.mxu0 0.0
    %3888 = vmatprep.subr.mxu0 0.0
    %3889 = vmatpush1.xpose.msra.mxu0 0.0
    %3890 = vmatprep.subr.mxu0 0.0
    %3891 = vmatpush1.xpose.msra.mxu0 0.0
    %3892 = vmatprep.subr.mxu0 0.0
    %3893 = vmatpush1.xpose.msra.mxu0 0.0
    %3894 = vmatprep.subr.mxu0 0.0
    %3895 = vmatpush1.xpose.msra.mxu0 0.0
    %3896 = vmatprep.subr.mxu0 0.0
    %3897 = vmatpush1.xpose.msra.mxu0 0.0
    %3898 = vmatprep.subr.mxu0 0.0
    %3899 = vmatpush1.xpose.msra.mxu0 0.0
    %3900 = vmatprep.subr.mxu0 0.0
    %3901 = vmatpush1.xpose.msra.mxu0 0.0
    %3902 = vmatprep.subr.mxu0 0.0
    %3903 = vmatpush1.xpose.msra.mxu0 0.0
    %3904 = vmatprep.subr.mxu0 0.0
    %3905 = vmatpush1.xpose.msra.mxu0 0.0
    %3906 = vmatprep.subr.mxu0 0.0
    %3907 = vmatpush1.xpose.msra.mxu0 0.0
    %3908 = vmatprep.subr.mxu0 0.0
    %3909 = vmatpush1.xpose.msra.mxu0 0.0
    %3910 = vmatprep.subr.mxu0 0.0
    %3911 = vmatpush1.xpose.msra.mxu0 0.0
    %3912 = vmatprep.subr.mxu0 0.0
    %3913 = vmatpush1.xpose.msra.mxu0 0.0
    %3914 = vmatprep.subr.mxu0 0.0
    %3915 = vmatpush1.xpose.msra.mxu0 0.0
    %3916 = vmatprep.subr.mxu0 0.0
    %3917 = vmatpush1.xpose.msra.mxu0 0.0
    %3918 = vmatprep.subr.mxu0 0.0
    %3919 = vmatpush1.xpose.msra.mxu0 0.0
    %3920 = vmatprep.subr.mxu0 0.0
    %3921 = vmatpush1.xpose.msra.mxu0 0.0
    %3922 = vmatprep.subr.mxu0 0.0
    %3923 = vmatpush1.xpose.msra.mxu0 0.0
    %3924 = vmatprep.mubr.f32.mxu0 0.0
    %3925 = vmatmul.mubr.f32.gmra.mrb[0].mxu0 %v3848
    %v3926 = vpop.f32.mrb[0].mxu0
    %v3927 = vadd.f32 %v93, %v3926
    %v3928 = vpop.f32.mrb[0].mxu0
    %3929 = vmatprep.mubr.f32.mxu0 0.0
    %3930 = vmatmul.mubr.f32.gmra.mrb[0].mxu0 %v3850
    %v3931 = vpop.f32.mrb[0].mxu0
    %v3932 = vadd.f32 %v94, %v3931
    %v3933 = vpop.f32.mrb[0].mxu0
    %3934 = vdwg.mxu0
    %v3935 = vsel %vm107, %v3927, -inf
    %3936 = vmax.xlane.f32.xlu0 %v3935
    %v3937 = vpop.xlane.xlu0 %3936
    %v3938 = vsel %vm107, %v3932, -inf
    %3939 = vmax.xlane.f32.xlu0 %v3938
    %v3940 = vpop.xlane.xlu0 %3939
    %v3941 = vsub.f32 %v3927, %v3937
    %v3942 = vsub.f32 %v3932, %v3940
    %v3943 = vmul.f32 %v3941, 1.442695
    %v3944 = vpow.pop %v3943
    %v3945 = vmul.f32 %v3942, 1.442695
    %v3946 = vpow.pop %v3945
    %v3947 = vsel %vm107, %v3944, 0.0
    %3948 = vadd.xlane.f32.xlu0 %v3947
    %v3949 = vpop.xlane.xlu0 %3948
    %v3950 = vsel %vm107, %v3946, 0.0
    %3951 = vadd.xlane.f32.xlu0 %v3950
    %v3952 = vpop.xlane.xlu0 %3951
    %v3953 = vrcp.pop %v3949
    %v3954 = vmul.f32 %v3944, %v3953
    %v3955 = vrcp.pop %v3952
    %v3956 = vmul.f32 %v3946, %v3955
    %3957 = vrot.lane.b32.xlu0 %v2928, 72
    %v3958 = vpop.permute.xlu0 %3957
    %3959 = vrot.lane.b32.xlu0 %v2933, 72
    %v3960 = vpop.permute.xlu0 %3959
    %3961 = vrot.lane.b32.xlu0 %v2938, 72
    %v3962 = vpop.permute.xlu0 %3961
    %3963 = vrot.lane.b32.xlu0 %v2943, 72
    %v3964 = vpop.permute.xlu0 %3963
    %v3970 = vsel %vm107, %v3954, 0
    %v3973 = vsel %vm107, %v3956, 0
    %3975 = vmatprep.subr.mxu0 0.0
    %3976 = vmatpush1.msra.mxu0 %v3958
    %3977 = vmatprep.subr.mxu0 0.0
    %3978 = vmatpush1.msra.mxu0 %v3960
    %3979 = vmatprep.subr.mxu0 0.0
    %3980 = vmatpush1.msra.mxu0 %v3962
    %3981 = vmatprep.subr.mxu0 0.0
    %3982 = vmatpush1.msra.mxu0 %v3964
    %3983 = vmatprep.subr.mxu0 0.0
    %3984 = vmatpush1.msra.mxu0 0.0
    %3985 = vmatprep.subr.mxu0 0.0
    %3986 = vmatpush1.msra.mxu0 0.0
    %3987 = vmatprep.subr.mxu0 0.0
    %3988 = vmatpush1.msra.mxu0 0.0
    %3989 = vmatprep.subr.mxu0 0.0
    %3990 = vmatpush1.msra.mxu0 0.0
    %3991 = vmatprep.subr.mxu0 0.0
    %3992 = vmatpush1.msra.mxu0 0.0
    %3993 = vmatprep.subr.mxu0 0.0
    %3994 = vmatpush1.msra.mxu0 0.0
    %3995 = vmatprep.subr.mxu0 0.0
    %3996 = vmatpush1.msra.mxu0 0.0
    %3997 = vmatprep.subr.mxu0 0.0
    %3998 = vmatpush1.msra.mxu0 0.0
    %3999 = vmatprep.subr.mxu0 0.0
    %4000 = vmatpush1.msra.mxu0 0.0
    %4001 = vmatprep.subr.mxu0 0.0
    %4002 = vmatpush1.msra.mxu0 0.0
    %4003 = vmatprep.subr.mxu0 0.0
    %4004 = vmatpush1.msra.mxu0 0.0
    %4005 = vmatprep.subr.mxu0 0.0
    %4006 = vmatpush1.msra.mxu0 0.0
    %4007 = vmatprep.subr.mxu0 0.0
    %4008 = vmatpush1.msra.mxu0 0.0
    %4009 = vmatprep.subr.mxu0 0.0
    %4010 = vmatpush1.msra.mxu0 0.0
    %4011 = vmatprep.subr.mxu0 0.0
    %4012 = vmatpush1.msra.mxu0 0.0
    %4013 = vmatprep.subr.mxu0 0.0
    %4014 = vmatpush1.msra.mxu0 0.0
    %4015 = vmatprep.subr.mxu0 0.0
    %4016 = vmatpush1.msra.mxu0 0.0
    %4017 = vmatprep.subr.mxu0 0.0
    %4018 = vmatpush1.msra.mxu0 0.0
    %4019 = vmatprep.subr.mxu0 0.0
    %4020 = vmatpush1.msra.mxu0 0.0
    %4021 = vmatprep.subr.mxu0 0.0
    %4022 = vmatpush1.msra.mxu0 0.0
    %4023 = vmatprep.subr.mxu0 0.0
    %4024 = vmatpush1.msra.mxu0 0.0
    %4025 = vmatprep.subr.mxu0 0.0
    %4026 = vmatpush1.msra.mxu0 0.0
    %4027 = vmatprep.subr.mxu0 0.0
    %4028 = vmatpush1.msra.mxu0 0.0
    %4029 = vmatprep.subr.mxu0 0.0
    %4030 = vmatpush1.msra.mxu0 0.0
    %4031 = vmatprep.subr.mxu0 0.0
    %4032 = vmatpush1.msra.mxu0 0.0
    %4033 = vmatprep.subr.mxu0 0.0
    %4034 = vmatpush1.msra.mxu0 0.0
    %4035 = vmatprep.subr.mxu0 0.0
    %4036 = vmatpush1.msra.mxu0 0.0
    %4037 = vmatprep.subr.mxu0 0.0
    %4038 = vmatpush1.msra.mxu0 0.0
    %4039 = vmatprep.mubr.f32.mxu0 0.0
    %4040 = vmatmul.mubr.f32.gmra.mrb[0].mxu0 %v3970
    %v4041 = vpop.f32.mrb[0].mxu0
    %v4042 = vadd.f32 0.0, %v4041
    %v4043 = vpop.f32.mrb[0].mxu0
    %4044 = vmatprep.mubr.f32.mxu0 0.0
    %4045 = vmatmul.mubr.f32.gmra.mrb[0].mxu0 %v3973
    %v4046 = vpop.f32.mrb[0].mxu0
    %v4047 = vadd.f32 0.0, %v4046
    %v4048 = vpop.f32.mrb[0].mxu0
    %4049 = vdwg.mxu0
    %4050 = vrot.lane.b32.xlu0 %v98, 64
    %v4051 = vpop.permute.xlu0 %4050
    %v4054 = vsel %vm290, %v4042, 0
    %v4057 = vsel %vm290, %v4047, 0
    %4059 = vmatprep.subr.mxu0 0.0
    %4060 = vmatpush1.msra.mxu0 %v4051
    %4061 = vmatprep.subr.mxu0 0.0
    %4062 = vmatpush1.msra.mxu0 0.0
    %4063 = vmatprep.subr.mxu0 0.0
    %4064 = vmatpush1.msra.mxu0 0.0
    %4065 = vmatprep.subr.mxu0 0.0
    %4066 = vmatpush1.msra.mxu0 0.0
    %4067 = vmatprep.subr.mxu0 0.0
    %4068 = vmatpush1.msra.mxu0 0.0
    %4069 = vmatprep.subr.mxu0 0.0
    %4070 = vmatpush1.msra.mxu0 0.0
    %4071 = vmatprep.subr.mxu0 0.0
    %4072 = vmatpush1.msra.mxu0 0.0
    %4073 = vmatprep.subr.mxu0 0.0
    %4074 = vmatpush1.msra.mxu0 0.0
    %4075 = vmatprep.subr.mxu0 0.0
    %4076 = vmatpush1.msra.mxu0 0.0
    %4077 = vmatprep.subr.mxu0 0.0
    %4078 = vmatpush1.msra.mxu0 0.0
    %4079 = vmatprep.subr.mxu0 0.0
    %4080 = vmatpush1.msra.mxu0 0.0
    %4081 = vmatprep.subr.mxu0 0.0
    %4082 = vmatpush1.msra.mxu0 0.0
    %4083 = vmatprep.subr.mxu0 0.0
    %4084 = vmatpush1.msra.mxu0 0.0
    %4085 = vmatprep.subr.mxu0 0.0
    %4086 = vmatpush1.msra.mxu0 0.0
    %4087 = vmatprep.subr.mxu0 0.0
    %4088 = vmatpush1.msra.mxu0 0.0
    %4089 = vmatprep.subr.mxu0 0.0
    %4090 = vmatpush1.msra.mxu0 0.0
    %4091 = vmatprep.subr.mxu0 0.0
    %4092 = vmatpush1.msra.mxu0 0.0
    %4093 = vmatprep.subr.mxu0 0.0
    %4094 = vmatpush1.msra.mxu0 0.0
    %4095 = vmatprep.subr.mxu0 0.0
    %4096 = vmatpush1.msra.mxu0 0.0
    %4097 = vmatprep.subr.mxu0 0.0
    %4098 = vmatpush1.msra.mxu0 0.0
    %4099 = vmatprep.subr.mxu0 0.0
    %4100 = vmatpush1.msra.mxu0 0.0
    %4101 = vmatprep.subr.mxu0 0.0
    %4102 = vmatpush1.msra.mxu0 0.0
    %4103 = vmatprep.subr.mxu0 0.0
    %4104 = vmatpush1.msra.mxu0 0.0
    %4105 = vmatprep.subr.mxu0 0.0
    %4106 = vmatpush1.msra.mxu0 0.0
    %4107 = vmatprep.subr.mxu0 0.0
    %4108 = vmatpush1.msra.mxu0 0.0
    %4109 = vmatprep.subr.mxu0 0.0
    %4110 = vmatpush1.msra.mxu0 0.0
    %4111 = vmatprep.subr.mxu0 0.0
    %4112 = vmatpush1.msra.mxu0 0.0
    %4113 = vmatprep.subr.mxu0 0.0
    %4114 = vmatpush1.msra.mxu0 0.0
    %4115 = vmatprep.subr.mxu0 0.0
    %4116 = vmatpush1.msra.mxu0 0.0
    %4117 = vmatprep.subr.mxu0 0.0
    %4118 = vmatpush1.msra.mxu0 0.0
    %4119 = vmatprep.subr.mxu0 0.0
    %4120 = vmatpush1.msra.mxu0 0.0
    %4121 = vmatprep.subr.mxu0 0.0
    %4122 = vmatpush1.msra.mxu0 0.0
    %4123 = vmatprep.mubr.f32.mxu0 0.0
    %4124 = vmatmul.mubr.f32.gmra.mrb[0].mxu0 %v4054
    %v4125 = vpop.f32.mrb[0].mxu0
    %v4126 = vadd.f32 0.0, %v4125
    %v4127 = vpop.f32.mrb[0].mxu0
    %4128 = vmatprep.mubr.f32.mxu0 0.0
    %4129 = vmatmul.mubr.f32.gmra.mrb[0].mxu0 %v4057
    %v4130 = vpop.f32.mrb[0].mxu0
    %v4131 = vadd.f32 0.0, %v4130
    %v4132 = vpop.f32.mrb[0].mxu0
    %4133 = vdwg.mxu0
    %v4134 = vadd.f32 %v3834, %v4126
    %v4135 = vadd.f32 %v3835, %v4131
    %v4136 = vlaneseq
    %v4137 = vshrl.u32 %v4136, 7
    %v4138 = vsub.s32 5, %v4137
    %v4139 = vrot.slane %v81, %v4138
    %v4140 = vadd.f32 %v4134, %v4139
    %v4141 = vadd.f32 %v4135, %v4139
    %v4142 = vadd.f32 %v2738, %v4140
    %v4143 = vadd.f32 %v2739, %v4141
    %v4144 = vsel %vm107, %v4142, 0.0
    %4145 = vadd.xlane.f32.xlu0 %v4144
    %v4146 = vpop.xlane.xlu0 %4145
    %v4147 = vsel %vm107, %v4143, 0.0
    %4148 = vadd.xlane.f32.xlu0 %v4147
    %v4149 = vpop.xlane.xlu0 %4148
    %v4150 = vmul.f32 %v4146, %v1430
    %v4151 = vmul.f32 %v4149, %v1430
    %v4152 = vsub.f32 %v4142, %v4150
    %v4153 = vsub.f32 %v4143, %v4151
    %v4154 = vmul.f32 %v4152, %v4152
    %v4155 = vmul.f32 %v4153, %v4153
    %v4156 = vsel %vm107, %v4154, 0.0
    %4157 = vadd.xlane.f32.xlu0 %v4156
    %v4158 = vpop.xlane.xlu0 %4157
    %v4159 = vsel %vm107, %v4155, 0.0
    %4160 = vadd.xlane.f32.xlu0 %v4159
    %v4161 = vpop.xlane.xlu0 %4160
    %v4162 = vmul.f32 %v4158, %v1430
    %v4163 = vmul.f32 %v4161, %v1430
    %v4164 = vadd.f32 %v4162, 1e-05
    %v4165 = vadd.f32 %v4163, 1e-05
    %v4166 = vrsqrt.pop %v4164
    %v4167 = vrsqrt.pop %v4165
    %v4168 = vmul.f32 %v4152, %v4166
    %v4169 = vmul.f32 %v4153, %v4167
    %v4170 = vlaneseq
    %v4171 = vshrl.u32 %v4170, 7
    %v4172 = vsub.s32 2, %v4171
    %v4173 = vrot.slane %v82, %v4172
    %v4174 = vmul.f32 %v4168, %v4173
    %v4175 = vmul.f32 %v4169, %v4173
    %v4176 = vlaneseq
    %v4177 = vshrl.u32 %v4176, 7
    %v4178 = vsub.s32 3, %v4177
    %v4179 = vrot.slane %v82, %v4178
    %v4180 = vadd.f32 %v4174, %v4179
    %v4181 = vadd.f32 %v4175, %v4179
    %v4182 = vld [vmem:[#allocation8 + $0x20] sm:$0xff]
    %v4183 = vld [vmem:[#allocation8 + $0x48] sm:$0xff]
    %v4184 = vld [vmem:[#allocation8 + $0x70] sm:$0xff]
    %v4185 = vld [vmem:[#allocation8 + $0x98] sm:$0xff]
    %v4186 = vlaneseq
    %v4187 = vshrl.u32 %v4186, 7
    %v4188 = vsub.s32 6, %v4187
    %v4189 = vrot.slane %v82, %v4188
    %v4191 = vsel %vm107, %v4180, 0
    %v4194 = vsel %vm107, %v4181, 0
    %4196 = vmatprep.subr.mxu0 0.0
    %4197 = vmatpush1.msra.mxu0 %v4182
    %4198 = vmatprep.subr.mxu0 0.0
    %4199 = vmatpush1.msra.mxu0 %v4183
    %4200 = vmatprep.subr.mxu0 0.0
    %4201 = vmatpush1.msra.mxu0 %v4184
    %4202 = vmatprep.subr.mxu0 0.0
    %4203 = vmatpush1.msra.mxu0 %v4185
    %4204 = vmatprep.subr.mxu0 0.0
    %4205 = vmatpush1.msra.mxu0 0.0
    %4206 = vmatprep.subr.mxu0 0.0
    %4207 = vmatpush1.msra.mxu0 0.0
    %4208 = vmatprep.subr.mxu0 0.0
    %4209 = vmatpush1.msra.mxu0 0.0
    %4210 = vmatprep.subr.mxu0 0.0
    %4211 = vmatpush1.msra.mxu0 0.0
    %4212 = vmatprep.subr.mxu0 0.0
    %4213 = vmatpush1.msra.mxu0 0.0
    %4214 = vmatprep.subr.mxu0 0.0
    %4215 = vmatpush1.msra.mxu0 0.0
    %4216 = vmatprep.subr.mxu0 0.0
    %4217 = vmatpush1.msra.mxu0 0.0
    %4218 = vmatprep.subr.mxu0 0.0
    %4219 = vmatpush1.msra.mxu0 0.0
    %4220 = vmatprep.subr.mxu0 0.0
    %4221 = vmatpush1.msra.mxu0 0.0
    %4222 = vmatprep.subr.mxu0 0.0
    %4223 = vmatpush1.msra.mxu0 0.0
    %4224 = vmatprep.subr.mxu0 0.0
    %4225 = vmatpush1.msra.mxu0 0.0
    %4226 = vmatprep.subr.mxu0 0.0
    %4227 = vmatpush1.msra.mxu0 0.0
    %4228 = vmatprep.subr.mxu0 0.0
    %4229 = vmatpush1.msra.mxu0 0.0
    %4230 = vmatprep.subr.mxu0 0.0
    %4231 = vmatpush1.msra.mxu0 0.0
    %4232 = vmatprep.subr.mxu0 0.0
    %4233 = vmatpush1.msra.mxu0 0.0
    %4234 = vmatprep.subr.mxu0 0.0
    %4235 = vmatpush1.msra.mxu0 0.0
    %4236 = vmatprep.subr.mxu0 0.0
    %4237 = vmatpush1.msra.mxu0 0.0
    %4238 = vmatprep.subr.mxu0 0.0
    %4239 = vmatpush1.msra.mxu0 0.0
    %4240 = vmatprep.subr.mxu0 0.0
    %4241 = vmatpush1.msra.mxu0 0.0
    %4242 = vmatprep.subr.mxu0 0.0
    %4243 = vmatpush1.msra.mxu0 0.0
    %4244 = vmatprep.subr.mxu0 0.0
    %4245 = vmatpush1.msra.mxu0 0.0
    %4246 = vmatprep.subr.mxu0 0.0
    %4247 = vmatpush1.msra.mxu0 0.0
    %4248 = vmatprep.subr.mxu0 0.0
    %4249 = vmatpush1.msra.mxu0 0.0
    %4250 = vmatprep.subr.mxu0 0.0
    %4251 = vmatpush1.msra.mxu0 0.0
    %4252 = vmatprep.subr.mxu0 0.0
    %4253 = vmatpush1.msra.mxu0 0.0
    %4254 = vmatprep.subr.mxu0 0.0
    %4255 = vmatpush1.msra.mxu0 0.0
    %4256 = vmatprep.subr.mxu0 0.0
    %4257 = vmatpush1.msra.mxu0 0.0
    %4258 = vmatprep.subr.mxu0 0.0
    %4259 = vmatpush1.msra.mxu0 0.0
    %4260 = vmatprep.mubr.f32.mxu0 0.0
    %4261 = vmatmul.mubr.f32.gmra.mrb[0].mxu0 %v4191
    %v4262 = vpop.f32.mrb[0].mxu0
    %v4263 = vadd.f32 %v4189, %v4262
    %v4264 = vpop.f32.mrb[0].mxu0
    %4265 = vmatprep.mubr.f32.mxu0 0.0
    %4266 = vmatmul.mubr.f32.gmra.mrb[0].mxu0 %v4194
    %v4267 = vpop.f32.mrb[0].mxu0
    %v4268 = vadd.f32 %v4189, %v4267
    %v4269 = vpop.f32.mrb[0].mxu0
    %4270 = vdwg.mxu0
    %v4271 = vmax.f32 %v4263, 0.0
    %v4272 = vmax.f32 %v4268, 0.0
    %v4273 = vld [vmem:[#allocation8 + $0x20] sm:$0xff]
    %v4274 = vld [vmem:[#allocation8 + $0x48] sm:$0xff]
    %v4275 = vld [vmem:[#allocation8 + $0x70] sm:$0xff]
    %v4276 = vld [vmem:[#allocation8 + $0x98] sm:$0xff]
    %v4277 = vld [vmem:[#allocation8 + $0xc0] sm:$0xff]
    %v4278 = vld [vmem:[#allocation8 + $0xe8] sm:$0xff]
    %v4279 = vld [vmem:[#allocation8 + $0x110] sm:$0xff]
    %v4280 = vld [vmem:[#allocation8 + $0x138] sm:$0xff]
    %v4281 = vlaneseq
    %v4282 = vshrl.u32 %v4281, 7
    %v4283 = vsub.s32 7, %v4282
    %v4284 = vrot.slane %v82, %v4283
    %4293 = vrot.lane.b32.xlu0 %v4273, 64
    %v4294 = vpop.permute.xlu0 %4293
    %4295 = vrot.lane.b32.xlu0 %v4274, 64
    %v4296 = vpop.permute.xlu0 %4295
    %4297 = vrot.lane.b32.xlu0 %v4275, 64
    %v4298 = vpop.permute.xlu0 %4297
    %4299 = vrot.lane.b32.xlu0 %v4276, 64
    %v4300 = vpop.permute.xlu0 %4299
    %4301 = vrot.lane.b32.xlu0 %v4277, 64
    %v4302 = vpop.permute.xlu0 %4301
    %4303 = vrot.lane.b32.xlu0 %v4278, 64
    %v4304 = vpop.permute.xlu0 %4303
    %4305 = vrot.lane.b32.xlu0 %v4279, 64
    %v4306 = vpop.permute.xlu0 %4305
    %4307 = vrot.lane.b32.xlu0 %v4280, 64
    %v4308 = vpop.permute.xlu0 %4307
    %vm4317 = vcmask 523264
    %v4319 = vsel %vm4317, %v4271, 0
    %v4322 = vsel %vm4317, %v4272, 0
    %4324 = vmatprep.subr.mxu0 0.0
    %4325 = vmatpush1.msra.mxu0 %v4294
    %4326 = vmatprep.subr.mxu0 0.0
    %4327 = vmatpush1.msra.mxu0 %v4296
    %4328 = vmatprep.subr.mxu0 0.0
    %4329 = vmatpush1.msra.mxu0 %v4298
    %4330 = vmatprep.subr.mxu0 0.0
    %4331 = vmatpush1.msra.mxu0 %v4300
    %4332 = vmatprep.subr.mxu0 0.0
    %4333 = vmatpush1.msra.mxu0 %v4302
    %4334 = vmatprep.subr.mxu0 0.0
    %4335 = vmatpush1.msra.mxu0 %v4304
    %4336 = vmatprep.subr.mxu0 0.0
    %4337 = vmatpush1.msra.mxu0 %v4306
    %4338 = vmatprep.subr.mxu0 0.0
    %4339 = vmatpush1.msra.mxu0 %v4308
    %4340 = vmatprep.subr.mxu0 0.0
    %4341 = vmatpush1.msra.mxu0 0.0
    %4342 = vmatprep.subr.mxu0 0.0
    %4343 = vmatpush1.msra.mxu0 0.0
    %4344 = vmatprep.subr.mxu0 0.0
    %4345 = vmatpush1.msra.mxu0 0.0
    %4346 = vmatprep.subr.mxu0 0.0
    %4347 = vmatpush1.msra.mxu0 0.0
    %4348 = vmatprep.subr.mxu0 0.0
    %4349 = vmatpush1.msra.mxu0 0.0
    %4350 = vmatprep.subr.mxu0 0.0
    %4351 = vmatpush1.msra.mxu0 0.0
    %4352 = vmatprep.subr.mxu0 0.0
    %4353 = vmatpush1.msra.mxu0 0.0
    %4354 = vmatprep.subr.mxu0 0.0
    %4355 = vmatpush1.msra.mxu0 0.0
    %4356 = vmatprep.subr.mxu0 0.0
    %4357 = vmatpush1.msra.mxu0 0.0
    %4358 = vmatprep.subr.mxu0 0.0
    %4359 = vmatpush1.msra.mxu0 0.0
    %4360 = vmatprep.subr.mxu0 0.0
    %4361 = vmatpush1.msra.mxu0 0.0
    %4362 = vmatprep.subr.mxu0 0.0
    %4363 = vmatpush1.msra.mxu0 0.0
    %4364 = vmatprep.subr.mxu0 0.0
    %4365 = vmatpush1.msra.mxu0 0.0
    %4366 = vmatprep.subr.mxu0 0.0
    %4367 = vmatpush1.msra.mxu0 0.0
    %4368 = vmatprep.subr.mxu0 0.0
    %4369 = vmatpush1.msra.mxu0 0.0
    %4370 = vmatprep.subr.mxu0 0.0
    %4371 = vmatpush1.msra.mxu0 0.0
    %4372 = vmatprep.subr.mxu0 0.0
    %4373 = vmatpush1.msra.mxu0 0.0
    %4374 = vmatprep.subr.mxu0 0.0
    %4375 = vmatpush1.msra.mxu0 0.0
    %4376 = vmatprep.subr.mxu0 0.0
    %4377 = vmatpush1.msra.mxu0 0.0
    %4378 = vmatprep.subr.mxu0 0.0
    %4379 = vmatpush1.msra.mxu0 0.0
    %4380 = vmatprep.subr.mxu0 0.0
    %4381 = vmatpush1.msra.mxu0 0.0
    %4382 = vmatprep.subr.mxu0 0.0
    %4383 = vmatpush1.msra.mxu0 0.0
    %4384 = vmatprep.subr.mxu0 0.0
    %4385 = vmatpush1.msra.mxu0 0.0
    %4386 = vmatprep.subr.mxu0 0.0
    %4387 = vmatpush1.msra.mxu0 0.0
    %4388 = vmatprep.mubr.f32.mxu0 0.0
    %4389 = vmatmul.mubr.f32.gmra.mrb[0].mxu0 %v4319
    %v4390 = vpop.f32.mrb[0].mxu0
    %v4391 = vadd.f32 %v4284, %v4390
    %v4392 = vpop.f32.mrb[0].mxu0
    %4393 = vmatprep.mubr.f32.mxu0 0.0
    %4394 = vmatmul.mubr.f32.gmra.mrb[0].mxu0 %v4322
    %v4395 = vpop.f32.mrb[0].mxu0
    %v4396 = vadd.f32 %v4284, %v4395
    %v4397 = vpop.f32.mrb[0].mxu0
    %4398 = vdwg.mxu0
    %v4399 = vadd.f32 %v4180, %v4391
    %v4400 = vadd.f32 %v4181, %v4396
    %v4401 = vsel %vm107, %v4399, 0.0
    %4402 = vadd.xlane.f32.xlu0 %v4401
    %v4403 = vpop.xlane.xlu0 %4402
    %v4404 = vsel %vm107, %v4400, 0.0
    %4405 = vadd.xlane.f32.xlu0 %v4404
    %v4406 = vpop.xlane.xlu0 %4405
    %v4407 = vmul.f32 %v4403, %v1430
    %v4408 = vmul.f32 %v4406, %v1430
    %v4409 = vsub.f32 %v4399, %v4407
    %v4410 = vsub.f32 %v4400, %v4408
    %v4411 = vmul.f32 %v4409, %v4409
    %v4412 = vmul.f32 %v4410, %v4410
    %v4413 = vsel %vm107, %v4411, 0.0
    %4414 = vadd.xlane.f32.xlu0 %v4413
    %v4415 = vpop.xlane.xlu0 %4414
    %v4416 = vsel %vm107, %v4412, 0.0
    %4417 = vadd.xlane.f32.xlu0 %v4416
    %v4418 = vpop.xlane.xlu0 %4417
    %v4419 = vmul.f32 %v4415, %v1430
    %v4420 = vmul.f32 %v4418, %v1430
    %v4421 = vadd.f32 %v4419, 1e-05
    %v4422 = vadd.f32 %v4420, 1e-05
    %v4423 = vrsqrt.pop %v4421
    %v4424 = vrsqrt.pop %v4422
    %v4425 = vmul.f32 %v4409, %v4423
    %v4426 = vmul.f32 %v4410, %v4424
    %v4427 = vlaneseq
    %v4428 = vshrl.u32 %v4427, 7
    %v4429 = vsub.s32 4, %v4428
    %v4430 = vrot.slane %v82, %v4429
    %v4431 = vmul.f32 %v4425, %v4430
    %v4432 = vmul.f32 %v4426, %v4430
    %v4433 = vlaneseq
    %v4434 = vshrl.u32 %v4433, 7
    %v4435 = vsub.s32 5, %v4434
    %v4436 = vrot.slane %v82, %v4435
    %v4437 = vadd.f32 %v4431, %v4436
    %v4438 = vadd.f32 %v4432, %v4436
    %4439 = vst.msk [vmem:[#allocation10] sm:$0xff] %vm107, %v4437
    %4440 = vst.msk [vmem:[#allocation10 + $0x8] sm:$0xff] %vm107, %v4438
    // Predicated region
    $region34: #{tpu_custom_call.1} parent=1 // pred_check
      _
    $region35: #{tpu_custom_call.1} parent=1 // pred_check_branch
      %4442 = sbr.rel (0) target = $region37
    $region36: #{tpu_custom_call.1} parent=1 // pred_region
      %s4444 = ssub.s32 256, 256
      %4445 = vsyncadd [#allocation4], %s4444
      %s4446 = sshll.u32 [#allocation10], 4
      %s4447 = int_to_ptr.vmem [resolvable:$true] %s4446
      %4452 = dma.vmem_to_hbm [thread:$0]  %s4447, 256, %s4, [#allocation4], 128, 128, 8
    $region37: #{tpu_custom_call.1} parent=1 // pred_fallthru
      _
    // Predicated region
    $region38: #{tpu_custom_call.1} parent=1 // pred_check
      _
    $region39: #{tpu_custom_call.1} parent=1 // pred_check_branch
      %4454 = sbr.rel (0) target = $region41
    $region40: #{tpu_custom_call.1} parent=1 // pred_region
      %4455 = dma.done [#allocation4], 256
    $region41: #{tpu_custom_call.1} parent=1 // pred_fallthru
      _
    %4456 = vsyncpa [#allocation3], 1
    %4457 = vsyncpa [#allocation6], 1
    %4458 = vsyncpa [#allocation9], 1
    %4459 = vsyncpa [#allocation4], 1

</llo_original>
